<compile_context>
chip_gen: v6e
topology: v6e:2x2x1
jax: 0.10.0
libtpu: 0.0.40
codegen_flags: <defaults>
</compile_context>

<pallas_src>
import functools

import jax
import jax.numpy as jnp
from jax.experimental import pallas as pl
from jax.experimental.pallas import tpu as pltpu


# ----------------------------------------------------------------------------
# DDPM schedules (pure JAX; same math as the PyTorch ddpm_schedules helper)
# ----------------------------------------------------------------------------
def ddpm_schedules(beta1, beta2, T):
    assert beta1 < beta2 < 1.0, "beta1 and beta2 must be in (0, 1)"
    beta_t = (beta2 - beta1) * jnp.arange(0, T + 1, dtype=jnp.float32) / T + beta1
    sqrt_beta_t = jnp.sqrt(beta_t)
    alpha_t = 1.0 - beta_t
    log_alpha_t = jnp.log(alpha_t)
    alphabar_t = jnp.exp(jnp.cumsum(log_alpha_t))
    sqrtab = jnp.sqrt(alphabar_t)
    oneover_sqrta = 1.0 / jnp.sqrt(alpha_t)
    sqrtmab = jnp.sqrt(1.0 - alphabar_t)
    mab_over_sqrtmab = (1.0 - alpha_t) / sqrtmab
    return {
        "alpha_t": alpha_t, "oneover_sqrta": oneover_sqrta,
        "sqrt_beta_t": sqrt_beta_t, "alphabar_t": alphabar_t,
        "sqrtab": sqrtab, "sqrtmab": sqrtmab,
        "mab_over_sqrtmab": mab_over_sqrtmab,
    }


def _bf16_elementwise_ok():
    """True on chips with bf16 VPU/EUP (v6e/v7x); False on v5e and older."""
    try:
        kind = jax.devices()[0].device_kind.lower()
    except Exception:
        return False
    return not any(v in kind for v in ("v2", "v3", "v4", "v5"))


# ----------------------------------------------------------------------------
# Fused kernel:
#   x_t  = sqrtab[b] * x + sqrtmab[b] * noise                (f32, exact)
#   pred = GELU(x_t @ W1 + b1) @ W2 + b2 + x_t               (bf16 MXU, f32 acc)
#   sq   = sum((noise - pred)^2, axis=-1)                    (per-row partial MSE)
# ----------------------------------------------------------------------------
def _ddpm_fused_kernel(sa_ref, sb_ref, x_ref, n_ref, w1_ref, b1_ref, w2_ref,
                       b2_ref, xt_ref, pred_ref, sq_ref, *, bf16_elementwise):
    b = pl.program_id(0)

    # ---- q-sample (per-batch scalars live in SMEM via scalar prefetch).
    x_t = sa_ref[b] * x_ref[...] + sb_ref[b] * n_ref[...]
    xt_ref[...] = x_t.astype(xt_ref.dtype)

    # ---- stand-in denoiser: GELU-MLP + residual. bf16 MXU operands, f32 acc.
    h = jnp.dot(x_t.astype(jnp.bfloat16), w1_ref[...],
                preferred_element_type=jnp.float32)
    del x_t  # residual path re-reads xt_ref in the epilogue (frees live vregs)

    if bf16_elementwise:
        # v6e/v7x: bf16 VPU/EUP -> halves elementwise work + live intermediate.
        hb = h.astype(jnp.bfloat16) + b1_ref[...].astype(jnp.bfloat16)
        hb = jax.nn.gelu(hb, approximate=True)            # tanh GELU (EUP)
        y = jnp.dot(hb, w2_ref[...], preferred_element_type=jnp.float32)
    else:
        # v5e: no bf16 VPU/EUP -> keep elementwise math in f32.
        hf = jax.nn.gelu(h + b1_ref[...], approximate=True)
        y = jnp.dot(hf.astype(jnp.bfloat16), w2_ref[...],
                    preferred_element_type=jnp.float32)

    pred = y + b2_ref[...] + xt_ref[...]                   # residual (VMEM vld)
    pred_ref[...] = pred.astype(pred_ref.dtype)

    # ---- fused MSE partial reduction (XLU lane reduce -> (tile_n, 1)).
    d = n_ref[...] - pred
    sq_ref[...] = jnp.sum(d * d, axis=-1, keepdims=True)


def ddpm_fused_forward(x, noise, sqrtab_t, sqrtmab_t, w1_bf16, b1, w2_bf16, b2,
                       *, tile_n=256):
    """Fused DDPM training step math. x, noise: (B, N, D) f32."""
    B, N, D = x.shape
    H = w1_bf16.shape[1]
    tile_n = min(tile_n, N)
    assert N % tile_n == 0, "tile_n must divide N (no in-kernel MSE row masking)"
    nt = N // tile_n

    bf16_elementwise = _bf16_elementwise_ok()
    kernel = functools.partial(_ddpm_fused_kernel,
                               bf16_elementwise=bf16_elementwise)

    row_blk = lambda b, n, sa, sb: (b, n, 0)
    const_blk = lambda b, n, sa, sb: (0, 0)

    # Grid-invariant operands: single-buffered (index_map never changes).
    w1_spec = pl.BlockSpec((D, H), const_blk, pipeline_mode=pl.Buffered(1))
    b1_spec = pl.BlockSpec((1, H), const_blk, pipeline_mode=pl.Buffered(1))
    w2_spec = pl.BlockSpec((H, D), const_blk, pipeline_mode=pl.Buffered(1))
    b2_spec = pl.BlockSpec((1, D), const_blk, pipeline_mode=pl.Buffered(1))

    # Real VMEM budget + Mosaic scratch headroom (never the full 64 MiB of v7x).
    itm_bytes = tile_n * H * (2 if bf16_elementwise else 4)
    vmem_budget = (
        (D * H + H * D) * 2              # bf16 weights, single-buffered
        + (H + D) * 4                    # f32 biases
        + 2 * 2 * tile_n * D * 4         # x / noise tiles, double-buffered
        + 2 * 2 * tile_n * D * 4         # x_t / pred tiles, double-buffered
        + 2 * tile_n * 4                 # per-row squared-error tiles
        + itm_bytes                      # GELU intermediate
        + (8 << 20)                      # Mosaic internal scratch headroom
    )
    vmem_limit = int(min(vmem_budget, 48 << 20))

    M = B * N
    cost = pl.CostEstimate(
        flops=4 * M * D * H,                               # two matmuls
        transcendentals=M * H,                             # tanh GELU
        bytes_accessed=(4 * M * D * 4                      # x, noise, x_t, pred
                        + (D * H + H * D) * 2              # bf16 weights
                        + (H + D) * 4 + M * 4),            # biases + row sums
    )

    xt, pred, sqerr = pl.pallas_call(
        kernel,
        out_shape=(
            jax.ShapeDtypeStruct((B, N, D), x.dtype),       # x_t
            jax.ShapeDtypeStruct((B, N, D), x.dtype),       # pred
            jax.ShapeDtypeStruct((B, N, 1), jnp.float32),   # per-row sq-err
        ),
        grid_spec=pltpu.PrefetchScalarGridSpec(
            num_scalar_prefetch=2,                          # sqrtab_t, sqrtmab_t
            grid=(B, nt),
            in_specs=[
                pl.BlockSpec((None, tile_n, D), row_blk),   # x
                pl.BlockSpec((None, tile_n, D), row_blk),   # noise
                w1_spec, b1_spec, w2_spec, b2_spec,
            ],
            out_specs=[
                pl.BlockSpec((None, tile_n, D), row_blk),   # x_t
                pl.BlockSpec((None, tile_n, D), row_blk),   # pred
                pl.BlockSpec((None, tile_n, 1), row_blk),   # per-row sq-err
            ],
        ),
        compiler_params=pltpu.CompilerParams(
            dimension_semantics=("parallel", "parallel"),   # >=2 steps -> v7x 2 TCs
            vmem_limit_bytes=vmem_limit,
        ),
        cost_estimate=cost,
    )(sqrtab_t, sqrtmab_t, x, noise, w1_bf16, b1, w2_bf16, b2)

    loss = jnp.sum(sqerr) / (B * N * D)   # tiny (B*N)-element reduction in XLA
    return loss, xt, pred


# ----------------------------------------------------------------------------
# DDPM.forward (training objective)
# ----------------------------------------------------------------------------
def ddpm_forward(x, noise, ts, sched, params_bf16):
    sqrtab_t = sched["sqrtab"][ts]       # (B,)
    sqrtmab_t = sched["sqrtmab"][ts]     # (B,)
    # TODO(synk): real nn_model is an external ContextUnet(x_t, c, ts/n_T); the
    # fused residual GELU-MLP Pallas kernel stands in for it here.
    return ddpm_fused_forward(x, noise, sqrtab_t, sqrtmab_t, *params_bf16)


def ddpm_forward_ref(x, noise, ts, sched, params_f32):
    sa = sched["sqrtab"][ts][:, None, None]
    sb = sched["sqrtmab"][ts][:, None, None]
    x_t = sa * x + sb * noise
    w1, b1, w2, b2 = params_f32
    h = jax.nn.gelu(x_t @ w1 + b1, approximate=True)
    pred = h @ w2 + b2 + x_t
    loss = jnp.mean((noise - pred) ** 2)
    return loss, x_t, pred


if __name__ == "__main__":
    # MXU-friendly shapes: lane dim D and FF dim H are multiples of 256, and the
    # grid is (B=2, N/tile_n=1) -> two parallel steps (keeps both v7x TCs busy).
    B, N, D, H = 2, 256, 256, 512
    n_T = 400
    betas = (1e-4, 0.02)

    key = jax.random.PRNGKey(0)
    kx, kn, kt, k1, k2, k3, k4 = jax.random.split(key, 7)

    x = jax.random.normal(kx, (B, N, D), dtype=jnp.float32)
    noise = jax.random.normal(kn, (B, N, D), dtype=jnp.float32)
    ts = jax.random.randint(kt, (B,), 1, n_T + 1)            # _ts ~ U{1..n_T}

    # Deterministic synthetic parameters for the stand-in denoiser.
    w1 = jax.random.normal(k1, (D, H), dtype=jnp.float32) * (1.0 / jnp.sqrt(D))
    b1 = jax.random.normal(k2, (1, H), dtype=jnp.float32) * 0.01
    w2 = jax.random.normal(k3, (H, D), dtype=jnp.float32) * (1.0 / jnp.sqrt(H))
    b2 = jax.random.normal(k4, (1, D), dtype=jnp.float32) * 0.01
    params_f32 = (w1, b1, w2, b2)
    # bf16 weight casts hoisted out of the (jitted) step — done once here.
    params_bf16 = (w1.astype(jnp.bfloat16), b1, w2.astype(jnp.bfloat16), b2)

    sched = ddpm_schedules(betas[0], betas[1], n_T)

    loss, x_t, pred = jax.jit(ddpm_forward)(x, noise, ts, sched, params_bf16)
    jax.block_until_ready((loss, x_t, pred))

    loss_ref, x_t_ref, pred_ref = ddpm_forward_ref(x, noise, ts, sched, params_f32)

    assert x_t.shape == x.shape and pred.shape == x.shape
    # Noising step is exact f32.
    assert jnp.allclose(x_t, x_t_ref, atol=1e-5, rtol=1e-5), "x_t mismatch"
    # Denoiser uses bf16 MXU operands (and bf16 GELU on v6e/v7x) -> loose tol.
    assert jnp.allclose(pred, pred_ref, atol=1e-1, rtol=1e-1), "denoiser mismatch"
    assert jnp.allclose(loss, loss_ref, atol=2e-2, rtol=5e-2), "loss mismatch"

    print("KERNEL_OK")
</pallas_src>

<mosaic_0001>
module attributes {stable_mosaic.version = 11 : i64} {
  func.func @_ddpm_fused_kernel(%arg0: i32, %arg1: i32, %arg2: memref<2xf32, #tpu.memory_space<smem>>, %arg3: memref<2xf32, #tpu.memory_space<smem>>, %arg4: memref<1x256x256xf32, #tpu.memory_space<vmem>>, %arg5: memref<1x256x256xf32, #tpu.memory_space<vmem>>, %arg6: memref<256x512xbf16, #tpu.memory_space<vmem>>, %arg7: memref<1x512xf32, #tpu.memory_space<vmem>>, %arg8: memref<512x256xbf16, #tpu.memory_space<vmem>>, %arg9: memref<1x256xf32, #tpu.memory_space<vmem>>, %arg10: memref<1x256x256xf32, #tpu.memory_space<vmem>>, %arg11: memref<1x256x256xf32, #tpu.memory_space<vmem>>, %arg12: memref<1x256x1xf32, #tpu.memory_space<vmem>>) attributes {dimension_semantics = [#tpu.dimension_semantics<parallel>, #tpu.dimension_semantics<parallel>], iteration_bounds = array<i64: 2, 1>, scalar_prefetch = 2 : i64, scratch_operands = 0 : i64, tpu.core_type = #tpu.core_type<tc>, window_params = [{transform_indices = @transform_0, window_bounds = array<i64: 1, 256, 256>}, {transform_indices = @transform_1, window_bounds = array<i64: 1, 256, 256>}, {pipeline_mode = #tpu.pipeline_mode<synchronous>, transform_indices = @transform_2, window_bounds = array<i64: 256, 512>}, {pipeline_mode = #tpu.pipeline_mode<synchronous>, transform_indices = @transform_3, window_bounds = array<i64: 1, 512>}, {pipeline_mode = #tpu.pipeline_mode<synchronous>, transform_indices = @transform_4, window_bounds = array<i64: 512, 256>}, {pipeline_mode = #tpu.pipeline_mode<synchronous>, transform_indices = @transform_5, window_bounds = array<i64: 1, 256>}, {transform_indices = @transform_6, window_bounds = array<i64: 1, 256, 256>}, {transform_indices = @transform_7, window_bounds = array<i64: 1, 256, 256>}, {transform_indices = @transform_8, window_bounds = array<i64: 1, 256, 1>}]} {
    %0 = arith.index_cast %arg0 : i32 to index
    %1 = memref.load %arg2[%0] : memref<2xf32, #tpu.memory_space<smem>>
    %c0 = arith.constant 0 : index
    %c0_0 = arith.constant 0 : index
    %c0_1 = arith.constant 0 : index
    %2 = vector.load %arg4[%c0, %c0_0, %c0_1] : memref<1x256x256xf32, #tpu.memory_space<vmem>>, vector<1x256x256xf32>
    %3 = vector.shape_cast %2 : vector<1x256x256xf32> to vector<256x256xf32>
    %4 = vector.broadcast %1 : f32 to vector<256x256xf32>
    %5 = arith.mulf %4, %3 : vector<256x256xf32>
    %6 = arith.index_cast %arg0 : i32 to index
    %7 = memref.load %arg3[%6] : memref<2xf32, #tpu.memory_space<smem>>
    %c0_2 = arith.constant 0 : index
    %c0_3 = arith.constant 0 : index
    %c0_4 = arith.constant 0 : index
    %8 = vector.load %arg5[%c0_2, %c0_3, %c0_4] : memref<1x256x256xf32, #tpu.memory_space<vmem>>, vector<1x256x256xf32>
    %9 = vector.shape_cast %8 : vector<1x256x256xf32> to vector<256x256xf32>
    %10 = vector.broadcast %7 : f32 to vector<256x256xf32>
    %11 = arith.mulf %10, %9 : vector<256x256xf32>
    %12 = arith.addf %5, %11 : vector<256x256xf32>
    %c0_5 = arith.constant 0 : index
    %c0_6 = arith.constant 0 : index
    %c0_7 = arith.constant 0 : index
    %13 = vector.load %arg10[%c0_5, %c0_6, %c0_7] : memref<1x256x256xf32, #tpu.memory_space<vmem>>, vector<1x256x256xf32>
    %14 = vector.shape_cast %13 : vector<1x256x256xf32> to vector<256x256xf32>
    %15 = vector.shape_cast %12 : vector<256x256xf32> to vector<1x256x256xf32>
    tpu.vector_store %arg10[%c0_5, %c0_6, %c0_7], %15 {strides = array<i32>} : memref<1x256x256xf32, #tpu.memory_space<vmem>>, vector<1x256x256xf32>,
    %16 = arith.truncf %12 : vector<256x256xf32> to vector<256x256xbf16>
    %c0_8 = arith.constant 0 : index
    %c0_9 = arith.constant 0 : index
    %17 = vector.load %arg6[%c0_8, %c0_9] : memref<256x512xbf16, #tpu.memory_space<vmem>>, vector<256x512xbf16>
    %cst = arith.constant dense<0.000000e+00> : vector<256x512xf32>
    %18 = tpu.matmul %16, %17, %cst {dimension_numbers = #tpu.dot_dimension_numbers<[1], [0], [0], [1], [0, 0, 1, 1], [], []>} : vector<256x256xbf16>, vector<256x512xbf16>, vector<256x512xf32> -> vector<256x512xf32>
    %19 = arith.truncf %18 : vector<256x512xf32> to vector<256x512xbf16>
    %c0_10 = arith.constant 0 : index
    %c0_11 = arith.constant 0 : index
    %20 = vector.load %arg7[%c0_10, %c0_11] : memref<1x512xf32, #tpu.memory_space<vmem>>, vector<1x512xf32>
    %21 = arith.truncf %20 : vector<1x512xf32> to vector<1x512xbf16>
    %22 = vector.broadcast %21 : vector<1x512xbf16> to vector<256x512xbf16>
    %23 = arith.addf %19, %22 : vector<256x512xbf16>
    %24 = arith.mulf %23, %23 : vector<256x512xbf16>
    %25 = arith.mulf %23, %24 : vector<256x512xbf16>
    %cst_12 = arith.constant 4.467770e-02 : bf16
    %26 = vector.broadcast %cst_12 : bf16 to vector<256x512xbf16>
    %27 = arith.mulf %26, %25 : vector<256x512xbf16>
    %28 = arith.addf %23, %27 : vector<256x512xbf16>
    %cst_13 = arith.constant 7.968750e-01 : bf16
    %29 = vector.broadcast %cst_13 : bf16 to vector<256x512xbf16>
    %30 = arith.mulf %29, %28 : vector<256x512xbf16>
    %31 = math.tanh %30 : vector<256x512xbf16>
    %cst_14 = arith.constant 1.000000e+00 : bf16
    %32 = vector.broadcast %cst_14 : bf16 to vector<256x512xbf16>
    %33 = arith.addf %32, %31 : vector<256x512xbf16>
    %cst_15 = arith.constant 5.000000e-01 : bf16
    %34 = vector.broadcast %cst_15 : bf16 to vector<256x512xbf16>
    %35 = arith.mulf %34, %33 : vector<256x512xbf16>
    %36 = arith.mulf %23, %35 : vector<256x512xbf16>
    %c0_16 = arith.constant 0 : index
    %c0_17 = arith.constant 0 : index
    %37 = vector.load %arg8[%c0_16, %c0_17] : memref<512x256xbf16, #tpu.memory_space<vmem>>, vector<512x256xbf16>
    %cst_18 = arith.constant dense<0.000000e+00> : vector<256x256xf32>
    %38 = tpu.matmul %36, %37, %cst_18 {dimension_numbers = #tpu.dot_dimension_numbers<[1], [0], [0], [1], [0, 0, 1, 1], [], []>} : vector<256x512xbf16>, vector<512x256xbf16>, vector<256x256xf32> -> vector<256x256xf32>
    %c0_19 = arith.constant 0 : index
    %c0_20 = arith.constant 0 : index
    %39 = vector.load %arg9[%c0_19, %c0_20] : memref<1x256xf32, #tpu.memory_space<vmem>>, vector<1x256xf32>
    %40 = vector.broadcast %39 : vector<1x256xf32> to vector<256x256xf32>
    %41 = arith.addf %38, %40 : vector<256x256xf32>
    %c0_21 = arith.constant 0 : index
    %c0_22 = arith.constant 0 : index
    %c0_23 = arith.constant 0 : index
    %42 = vector.load %arg10[%c0_21, %c0_22, %c0_23] : memref<1x256x256xf32, #tpu.memory_space<vmem>>, vector<1x256x256xf32>
    %43 = vector.shape_cast %42 : vector<1x256x256xf32> to vector<256x256xf32>
    %44 = arith.addf %41, %43 : vector<256x256xf32>
    %c0_24 = arith.constant 0 : index
    %c0_25 = arith.constant 0 : index
    %c0_26 = arith.constant 0 : index
    %45 = vector.load %arg11[%c0_24, %c0_25, %c0_26] : memref<1x256x256xf32, #tpu.memory_space<vmem>>, vector<1x256x256xf32>
    %46 = vector.shape_cast %45 : vector<1x256x256xf32> to vector<256x256xf32>
    %47 = vector.shape_cast %44 : vector<256x256xf32> to vector<1x256x256xf32>
    tpu.vector_store %arg11[%c0_24, %c0_25, %c0_26], %47 {strides = array<i32>} : memref<1x256x256xf32, #tpu.memory_space<vmem>>, vector<1x256x256xf32>,
    %c0_27 = arith.constant 0 : index
    %c0_28 = arith.constant 0 : index
    %c0_29 = arith.constant 0 : index
    %48 = vector.load %arg5[%c0_27, %c0_28, %c0_29] : memref<1x256x256xf32, #tpu.memory_space<vmem>>, vector<1x256x256xf32>
    %49 = vector.shape_cast %48 : vector<1x256x256xf32> to vector<256x256xf32>
    %50 = arith.subf %49, %44 : vector<256x256xf32>
    %51 = arith.mulf %50, %50 : vector<256x256xf32>
    %cst_30 = arith.constant dense<0.000000e+00> : vector<256xf32>
    %52 = vector.multi_reduction <add>, %51, %cst_30 [1] : vector<256x256xf32> to vector<256xf32>
    %53 = vector.shape_cast %52 : vector<256xf32> to vector<256x1xf32>
    %c0_31 = arith.constant 0 : index
    %c0_32 = arith.constant 0 : index
    %c0_33 = arith.constant 0 : index
    %54 = vector.load %arg12[%c0_31, %c0_32, %c0_33] : memref<1x256x1xf32, #tpu.memory_space<vmem>>, vector<1x256x1xf32>
    %55 = vector.shape_cast %54 : vector<1x256x1xf32> to vector<256x1xf32>
    %56 = vector.shape_cast %53 : vector<256x1xf32> to vector<1x256x1xf32>
    tpu.vector_store %arg12[%c0_31, %c0_32, %c0_33], %56 {strides = array<i32>} : memref<1x256x1xf32, #tpu.memory_space<vmem>>, vector<1x256x1xf32>,
    return
  }
  func.func @transform_0(%arg0: i32, %arg1: i32, %arg2: memref<2xf32, #tpu.memory_space<smem>>, %arg3: memref<2xf32, #tpu.memory_space<smem>>) -> (i32, i32, i32) {
    %c0_i32 = arith.constant 0 : i32
    %c0_i32_0 = arith.constant 0 : i32
    return %arg0, %arg1, %c0_i32 : i32, i32, i32
  }
  func.func @transform_1(%arg0: i32, %arg1: i32, %arg2: memref<2xf32, #tpu.memory_space<smem>>, %arg3: memref<2xf32, #tpu.memory_space<smem>>) -> (i32, i32, i32) {
    %c0_i32 = arith.constant 0 : i32
    %c0_i32_0 = arith.constant 0 : i32
    return %arg0, %arg1, %c0_i32 : i32, i32, i32
  }
  func.func @transform_2(%arg0: i32, %arg1: i32, %arg2: memref<2xf32, #tpu.memory_space<smem>>, %arg3: memref<2xf32, #tpu.memory_space<smem>>) -> (i32, i32) {
    %c0_i32 = arith.constant 0 : i32
    %c0_i32_0 = arith.constant 0 : i32
    %c0_i32_1 = arith.constant 0 : i32
    return %c0_i32, %c0_i32_0 : i32, i32
  }
  func.func @transform_3(%arg0: i32, %arg1: i32, %arg2: memref<2xf32, #tpu.memory_space<smem>>, %arg3: memref<2xf32, #tpu.memory_space<smem>>) -> (i32, i32) {
    %c0_i32 = arith.constant 0 : i32
    %c0_i32_0 = arith.constant 0 : i32
    %c0_i32_1 = arith.constant 0 : i32
    return %c0_i32, %c0_i32_0 : i32, i32
  }
  func.func @transform_4(%arg0: i32, %arg1: i32, %arg2: memref<2xf32, #tpu.memory_space<smem>>, %arg3: memref<2xf32, #tpu.memory_space<smem>>) -> (i32, i32) {
    %c0_i32 = arith.constant 0 : i32
    %c0_i32_0 = arith.constant 0 : i32
    %c0_i32_1 = arith.constant 0 : i32
    return %c0_i32, %c0_i32_0 : i32, i32
  }
  func.func @transform_5(%arg0: i32, %arg1: i32, %arg2: memref<2xf32, #tpu.memory_space<smem>>, %arg3: memref<2xf32, #tpu.memory_space<smem>>) -> (i32, i32) {
    %c0_i32 = arith.constant 0 : i32
    %c0_i32_0 = arith.constant 0 : i32
    %c0_i32_1 = arith.constant 0 : i32
    return %c0_i32, %c0_i32_0 : i32, i32
  }
  func.func @transform_6(%arg0: i32, %arg1: i32, %arg2: memref<2xf32, #tpu.memory_space<smem>>, %arg3: memref<2xf32, #tpu.memory_space<smem>>) -> (i32, i32, i32) {
    %c0_i32 = arith.constant 0 : i32
    %c0_i32_0 = arith.constant 0 : i32
    return %arg0, %arg1, %c0_i32 : i32, i32, i32
  }
  func.func @transform_7(%arg0: i32, %arg1: i32, %arg2: memref<2xf32, #tpu.memory_space<smem>>, %arg3: memref<2xf32, #tpu.memory_space<smem>>) -> (i32, i32, i32) {
    %c0_i32 = arith.constant 0 : i32
    %c0_i32_0 = arith.constant 0 : i32
    return %arg0, %arg1, %c0_i32 : i32, i32, i32
  }
  func.func @transform_8(%arg0: i32, %arg1: i32, %arg2: memref<2xf32, #tpu.memory_space<smem>>, %arg3: memref<2xf32, #tpu.memory_space<smem>>) -> (i32, i32, i32) {
    %c0_i32 = arith.constant 0 : i32
    %c0_i32_0 = arith.constant 0 : i32
    return %arg0, %arg1, %c0_i32 : i32, i32, i32
  }
}

</mosaic_0001>

<llo_original>
// kernel: ddpm_forward.1
$region0: #{ddpm_forward.1}
  #allocation0 [shape = 'u32[]', space=smem, size = 0x4, offset = 0x4, fixed_abs, tag = 'smem constant byte address 0x4 - core index']
  #allocation1 [shape = 'u32[144,128]{1,0:T(1,128)}', space=vmem, size = 0x12000, scoped, tag = 'internal scratch']
  #allocation2 [shape = 's32[1]{0}', space=sflag, size = 0x4, scoped, tag = 'scoped memory for ddpm_forward.1']
  #allocation3 [shape = 'u8[512]{0}', space=smem, size = 0x200, scoped, tag = 'prefetched SMEM operand 0']
  #allocation4 [shape = 'u8[512]{0}', space=smem, size = 0x200, scoped, tag = 'prefetched SMEM operand 1']
  %s0 = inlined_call_operand.vmem [shape: f32[2], index: 0, kind: input, shape index: {}]
  %s1 = inlined_call_operand.vmem [shape: f32[2], index: 1, kind: input, shape index: {}]
  %s2 = inlined_call_operand.vmem [shape: f32[2,256,256], index: 2, kind: input, shape index: {}]
  %s3 = inlined_call_operand.vmem [shape: f32[2,256,256], index: 3, kind: input, shape index: {}]
  %s4 = inlined_call_operand.hbm [shape: bf16[256,512], index: 4, kind: input, shape index: {}]
  %s5 = inlined_call_operand.vmem [shape: f32[1,512], index: 5, kind: input, shape index: {}]
  %s6 = inlined_call_operand.hbm [shape: bf16[512,256], index: 6, kind: input, shape index: {}]
  %s7 = inlined_call_operand.vmem [shape: f32[1,256], index: 7, kind: input, shape index: {}]
  %s8 = inlined_call_operand.hbm [shape: f32[2,256,256], index: 8, kind: output, shape index: {0}]
  %s9 = inlined_call_operand.hbm [shape: f32[2,256,256], index: 9, kind: output, shape index: {1}]
  %s10 = inlined_call_operand.vmem [shape: f32[2,256,1], index: 10, kind: output, shape index: {2}]
  %11 = xla_tuple %s8, %s9, %s10
  %s12 = sld [smem:[#allocation0]]
  $region81: #{ddpm_forward.1} parent=0
    _
  %s14 = ssub.s32 1, %s12
  %s15 = scalar_select 0, %s14, %s12
  %s16 = sshll.u32 %s0, 4
  %s17 = int_to_ptr.vmem [resolvable:$true] %s16
  %19 = dma.vmem_to_smem %s17, 16, [#allocation3], [#allocation2]
  %s20 = sshll.u32 %s1, 4
  %s21 = int_to_ptr.vmem [resolvable:$true] %s20
  %23 = dma.vmem_to_smem %s21, 16, [#allocation4], [#allocation2]
  %24 = dma.done [#allocation2], 32
  %25 = sfence
  $region1: #{ddpm_forward.1} parent=0
    #allocation5 [shape = 'u8[262144]{0}', space=vmem, size = 0x40000, scoped, tag = 'input window, operand 4, single buffered']
    #allocation6 [shape = 's32[2]{0}', space=sflag, size = 0x8, scoped, tag = 'scoped memory for ddpm_forward.1']
    #allocation7 [shape = 's32[2]{0}', space=sflag, size = 0x8, scoped, tag = 'scoped memory for ddpm_forward.1']
    #allocation8 [shape = 'u8[262144]{0}', space=vmem, size = 0x40000, scoped, tag = 'input window, operand 6, single buffered']
    #allocation9 [shape = 's32[1]{0}', space=sflag, size = 0x4, scoped, tag = 'scoped memory for ddpm_forward.1']
    #allocation10 [shape = 'u8[524288]{0}', space=vmem, size = 0x80000, scoped, tag = 'output window, operand 0']
    #allocation11 [shape = 'u8[524288]{0}', space=vmem, size = 0x80000, scoped, tag = 'output window, operand 1']
    #allocation12 [shape = 's32[2]{0}', space=sflag, size = 0x8, scoped, tag = 'scoped memory for ddpm_forward.1']
    %26 = vsyncpa [#allocation6], 0
    %27 = vsyncpa [#allocation9], 0
    %28 = vsyncpa [#allocation7], 0
    %s29 = scalar_lea.sflag [#allocation7], 1
    %30 = vsyncpa %s29, 0
    %31 = vsyncpa [#allocation12], 0
    %s32 = scalar_lea.sflag [#allocation12], 1
    %33 = vsyncpa %s32, 0
    loop: start=0, step=1, limit=4
    $region2: #{ddpm_forward.1} parent=1 // loop_pre_header
      _
    $region3: #{ddpm_forward.1} parent=1 // loop_header
      %s35 = sphi 0, %s39
      %p36 = scmp.ge.s32.totalorder %s35, 4
      %s42 = sphi 0, %s54
      %s43 = sphi 0, %s50
      %s44 = sphi 0, %s42
      %s45 = sphi 0, %s43
      %s46 = sphi 0, %s44
      %s47 = sphi 0, %s45
      %s59 = sphi 0, %s61
      %s62 = sphi 0, %s59
      %s63 = sphi 0, %s62
      %s79 = sphi 0, %s63
      %s87 = sphi 0, %s89
      %s90 = sphi 0, %s87
      %s91 = sphi 0, %s90
      %s107 = sphi 0, %s91
      %s111 = sphi 0, %s111
      %s113 = sphi 0, %s111
      %s114 = sphi 0, %s113
      %s128 = sphi 0, %s114
      %s132 = sphi 0, %s132
      %s134 = sphi 0, %s132
      %s135 = sphi 0, %s134
      %s149 = sphi 0, %s135
      %s153 = sphi 0, %s153
      %s155 = sphi 0, %s153
      %s156 = sphi 0, %s155
      %s170 = sphi 0, %s156
      %s174 = sphi 0, %s174
      %s176 = sphi 0, %s174
      %s177 = sphi 0, %s176
      %s191 = sphi 0, %s177
      %s199 = sphi 0, %s201
      %s202 = sphi 0, %s199
      %s203 = sphi 0, %s202
      %s219 = sphi 0, %s203
      %s227 = sphi 0, %s229
      %s230 = sphi 0, %s227
      %s231 = sphi 0, %s230
      %s247 = sphi 0, %s231
      %s255 = sphi 0, %s257
      %s258 = sphi 0, %s255
      %s259 = sphi 0, %s258
      %s275 = sphi 0, %s259
    $region4: #{ddpm_forward.1} parent=1 // loop_header_branch
      %38 = sbr.rel (%p36) target = $region8
    $region5: #{ddpm_forward.1} parent=1 // loop_body
      %s40 = ssub.s32 %s35, 1
      %s41 = ssub.s32 %s35, 2
      %s48 = sadd.s32 1, %s43
      %p49 = scmp.ge.s32.totalorder %s48, 1
      %s50 = scalar_select %p49, 0, %s48
      %s51 = sadd.s32 1, %s42
      %s52 = scalar_select %p49, %s51, %s42
      %p53 = scmp.ge.s32.totalorder %s52, 2
      %s54 = scalar_select %p53, 0, %s52
      %s55 = ssub.s32 %s42, %s54
      %s56 = ssub.s32 %s43, %s50
      %s57 = sor.u32 %s55, %s56
      %p58 = scmp.eq.s32.totalorder %s57, 0
      %s60 = sadd.s32 %s59, 1
      %s61 = scalar_select %p58, %s59, %s60
      %p64 = pneg %p58
      %p65 = scmp.eq.s32.totalorder %s35, 1
      %p66 = por %p64, %p65
      %p67 = scmp.ne.s32.totalorder %s59, %s62
      %p68 = scmp.eq.s32.totalorder %s35, 0
      %p69 = por %p67, %p68
      %p70 = scmp.ne.s32.totalorder %s59, %s62
      %p71 = scmp.eq.s32.totalorder %s40, 1
      %p72 = por %p70, %p71
      %p73 = scmp.ne.s32.totalorder %s62, %s63
      %p74 = scmp.eq.s32.totalorder %s40, 0
      %p75 = por %p73, %p74
      %p76 = scmp.ne.s32.totalorder %s62, %s63
      %p77 = scmp.eq.s32.totalorder %s41, 1
      %p78 = por %p76, %p77
      %p80 = scmp.ne.s32.totalorder %s63, %s79
      %p81 = scmp.eq.s32.totalorder %s41, 0
      %p82 = por %p80, %p81
      %s83 = ssub.s32 %s42, %s54
      %s84 = ssub.s32 %s43, %s50
      %s85 = sor.u32 %s83, %s84
      %p86 = scmp.eq.s32.totalorder %s85, 0
      %s88 = sadd.s32 %s87, 1
      %s89 = scalar_select %p86, %s87, %s88
      %p92 = pneg %p86
      %p93 = scmp.eq.s32.totalorder %s35, 1
      %p94 = por %p92, %p93
      %p95 = scmp.ne.s32.totalorder %s87, %s90
      %p96 = scmp.eq.s32.totalorder %s35, 0
      %p97 = por %p95, %p96
      %p98 = scmp.ne.s32.totalorder %s87, %s90
      %p99 = scmp.eq.s32.totalorder %s40, 1
      %p100 = por %p98, %p99
      %p101 = scmp.ne.s32.totalorder %s90, %s91
      %p102 = scmp.eq.s32.totalorder %s40, 0
      %p103 = por %p101, %p102
      %p104 = scmp.ne.s32.totalorder %s90, %s91
      %p105 = scmp.eq.s32.totalorder %s41, 1
      %p106 = por %p104, %p105
      %p108 = scmp.ne.s32.totalorder %s91, %s107
      %p109 = scmp.eq.s32.totalorder %s41, 0
      %p110 = por %p108, %p109
      %s112 = sadd.s32 %s111, 1
      %p115 = scmp.eq.s32.totalorder %s35, 1
      %p116 = scmp.ne.s32.totalorder %s111, %s113
      %p117 = scmp.eq.s32.totalorder %s35, 0
      %p118 = por %p116, %p117
      %p119 = scmp.ne.s32.totalorder %s111, %s113
      %p120 = scmp.eq.s32.totalorder %s40, 1
      %p121 = por %p119, %p120
      %p122 = scmp.ne.s32.totalorder %s113, %s114
      %p123 = scmp.eq.s32.totalorder %s40, 0
      %p124 = por %p122, %p123
      %p125 = scmp.ne.s32.totalorder %s113, %s114
      %p126 = scmp.eq.s32.totalorder %s41, 1
      %p127 = por %p125, %p126
      %p129 = scmp.ne.s32.totalorder %s114, %s128
      %p130 = scmp.eq.s32.totalorder %s41, 0
      %p131 = por %p129, %p130
      %s133 = sadd.s32 %s132, 1
      %p136 = scmp.eq.s32.totalorder %s35, 1
      %p137 = scmp.ne.s32.totalorder %s132, %s134
      %p138 = scmp.eq.s32.totalorder %s35, 0
      %p139 = por %p137, %p138
      %p140 = scmp.ne.s32.totalorder %s132, %s134
      %p141 = scmp.eq.s32.totalorder %s40, 1
      %p142 = por %p140, %p141
      %p143 = scmp.ne.s32.totalorder %s134, %s135
      %p144 = scmp.eq.s32.totalorder %s40, 0
      %p145 = por %p143, %p144
      %p146 = scmp.ne.s32.totalorder %s134, %s135
      %p147 = scmp.eq.s32.totalorder %s41, 1
      %p148 = por %p146, %p147
      %p150 = scmp.ne.s32.totalorder %s135, %s149
      %p151 = scmp.eq.s32.totalorder %s41, 0
      %p152 = por %p150, %p151
      %s154 = sadd.s32 %s153, 1
      %p157 = scmp.eq.s32.totalorder %s35, 1
      %p158 = scmp.ne.s32.totalorder %s153, %s155
      %p159 = scmp.eq.s32.totalorder %s35, 0
      %p160 = por %p158, %p159
      %p161 = scmp.ne.s32.totalorder %s153, %s155
      %p162 = scmp.eq.s32.totalorder %s40, 1
      %p163 = por %p161, %p162
      %p164 = scmp.ne.s32.totalorder %s155, %s156
      %p165 = scmp.eq.s32.totalorder %s40, 0
      %p166 = por %p164, %p165
      %p167 = scmp.ne.s32.totalorder %s155, %s156
      %p168 = scmp.eq.s32.totalorder %s41, 1
      %p169 = por %p167, %p168
      %p171 = scmp.ne.s32.totalorder %s156, %s170
      %p172 = scmp.eq.s32.totalorder %s41, 0
      %p173 = por %p171, %p172
      %s175 = sadd.s32 %s174, 1
      %p178 = scmp.eq.s32.totalorder %s35, 1
      %p179 = scmp.ne.s32.totalorder %s174, %s176
      %p180 = scmp.eq.s32.totalorder %s35, 0
      %p181 = por %p179, %p180
      %p182 = scmp.ne.s32.totalorder %s174, %s176
      %p183 = scmp.eq.s32.totalorder %s40, 1
      %p184 = por %p182, %p183
      %p185 = scmp.ne.s32.totalorder %s176, %s177
      %p186 = scmp.eq.s32.totalorder %s40, 0
      %p187 = por %p185, %p186
      %p188 = scmp.ne.s32.totalorder %s176, %s177
      %p189 = scmp.eq.s32.totalorder %s41, 1
      %p190 = por %p188, %p189
      %p192 = scmp.ne.s32.totalorder %s177, %s191
      %p193 = scmp.eq.s32.totalorder %s41, 0
      %p194 = por %p192, %p193
      %s195 = ssub.s32 %s42, %s54
      %s196 = ssub.s32 %s43, %s50
      %s197 = sor.u32 %s195, %s196
      %p198 = scmp.eq.s32.totalorder %s197, 0
      %s200 = sadd.s32 %s199, 1
      %s201 = scalar_select %p198, %s199, %s200
      %p204 = pneg %p198
      %p205 = scmp.eq.s32.totalorder %s35, 1
      %p206 = por %p204, %p205
      %p207 = scmp.ne.s32.totalorder %s199, %s202
      %p208 = scmp.eq.s32.totalorder %s35, 0
      %p209 = por %p207, %p208
      %p210 = scmp.ne.s32.totalorder %s199, %s202
      %p211 = scmp.eq.s32.totalorder %s40, 1
      %p212 = por %p210, %p211
      %p213 = scmp.ne.s32.totalorder %s202, %s203
      %p214 = scmp.eq.s32.totalorder %s40, 0
      %p215 = por %p213, %p214
      %p216 = scmp.ne.s32.totalorder %s202, %s203
      %p217 = scmp.eq.s32.totalorder %s41, 1
      %p218 = por %p216, %p217
      %p220 = scmp.ne.s32.totalorder %s203, %s219
      %p221 = scmp.eq.s32.totalorder %s41, 0
      %p222 = por %p220, %p221
      %s223 = ssub.s32 %s42, %s54
      %s224 = ssub.s32 %s43, %s50
      %s225 = sor.u32 %s223, %s224
      %p226 = scmp.eq.s32.totalorder %s225, 0
      %s228 = sadd.s32 %s227, 1
      %s229 = scalar_select %p226, %s227, %s228
      %p232 = pneg %p226
      %p233 = scmp.eq.s32.totalorder %s35, 1
      %p234 = por %p232, %p233
      %p235 = scmp.ne.s32.totalorder %s227, %s230
      %p236 = scmp.eq.s32.totalorder %s35, 0
      %p237 = por %p235, %p236
      %p238 = scmp.ne.s32.totalorder %s227, %s230
      %p239 = scmp.eq.s32.totalorder %s40, 1
      %p240 = por %p238, %p239
      %p241 = scmp.ne.s32.totalorder %s230, %s231
      %p242 = scmp.eq.s32.totalorder %s40, 0
      %p243 = por %p241, %p242
      %p244 = scmp.ne.s32.totalorder %s230, %s231
      %p245 = scmp.eq.s32.totalorder %s41, 1
      %p246 = por %p244, %p245
      %p248 = scmp.ne.s32.totalorder %s231, %s247
      %p249 = scmp.eq.s32.totalorder %s41, 0
      %p250 = por %p248, %p249
      %s251 = ssub.s32 %s42, %s54
      %s252 = ssub.s32 %s43, %s50
      %s253 = sor.u32 %s251, %s252
      %p254 = scmp.eq.s32.totalorder %s253, 0
      %s256 = sadd.s32 %s255, 1
      %s257 = scalar_select %p254, %s255, %s256
      %p260 = pneg %p254
      %p261 = scmp.eq.s32.totalorder %s35, 1
      %p262 = por %p260, %p261
      %p263 = scmp.ne.s32.totalorder %s255, %s258
      %p264 = scmp.eq.s32.totalorder %s35, 0
      %p265 = por %p263, %p264
      %p266 = scmp.ne.s32.totalorder %s255, %s258
      %p267 = scmp.eq.s32.totalorder %s40, 1
      %p268 = por %p266, %p267
      %p269 = scmp.ne.s32.totalorder %s258, %s259
      %p270 = scmp.eq.s32.totalorder %s40, 0
      %p271 = por %p269, %p270
      %p272 = scmp.ne.s32.totalorder %s258, %s259
      %p273 = scmp.eq.s32.totalorder %s41, 1
      %p274 = por %p272, %p273
      %p276 = scmp.ne.s32.totalorder %s259, %s275
      %p277 = scmp.eq.s32.totalorder %s41, 0
      %p278 = por %p276, %p277
      %p279 = scmp.le.s32.totalorder 1, %s35
      %p280 = scmp.lt.s32.totalorder %s35, 3
      %p281 = pnand %p279, %p280
      %p282 = pneg %p281
      // Predicated region
      $region9: #{ddpm_forward.1} parent=5 // pred_check
        _
      $region10: #{ddpm_forward.1} parent=5 // pred_check_branch
        %284 = sbr.rel (%p281) target = $region12
      $region11: #{ddpm_forward.1} parent=5 // pred_region
        %s285 = ssub.s32 %s35, 1
        // Predicated region
        $region13: #{ddpm_forward.1} parent=11 // pred_check
          %p286 = pneg %p124
        $region14: #{ddpm_forward.1} parent=11 // pred_check_branch
          %288 = sbr.rel (%p286) target = $region16
        $region15: #{ddpm_forward.1} parent=11 // pred_region
          %s290 = ssub.s32 8192, 8192
          %291 = vsyncadd [#allocation6], %s290
          %s292 = sshll.u32 [#allocation5], 4
          %s293 = int_to_ptr.vmem [resolvable:$true] %s292
          %298 = dma.hbm_to_vmem [thread:$0]  %s4, 8192, %s293, [#allocation6], 256, 256, 16
        $region16: #{ddpm_forward.1} parent=11 // pred_fallthru
          _
        // Predicated region
        $region17: #{ddpm_forward.1} parent=11 // pred_check
          %p299 = pneg %p145
        $region18: #{ddpm_forward.1} parent=11 // pred_check_branch
          %301 = sbr.rel (%p299) target = $region20
        $region19: #{ddpm_forward.1} parent=11 // pred_region
          _
        $region20: #{ddpm_forward.1} parent=11 // pred_fallthru
          _
        // Predicated region
        $region21: #{ddpm_forward.1} parent=11 // pred_check
          %p302 = pneg %p166
        $region22: #{ddpm_forward.1} parent=11 // pred_check_branch
          %304 = sbr.rel (%p302) target = $region24
        $region23: #{ddpm_forward.1} parent=11 // pred_region
          %s306 = ssub.s32 8192, 8192
          %307 = vsyncadd [#allocation9], %s306
          %s308 = sshll.u32 [#allocation8], 4
          %s309 = int_to_ptr.vmem [resolvable:$true] %s308
          %314 = dma.hbm_to_vmem [thread:$0]  %s6, 8192, %s309, [#allocation9], 128, 128, 8
        $region24: #{ddpm_forward.1} parent=11 // pred_fallthru
          _
        // Predicated region
        $region25: #{ddpm_forward.1} parent=11 // pred_check
          %p315 = pneg %p187
        $region26: #{ddpm_forward.1} parent=11 // pred_check_branch
          %317 = sbr.rel (%p315) target = $region28
        $region27: #{ddpm_forward.1} parent=11 // pred_region
          _
        $region28: #{ddpm_forward.1} parent=11 // pred_fallthru
          _
      $region12: #{ddpm_forward.1} parent=5 // pred_fallthru
        _
      %p318 = scmp.lt.s32.totalorder %s35, 2
      // Predicated region
      $region29: #{ddpm_forward.1} parent=5 // pred_check
        %p319 = pneg %p318
      $region30: #{ddpm_forward.1} parent=5 // pred_check_branch
        %321 = sbr.rel (%p319) target = $region32
      $region31: #{ddpm_forward.1} parent=5 // pred_region
        // Predicated region
        $region33: #{ddpm_forward.1} parent=31 // pred_check
          %p322 = pneg %p69
        $region34: #{ddpm_forward.1} parent=31 // pred_check_branch
          %324 = sbr.rel (%p322) target = $region36
        $region35: #{ddpm_forward.1} parent=31 // pred_region
          %s325 = smul.u32 32, %s43
          %p326 = scmp.lt.s32.totalorder %s42, 1
          %s327 = scalar_select %p326, %s42, 1
          %p328 = scmp.lt.s32.totalorder %s325, 31
          %s329 = scalar_select %p328, %s325, 31
          %s330 = smul.addr %s329, 2
          %s331 = smul.addr %s327, 64
          %s332 = sadd.s32 %s330, %s331
          %s333 = smul.addr %s332, 8
          %s334 = scalar_lea.vmem %s2, %s333
          %s335 = smul.u32 32, %s43
        $region36: #{ddpm_forward.1} parent=31 // pred_fallthru
          _
        // Predicated region
        $region37: #{ddpm_forward.1} parent=31 // pred_check
          %p336 = pneg %p97
        $region38: #{ddpm_forward.1} parent=31 // pred_check_branch
          %338 = sbr.rel (%p336) target = $region40
        $region39: #{ddpm_forward.1} parent=31 // pred_region
          %s339 = smul.u32 32, %s43
          %p340 = scmp.lt.s32.totalorder %s42, 1
          %s341 = scalar_select %p340, %s42, 1
          %p342 = scmp.lt.s32.totalorder %s339, 31
          %s343 = scalar_select %p342, %s339, 31
          %s344 = smul.addr %s343, 2
          %s345 = smul.addr %s341, 64
          %s346 = sadd.s32 %s344, %s345
          %s347 = smul.addr %s346, 8
          %s348 = scalar_lea.vmem %s3, %s347
          %s349 = smul.u32 32, %s43
        $region40: #{ddpm_forward.1} parent=31 // pred_fallthru
          _
      $region32: #{ddpm_forward.1} parent=5 // pred_fallthru
        _
      %p350 = scmp.le.s32.totalorder 1, %s35
      %p351 = scmp.lt.s32.totalorder %s35, 3
      %p352 = pnand %p350, %p351
      %p353 = pneg %p352
      // Predicated region
      $region41: #{ddpm_forward.1} parent=5 // pred_check
        _
      $region42: #{ddpm_forward.1} parent=5 // pred_check_branch
        %355 = sbr.rel (%p352) target = $region44
      $region43: #{ddpm_forward.1} parent=5 // pred_region
        %s356 = ssub.s32 %s35, 1
        // Predicated region
        $region45: #{ddpm_forward.1} parent=43 // pred_check
          %p357 = pneg %p124
        $region46: #{ddpm_forward.1} parent=43 // pred_check_branch
          %359 = sbr.rel (%p357) target = $region48
        $region47: #{ddpm_forward.1} parent=43 // pred_region
          %360 = dma.done [#allocation6], 8192
        $region48: #{ddpm_forward.1} parent=43 // pred_fallthru
          _
        // Predicated region
        $region49: #{ddpm_forward.1} parent=43 // pred_check
          %p361 = pneg %p166
        $region50: #{ddpm_forward.1} parent=43 // pred_check_branch
          %363 = sbr.rel (%p361) target = $region52
        $region51: #{ddpm_forward.1} parent=43 // pred_region
          %364 = dma.done [#allocation9], 8192
        $region52: #{ddpm_forward.1} parent=43 // pred_fallthru
          _
        %s365 = smul.u32 32, %s45
        %p366 = scmp.lt.s32.totalorder %s44, 1
        %s367 = scalar_select %p366, %s44, 1
        %p368 = scmp.lt.s32.totalorder %s365, 31
        %s369 = scalar_select %p368, %s365, 31
        %s370 = smul.addr %s369, 2
        %s371 = smul.addr %s367, 64
        %s372 = sadd.s32 %s370, %s371
        %s373 = smul.addr %s372, 8
        %s374 = scalar_lea.vmem %s2, %s373
        %p375 = pneg %p75
        %p376 = pneg %p72
        %s377 = smul.u32 32, %s45
        %p378 = scmp.lt.s32.totalorder %s44, 1
        %s379 = scalar_select %p378, %s44, 1
        %p380 = scmp.lt.s32.totalorder %s377, 31
        %s381 = scalar_select %p380, %s377, 31
        %s382 = smul.addr %s381, 2
        %s383 = smul.addr %s379, 64
        %s384 = sadd.s32 %s382, %s383
        %s385 = smul.addr %s384, 8
        %s386 = scalar_lea.vmem %s3, %s385
        %p387 = pneg %p103
        %p388 = pneg %p100
        %p389 = pneg %p124
        %p390 = pneg %p121
        %p391 = pneg %p145
        %p392 = pneg %p142
        %p393 = pneg %p166
        %p394 = pneg %p163
        %p395 = pneg %p187
        %p396 = pneg %p184
        %p397 = pneg %p215
        %p398 = pneg %p212
        %s399 = sand.u32 %s202, 1
        %s400 = scalar_lea.sflag [#allocation7], %s399
        %s401 = sand.u32 %s202, 1
        %s402 = smul.addr %s401, 512
        %s403 = scalar_lea.vmem [#allocation10], %s402
        %p404 = pneg %p243
        %p405 = pneg %p240
        %s406 = sand.u32 %s230, 1
        %s407 = scalar_lea.sflag [#allocation12], %s406
        %s408 = sand.u32 %s230, 1
        %s409 = smul.addr %s408, 512
        %s410 = scalar_lea.vmem [#allocation11], %s409
        %p411 = pneg %p271
        %p412 = pneg %p268
        %s413 = smul.u32 32, %s45
        %p414 = scmp.lt.s32.totalorder %s44, 1
        %s415 = scalar_select %p414, %s44, 1
        %p416 = scmp.lt.s32.totalorder %s413, 31
        %s417 = scalar_select %p416, %s413, 31
        %s418 = smul.addr %s415, 32
        %s419 = sadd.s32 %s417, %s418
        %s420 = smul.addr %s419, 8
        %s421 = scalar_lea.vmem %s10, %s420
        %s422 = smul.u32 32, %s45
        %p423 = scmp.lt.s32.totalorder %s44, 1
        %s424 = scalar_select %p423, %s44, 1
        %p425 = scmp.lt.s32.totalorder %s422, 31
        %s426 = scalar_select %p425, %s422, 31
        %s427 = smul.addr %s426, 2
        %s428 = smul.addr %s424, 64
        %s429 = sadd.s32 %s427, %s428
        %s430 = smul.addr %s429, 8
        %s431 = scalar_lea.vmem %s2, %s430
        %s432 = smul.u32 32, %s45
        %s433 = smul.u32 32, %s45
        %p434 = scmp.lt.s32.totalorder %s44, 1
        %s435 = scalar_select %p434, %s44, 1
        %p436 = scmp.lt.s32.totalorder %s433, 31
        %s437 = scalar_select %p436, %s433, 31
        %s438 = smul.addr %s437, 2
        %s439 = smul.addr %s435, 64
        %s440 = sadd.s32 %s438, %s439
        %s441 = smul.addr %s440, 8
        %s442 = scalar_lea.vmem %s3, %s441
        %s443 = smul.u32 32, %s45
        %s444 = smul.u32 32, %s45
        %s445 = smul.u32 32, %s45
        %s446 = smul.u32 32, %s45
        %p447 = scmp.lt.s32.totalorder %s44, 1
        %s448 = scalar_select %p447, %s44, 1
        %p449 = scmp.lt.s32.totalorder %s446, 31
        %s450 = scalar_select %p449, %s446, 31
        %s451 = smul.addr %s448, 32
        %s452 = sadd.s32 %s450, %s451
        %s453 = smul.addr %s452, 8
        %s454 = scalar_lea.vmem %s10, %s453
        %s455 = smul.u32 32, %s45
        %s460 = sld [smem:[#allocation3 + %s44]]
        %v461 = vld [vmem:[%s431] sm:$0xff]
        %v462 = vld [vmem:[%s431 + $0x8] sm:$0xff]
        %v463 = vld [vmem:[%s431 + $0x10] sm:$0xff]
        %v464 = vld [vmem:[%s431 + $0x18] sm:$0xff]
        %v465 = vld [vmem:[%s431 + $0x20] sm:$0xff]
        %v466 = vld [vmem:[%s431 + $0x28] sm:$0xff]
        %v467 = vld [vmem:[%s431 + $0x30] sm:$0xff]
        %v468 = vld [vmem:[%s431 + $0x38] sm:$0xff]
        %v469 = vld [vmem:[%s431 + $0x40] sm:$0xff]
        %v470 = vld [vmem:[%s431 + $0x48] sm:$0xff]
        %v471 = vld [vmem:[%s431 + $0x50] sm:$0xff]
        %v472 = vld [vmem:[%s431 + $0x58] sm:$0xff]
        %v473 = vld [vmem:[%s431 + $0x60] sm:$0xff]
        %v474 = vld [vmem:[%s431 + $0x68] sm:$0xff]
        %v475 = vld [vmem:[%s431 + $0x70] sm:$0xff]
        %v476 = vld [vmem:[%s431 + $0x78] sm:$0xff]
        %v477 = vld [vmem:[%s431 + $0x80] sm:$0xff]
        %v478 = vld [vmem:[%s431 + $0x88] sm:$0xff]
        %v479 = vld [vmem:[%s431 + $0x90] sm:$0xff]
        %v480 = vld [vmem:[%s431 + $0x98] sm:$0xff]
        %v481 = vld [vmem:[%s431 + $0xa0] sm:$0xff]
        %v482 = vld [vmem:[%s431 + $0xa8] sm:$0xff]
        %v483 = vld [vmem:[%s431 + $0xb0] sm:$0xff]
        %v484 = vld [vmem:[%s431 + $0xb8] sm:$0xff]
        %v485 = vld [vmem:[%s431 + $0xc0] sm:$0xff]
        %v486 = vld [vmem:[%s431 + $0xc8] sm:$0xff]
        %v487 = vld [vmem:[%s431 + $0xd0] sm:$0xff]
        %v488 = vld [vmem:[%s431 + $0xd8] sm:$0xff]
        %v489 = vld [vmem:[%s431 + $0xe0] sm:$0xff]
        %v490 = vld [vmem:[%s431 + $0xe8] sm:$0xff]
        %v491 = vld [vmem:[%s431 + $0xf0] sm:$0xff]
        %v492 = vld [vmem:[%s431 + $0xf8] sm:$0xff]
        %v493 = vld [vmem:[%s431 + $0x100] sm:$0xff]
        %v494 = vld [vmem:[%s431 + $0x108] sm:$0xff]
        %v495 = vld [vmem:[%s431 + $0x110] sm:$0xff]
        %v496 = vld [vmem:[%s431 + $0x118] sm:$0xff]
        %v497 = vld [vmem:[%s431 + $0x120] sm:$0xff]
        %v498 = vld [vmem:[%s431 + $0x128] sm:$0xff]
        %v499 = vld [vmem:[%s431 + $0x130] sm:$0xff]
        %v500 = vld [vmem:[%s431 + $0x138] sm:$0xff]
        %v501 = vld [vmem:[%s431 + $0x140] sm:$0xff]
        %v502 = vld [vmem:[%s431 + $0x148] sm:$0xff]
        %v503 = vld [vmem:[%s431 + $0x150] sm:$0xff]
        %v504 = vld [vmem:[%s431 + $0x158] sm:$0xff]
        %v505 = vld [vmem:[%s431 + $0x160] sm:$0xff]
        %v506 = vld [vmem:[%s431 + $0x168] sm:$0xff]
        %v507 = vld [vmem:[%s431 + $0x170] sm:$0xff]
        %v508 = vld [vmem:[%s431 + $0x178] sm:$0xff]
        %v509 = vld [vmem:[%s431 + $0x180] sm:$0xff]
        %v510 = vld [vmem:[%s431 + $0x188] sm:$0xff]
        %v511 = vld [vmem:[%s431 + $0x190] sm:$0xff]
        %v512 = vld [vmem:[%s431 + $0x198] sm:$0xff]
        %v513 = vld [vmem:[%s431 + $0x1a0] sm:$0xff]
        %v514 = vld [vmem:[%s431 + $0x1a8] sm:$0xff]
        %v515 = vld [vmem:[%s431 + $0x1b0] sm:$0xff]
        %v516 = vld [vmem:[%s431 + $0x1b8] sm:$0xff]
        %v517 = vld [vmem:[%s431 + $0x1c0] sm:$0xff]
        %v518 = vld [vmem:[%s431 + $0x1c8] sm:$0xff]
        %v519 = vld [vmem:[%s431 + $0x1d0] sm:$0xff]
        %v520 = vld [vmem:[%s431 + $0x1d8] sm:$0xff]
        %v521 = vld [vmem:[%s431 + $0x1e0] sm:$0xff]
        %v522 = vld [vmem:[%s431 + $0x1e8] sm:$0xff]
        %v523 = vld [vmem:[%s431 + $0x1f0] sm:$0xff]
        %v524 = vld [vmem:[%s431 + $0x1f8] sm:$0xff]
        %v525 = vstv %s460
        %v526 = vmul.f32 %v525, %v461
        %v527 = vmul.f32 %v525, %v462
        %v528 = vmul.f32 %v525, %v463
        %v529 = vmul.f32 %v525, %v464
        %v530 = vmul.f32 %v525, %v465
        %v531 = vmul.f32 %v525, %v466
        %v532 = vmul.f32 %v525, %v467
        %v533 = vmul.f32 %v525, %v468
        %v534 = vmul.f32 %v525, %v469
        %v535 = vmul.f32 %v525, %v470
        %v536 = vmul.f32 %v525, %v471
        %v537 = vmul.f32 %v525, %v472
        %v538 = vmul.f32 %v525, %v473
        %v539 = vmul.f32 %v525, %v474
        %v540 = vmul.f32 %v525, %v475
        %v541 = vmul.f32 %v525, %v476
        %v542 = vmul.f32 %v525, %v477
        %v543 = vmul.f32 %v525, %v478
        %v544 = vmul.f32 %v525, %v479
        %v545 = vmul.f32 %v525, %v480
        %v546 = vmul.f32 %v525, %v481
        %v547 = vmul.f32 %v525, %v482
        %v548 = vmul.f32 %v525, %v483
        %v549 = vmul.f32 %v525, %v484
        %v550 = vmul.f32 %v525, %v485
        %v551 = vmul.f32 %v525, %v486
        %v552 = vmul.f32 %v525, %v487
        %v553 = vmul.f32 %v525, %v488
        %v554 = vmul.f32 %v525, %v489
        %v555 = vmul.f32 %v525, %v490
        %v556 = vmul.f32 %v525, %v491
        %v557 = vmul.f32 %v525, %v492
        %v558 = vmul.f32 %v525, %v493
        %v559 = vmul.f32 %v525, %v494
        %v560 = vmul.f32 %v525, %v495
        %v561 = vmul.f32 %v525, %v496
        %v562 = vmul.f32 %v525, %v497
        %v563 = vmul.f32 %v525, %v498
        %v564 = vmul.f32 %v525, %v499
        %v565 = vmul.f32 %v525, %v500
        %v566 = vmul.f32 %v525, %v501
        %v567 = vmul.f32 %v525, %v502
        %v568 = vmul.f32 %v525, %v503
        %v569 = vmul.f32 %v525, %v504
        %v570 = vmul.f32 %v525, %v505
        %v571 = vmul.f32 %v525, %v506
        %v572 = vmul.f32 %v525, %v507
        %v573 = vmul.f32 %v525, %v508
        %v574 = vmul.f32 %v525, %v509
        %v575 = vmul.f32 %v525, %v510
        %v576 = vmul.f32 %v525, %v511
        %v577 = vmul.f32 %v525, %v512
        %v578 = vmul.f32 %v525, %v513
        %v579 = vmul.f32 %v525, %v514
        %v580 = vmul.f32 %v525, %v515
        %v581 = vmul.f32 %v525, %v516
        %v582 = vmul.f32 %v525, %v517
        %v583 = vmul.f32 %v525, %v518
        %v584 = vmul.f32 %v525, %v519
        %v585 = vmul.f32 %v525, %v520
        %v586 = vmul.f32 %v525, %v521
        %v587 = vmul.f32 %v525, %v522
        %v588 = vmul.f32 %v525, %v523
        %v589 = vmul.f32 %v525, %v524
        %s590 = sld [smem:[#allocation4 + %s44]]
        %v591 = vld [vmem:[%s442] sm:$0xff]
        %v592 = vld [vmem:[%s442 + $0x8] sm:$0xff]
        %v593 = vld [vmem:[%s442 + $0x10] sm:$0xff]
        %v594 = vld [vmem:[%s442 + $0x18] sm:$0xff]
        %v595 = vld [vmem:[%s442 + $0x20] sm:$0xff]
        %v596 = vld [vmem:[%s442 + $0x28] sm:$0xff]
        %v597 = vld [vmem:[%s442 + $0x30] sm:$0xff]
        %v598 = vld [vmem:[%s442 + $0x38] sm:$0xff]
        %v599 = vld [vmem:[%s442 + $0x40] sm:$0xff]
        %v600 = vld [vmem:[%s442 + $0x48] sm:$0xff]
        %v601 = vld [vmem:[%s442 + $0x50] sm:$0xff]
        %v602 = vld [vmem:[%s442 + $0x58] sm:$0xff]
        %v603 = vld [vmem:[%s442 + $0x60] sm:$0xff]
        %v604 = vld [vmem:[%s442 + $0x68] sm:$0xff]
        %v605 = vld [vmem:[%s442 + $0x70] sm:$0xff]
        %v606 = vld [vmem:[%s442 + $0x78] sm:$0xff]
        %v607 = vld [vmem:[%s442 + $0x80] sm:$0xff]
        %v608 = vld [vmem:[%s442 + $0x88] sm:$0xff]
        %v609 = vld [vmem:[%s442 + $0x90] sm:$0xff]
        %v610 = vld [vmem:[%s442 + $0x98] sm:$0xff]
        %v611 = vld [vmem:[%s442 + $0xa0] sm:$0xff]
        %v612 = vld [vmem:[%s442 + $0xa8] sm:$0xff]
        %v613 = vld [vmem:[%s442 + $0xb0] sm:$0xff]
        %v614 = vld [vmem:[%s442 + $0xb8] sm:$0xff]
        %v615 = vld [vmem:[%s442 + $0xc0] sm:$0xff]
        %v616 = vld [vmem:[%s442 + $0xc8] sm:$0xff]
        %v617 = vld [vmem:[%s442 + $0xd0] sm:$0xff]
        %v618 = vld [vmem:[%s442 + $0xd8] sm:$0xff]
        %v619 = vld [vmem:[%s442 + $0xe0] sm:$0xff]
        %v620 = vld [vmem:[%s442 + $0xe8] sm:$0xff]
        %v621 = vld [vmem:[%s442 + $0xf0] sm:$0xff]
        %v622 = vld [vmem:[%s442 + $0xf8] sm:$0xff]
        %v623 = vld [vmem:[%s442 + $0x100] sm:$0xff]
        %v624 = vld [vmem:[%s442 + $0x108] sm:$0xff]
        %v625 = vld [vmem:[%s442 + $0x110] sm:$0xff]
        %v626 = vld [vmem:[%s442 + $0x118] sm:$0xff]
        %v627 = vld [vmem:[%s442 + $0x120] sm:$0xff]
        %v628 = vld [vmem:[%s442 + $0x128] sm:$0xff]
        %v629 = vld [vmem:[%s442 + $0x130] sm:$0xff]
        %v630 = vld [vmem:[%s442 + $0x138] sm:$0xff]
        %v631 = vld [vmem:[%s442 + $0x140] sm:$0xff]
        %v632 = vld [vmem:[%s442 + $0x148] sm:$0xff]
        %v633 = vld [vmem:[%s442 + $0x150] sm:$0xff]
        %v634 = vld [vmem:[%s442 + $0x158] sm:$0xff]
        %v635 = vld [vmem:[%s442 + $0x160] sm:$0xff]
        %v636 = vld [vmem:[%s442 + $0x168] sm:$0xff]
        %v637 = vld [vmem:[%s442 + $0x170] sm:$0xff]
        %v638 = vld [vmem:[%s442 + $0x178] sm:$0xff]
        %v639 = vld [vmem:[%s442 + $0x180] sm:$0xff]
        %v640 = vld [vmem:[%s442 + $0x188] sm:$0xff]
        %v641 = vld [vmem:[%s442 + $0x190] sm:$0xff]
        %v642 = vld [vmem:[%s442 + $0x198] sm:$0xff]
        %v643 = vld [vmem:[%s442 + $0x1a0] sm:$0xff]
        %v644 = vld [vmem:[%s442 + $0x1a8] sm:$0xff]
        %v645 = vld [vmem:[%s442 + $0x1b0] sm:$0xff]
        %v646 = vld [vmem:[%s442 + $0x1b8] sm:$0xff]
        %v647 = vld [vmem:[%s442 + $0x1c0] sm:$0xff]
        %v648 = vld [vmem:[%s442 + $0x1c8] sm:$0xff]
        %v649 = vld [vmem:[%s442 + $0x1d0] sm:$0xff]
        %v650 = vld [vmem:[%s442 + $0x1d8] sm:$0xff]
        %v651 = vld [vmem:[%s442 + $0x1e0] sm:$0xff]
        %v652 = vld [vmem:[%s442 + $0x1e8] sm:$0xff]
        %v653 = vld [vmem:[%s442 + $0x1f0] sm:$0xff]
        %v654 = vld [vmem:[%s442 + $0x1f8] sm:$0xff]
        %v655 = vstv %s590
        %v656 = vmul.f32 %v655, %v591
        %v657 = vmul.f32 %v655, %v592
        %v658 = vmul.f32 %v655, %v593
        %v659 = vmul.f32 %v655, %v594
        %v660 = vmul.f32 %v655, %v595
        %v661 = vmul.f32 %v655, %v596
        %v662 = vmul.f32 %v655, %v597
        %v663 = vmul.f32 %v655, %v598
        %v664 = vmul.f32 %v655, %v599
        %v665 = vmul.f32 %v655, %v600
        %v666 = vmul.f32 %v655, %v601
        %v667 = vmul.f32 %v655, %v602
        %v668 = vmul.f32 %v655, %v603
        %v669 = vmul.f32 %v655, %v604
        %v670 = vmul.f32 %v655, %v605
        %v671 = vmul.f32 %v655, %v606
        %v672 = vmul.f32 %v655, %v607
        %v673 = vmul.f32 %v655, %v608
        %v674 = vmul.f32 %v655, %v609
        %v675 = vmul.f32 %v655, %v610
        %v676 = vmul.f32 %v655, %v611
        %v677 = vmul.f32 %v655, %v612
        %v678 = vmul.f32 %v655, %v613
        %v679 = vmul.f32 %v655, %v614
        %v680 = vmul.f32 %v655, %v615
        %v681 = vmul.f32 %v655, %v616
        %v682 = vmul.f32 %v655, %v617
        %v683 = vmul.f32 %v655, %v618
        %v684 = vmul.f32 %v655, %v619
        %v685 = vmul.f32 %v655, %v620
        %v686 = vmul.f32 %v655, %v621
        %v687 = vmul.f32 %v655, %v622
        %v688 = vmul.f32 %v655, %v623
        %v689 = vmul.f32 %v655, %v624
        %v690 = vmul.f32 %v655, %v625
        %v691 = vmul.f32 %v655, %v626
        %v692 = vmul.f32 %v655, %v627
        %v693 = vmul.f32 %v655, %v628
        %v694 = vmul.f32 %v655, %v629
        %v695 = vmul.f32 %v655, %v630
        %v696 = vmul.f32 %v655, %v631
        %v697 = vmul.f32 %v655, %v632
        %v698 = vmul.f32 %v655, %v633
        %v699 = vmul.f32 %v655, %v634
        %v700 = vmul.f32 %v655, %v635
        %v701 = vmul.f32 %v655, %v636
        %v702 = vmul.f32 %v655, %v637
        %v703 = vmul.f32 %v655, %v638
        %v704 = vmul.f32 %v655, %v639
        %v705 = vmul.f32 %v655, %v640
        %v706 = vmul.f32 %v655, %v641
        %v707 = vmul.f32 %v655, %v642
        %v708 = vmul.f32 %v655, %v643
        %v709 = vmul.f32 %v655, %v644
        %v710 = vmul.f32 %v655, %v645
        %v711 = vmul.f32 %v655, %v646
        %v712 = vmul.f32 %v655, %v647
        %v713 = vmul.f32 %v655, %v648
        %v714 = vmul.f32 %v655, %v649
        %v715 = vmul.f32 %v655, %v650
        %v716 = vmul.f32 %v655, %v651
        %v717 = vmul.f32 %v655, %v652
        %v718 = vmul.f32 %v655, %v653
        %v719 = vmul.f32 %v655, %v654
        %v720 = vadd.f32 %v526, %v656
        %v721 = vadd.f32 %v527, %v657
        %v722 = vadd.f32 %v528, %v658
        %v723 = vadd.f32 %v529, %v659
        %v724 = vadd.f32 %v530, %v660
        %v725 = vadd.f32 %v531, %v661
        %v726 = vadd.f32 %v532, %v662
        %v727 = vadd.f32 %v533, %v663
        %v728 = vadd.f32 %v534, %v664
        %v729 = vadd.f32 %v535, %v665
        %v730 = vadd.f32 %v536, %v666
        %v731 = vadd.f32 %v537, %v667
        %v732 = vadd.f32 %v538, %v668
        %v733 = vadd.f32 %v539, %v669
        %v734 = vadd.f32 %v540, %v670
        %v735 = vadd.f32 %v541, %v671
        %v736 = vadd.f32 %v542, %v672
        %v737 = vadd.f32 %v543, %v673
        %v738 = vadd.f32 %v544, %v674
        %v739 = vadd.f32 %v545, %v675
        %v740 = vadd.f32 %v546, %v676
        %v741 = vadd.f32 %v547, %v677
        %v742 = vadd.f32 %v548, %v678
        %v743 = vadd.f32 %v549, %v679
        %v744 = vadd.f32 %v550, %v680
        %v745 = vadd.f32 %v551, %v681
        %v746 = vadd.f32 %v552, %v682
        %v747 = vadd.f32 %v553, %v683
        %v748 = vadd.f32 %v554, %v684
        %v749 = vadd.f32 %v555, %v685
        %v750 = vadd.f32 %v556, %v686
        %v751 = vadd.f32 %v557, %v687
        %v752 = vadd.f32 %v558, %v688
        %v753 = vadd.f32 %v559, %v689
        %v754 = vadd.f32 %v560, %v690
        %v755 = vadd.f32 %v561, %v691
        %v756 = vadd.f32 %v562, %v692
        %v757 = vadd.f32 %v563, %v693
        %v758 = vadd.f32 %v564, %v694
        %v759 = vadd.f32 %v565, %v695
        %v760 = vadd.f32 %v566, %v696
        %v761 = vadd.f32 %v567, %v697
        %v762 = vadd.f32 %v568, %v698
        %v763 = vadd.f32 %v569, %v699
        %v764 = vadd.f32 %v570, %v700
        %v765 = vadd.f32 %v571, %v701
        %v766 = vadd.f32 %v572, %v702
        %v767 = vadd.f32 %v573, %v703
        %v768 = vadd.f32 %v574, %v704
        %v769 = vadd.f32 %v575, %v705
        %v770 = vadd.f32 %v576, %v706
        %v771 = vadd.f32 %v577, %v707
        %v772 = vadd.f32 %v578, %v708
        %v773 = vadd.f32 %v579, %v709
        %v774 = vadd.f32 %v580, %v710
        %v775 = vadd.f32 %v581, %v711
        %v776 = vadd.f32 %v582, %v712
        %v777 = vadd.f32 %v583, %v713
        %v778 = vadd.f32 %v584, %v714
        %v779 = vadd.f32 %v585, %v715
        %v780 = vadd.f32 %v586, %v716
        %v781 = vadd.f32 %v587, %v717
        %v782 = vadd.f32 %v588, %v718
        %v783 = vadd.f32 %v589, %v719
        %784 = vst [vmem:[%s403] sm:$0xff] %v720
        %785 = vst [vmem:[%s403 + $0x8] sm:$0xff] %v721
        %786 = vst [vmem:[%s403 + $0x10] sm:$0xff] %v722
        %787 = vst [vmem:[%s403 + $0x18] sm:$0xff] %v723
        %788 = vst [vmem:[%s403 + $0x20] sm:$0xff] %v724
        %789 = vst [vmem:[%s403 + $0x28] sm:$0xff] %v725
        %790 = vst [vmem:[%s403 + $0x30] sm:$0xff] %v726
        %791 = vst [vmem:[%s403 + $0x38] sm:$0xff] %v727
        %792 = vst [vmem:[%s403 + $0x40] sm:$0xff] %v728
        %793 = vst [vmem:[%s403 + $0x48] sm:$0xff] %v729
        %794 = vst [vmem:[%s403 + $0x50] sm:$0xff] %v730
        %795 = vst [vmem:[%s403 + $0x58] sm:$0xff] %v731
        %796 = vst [vmem:[%s403 + $0x60] sm:$0xff] %v732
        %797 = vst [vmem:[%s403 + $0x68] sm:$0xff] %v733
        %798 = vst [vmem:[%s403 + $0x70] sm:$0xff] %v734
        %799 = vst [vmem:[%s403 + $0x78] sm:$0xff] %v735
        %800 = vst [vmem:[%s403 + $0x80] sm:$0xff] %v736
        %801 = vst [vmem:[%s403 + $0x88] sm:$0xff] %v737
        %802 = vst [vmem:[%s403 + $0x90] sm:$0xff] %v738
        %803 = vst [vmem:[%s403 + $0x98] sm:$0xff] %v739
        %804 = vst [vmem:[%s403 + $0xa0] sm:$0xff] %v740
        %805 = vst [vmem:[%s403 + $0xa8] sm:$0xff] %v741
        %806 = vst [vmem:[%s403 + $0xb0] sm:$0xff] %v742
        %807 = vst [vmem:[%s403 + $0xb8] sm:$0xff] %v743
        %808 = vst [vmem:[%s403 + $0xc0] sm:$0xff] %v744
        %809 = vst [vmem:[%s403 + $0xc8] sm:$0xff] %v745
        %810 = vst [vmem:[%s403 + $0xd0] sm:$0xff] %v746
        %811 = vst [vmem:[%s403 + $0xd8] sm:$0xff] %v747
        %812 = vst [vmem:[%s403 + $0xe0] sm:$0xff] %v748
        %813 = vst [vmem:[%s403 + $0xe8] sm:$0xff] %v749
        %814 = vst [vmem:[%s403 + $0xf0] sm:$0xff] %v750
        %815 = vst [vmem:[%s403 + $0xf8] sm:$0xff] %v751
        %816 = vst [vmem:[%s403 + $0x100] sm:$0xff] %v752
        %817 = vst [vmem:[%s403 + $0x108] sm:$0xff] %v753
        %818 = vst [vmem:[%s403 + $0x110] sm:$0xff] %v754
        %819 = vst [vmem:[%s403 + $0x118] sm:$0xff] %v755
        %820 = vst [vmem:[%s403 + $0x120] sm:$0xff] %v756
        %821 = vst [vmem:[%s403 + $0x128] sm:$0xff] %v757
        %822 = vst [vmem:[%s403 + $0x130] sm:$0xff] %v758
        %823 = vst [vmem:[%s403 + $0x138] sm:$0xff] %v759
        %824 = vst [vmem:[%s403 + $0x140] sm:$0xff] %v760
        %825 = vst [vmem:[%s403 + $0x148] sm:$0xff] %v761
        %826 = vst [vmem:[%s403 + $0x150] sm:$0xff] %v762
        %827 = vst [vmem:[%s403 + $0x158] sm:$0xff] %v763
        %828 = vst [vmem:[%s403 + $0x160] sm:$0xff] %v764
        %829 = vst [vmem:[%s403 + $0x168] sm:$0xff] %v765
        %830 = vst [vmem:[%s403 + $0x170] sm:$0xff] %v766
        %831 = vst [vmem:[%s403 + $0x178] sm:$0xff] %v767
        %832 = vst [vmem:[%s403 + $0x180] sm:$0xff] %v768
        %833 = vst [vmem:[%s403 + $0x188] sm:$0xff] %v769
        %834 = vst [vmem:[%s403 + $0x190] sm:$0xff] %v770
        %835 = vst [vmem:[%s403 + $0x198] sm:$0xff] %v771
        %836 = vst [vmem:[%s403 + $0x1a0] sm:$0xff] %v772
        %837 = vst [vmem:[%s403 + $0x1a8] sm:$0xff] %v773
        %838 = vst [vmem:[%s403 + $0x1b0] sm:$0xff] %v774
        %839 = vst [vmem:[%s403 + $0x1b8] sm:$0xff] %v775
        %840 = vst [vmem:[%s403 + $0x1c0] sm:$0xff] %v776
        %841 = vst [vmem:[%s403 + $0x1c8] sm:$0xff] %v777
        %842 = vst [vmem:[%s403 + $0x1d0] sm:$0xff] %v778
        %843 = vst [vmem:[%s403 + $0x1d8] sm:$0xff] %v779
        %844 = vst [vmem:[%s403 + $0x1e0] sm:$0xff] %v780
        %845 = vst [vmem:[%s403 + $0x1e8] sm:$0xff] %v781
        %846 = vst [vmem:[%s403 + $0x1f0] sm:$0xff] %v782
        %847 = vst [vmem:[%s403 + $0x1f8] sm:$0xff] %v783
        %v848 = vpack.c.bf16 %v722, %v720
        %v849 = vpack.c.bf16 %v723, %v721
        %v850 = vpack.c.bf16 %v726, %v724
        %v851 = vpack.c.bf16 %v727, %v725
        %v852 = vpack.c.bf16 %v730, %v728
        %v853 = vpack.c.bf16 %v731, %v729
        %v854 = vpack.c.bf16 %v734, %v732
        %v855 = vpack.c.bf16 %v735, %v733
        %v856 = vpack.c.bf16 %v738, %v736
        %v857 = vpack.c.bf16 %v739, %v737
        %v858 = vpack.c.bf16 %v742, %v740
        %v859 = vpack.c.bf16 %v743, %v741
        %v860 = vpack.c.bf16 %v746, %v744
        %v861 = vpack.c.bf16 %v747, %v745
        %v862 = vpack.c.bf16 %v750, %v748
        %v863 = vpack.c.bf16 %v751, %v749
        %v864 = vpack.c.bf16 %v754, %v752
        %v865 = vpack.c.bf16 %v755, %v753
        %v866 = vpack.c.bf16 %v758, %v756
        %v867 = vpack.c.bf16 %v759, %v757
        %v868 = vpack.c.bf16 %v762, %v760
        %v869 = vpack.c.bf16 %v763, %v761
        %v870 = vpack.c.bf16 %v766, %v764
        %v871 = vpack.c.bf16 %v767, %v765
        %v872 = vpack.c.bf16 %v770, %v768
        %v873 = vpack.c.bf16 %v771, %v769
        %v874 = vpack.c.bf16 %v774, %v772
        %v875 = vpack.c.bf16 %v775, %v773
        %v876 = vpack.c.bf16 %v778, %v776
        %v877 = vpack.c.bf16 %v779, %v777
        %v878 = vpack.c.bf16 %v782, %v780
        %v879 = vpack.c.bf16 %v783, %v781
        %v880 = vld [vmem:[#allocation5] sm:$0xff]
        %v881 = vld [vmem:[#allocation5 + $0x8] sm:$0xff]
        %v882 = vld [vmem:[#allocation5 + $0x10] sm:$0xff]
        %v883 = vld [vmem:[#allocation5 + $0x18] sm:$0xff]
        %v884 = vld [vmem:[#allocation5 + $0x20] sm:$0xff]
        %v885 = vld [vmem:[#allocation5 + $0x28] sm:$0xff]
        %v886 = vld [vmem:[#allocation5 + $0x30] sm:$0xff]
        %v887 = vld [vmem:[#allocation5 + $0x38] sm:$0xff]
        %v888 = vld [vmem:[#allocation5 + $0x40] sm:$0xff]
        %v889 = vld [vmem:[#allocation5 + $0x48] sm:$0xff]
        %v890 = vld [vmem:[#allocation5 + $0x50] sm:$0xff]
        %v891 = vld [vmem:[#allocation5 + $0x58] sm:$0xff]
        %v892 = vld [vmem:[#allocation5 + $0x60] sm:$0xff]
        %v893 = vld [vmem:[#allocation5 + $0x68] sm:$0xff]
        %v894 = vld [vmem:[#allocation5 + $0x70] sm:$0xff]
        %v895 = vld [vmem:[#allocation5 + $0x78] sm:$0xff]
        %v896 = vld [vmem:[#allocation5 + $0x80] sm:$0xff]
        %v897 = vld [vmem:[#allocation5 + $0x88] sm:$0xff]
        %v898 = vld [vmem:[#allocation5 + $0x90] sm:$0xff]
        %v899 = vld [vmem:[#allocation5 + $0x98] sm:$0xff]
        %v900 = vld [vmem:[#allocation5 + $0xa0] sm:$0xff]
        %v901 = vld [vmem:[#allocation5 + $0xa8] sm:$0xff]
        %v902 = vld [vmem:[#allocation5 + $0xb0] sm:$0xff]
        %v903 = vld [vmem:[#allocation5 + $0xb8] sm:$0xff]
        %v904 = vld [vmem:[#allocation5 + $0xc0] sm:$0xff]
        %v905 = vld [vmem:[#allocation5 + $0xc8] sm:$0xff]
        %v906 = vld [vmem:[#allocation5 + $0xd0] sm:$0xff]
        %v907 = vld [vmem:[#allocation5 + $0xd8] sm:$0xff]
        %v908 = vld [vmem:[#allocation5 + $0xe0] sm:$0xff]
        %v909 = vld [vmem:[#allocation5 + $0xe8] sm:$0xff]
        %v910 = vld [vmem:[#allocation5 + $0xf0] sm:$0xff]
        %v911 = vld [vmem:[#allocation5 + $0xf8] sm:$0xff]
        %v912 = vld [vmem:[#allocation5 + $0x100] sm:$0xff]
        %v913 = vld [vmem:[#allocation5 + $0x108] sm:$0xff]
        %v914 = vld [vmem:[#allocation5 + $0x110] sm:$0xff]
        %v915 = vld [vmem:[#allocation5 + $0x118] sm:$0xff]
        %v916 = vld [vmem:[#allocation5 + $0x120] sm:$0xff]
        %v917 = vld [vmem:[#allocation5 + $0x128] sm:$0xff]
        %v918 = vld [vmem:[#allocation5 + $0x130] sm:$0xff]
        %v919 = vld [vmem:[#allocation5 + $0x138] sm:$0xff]
        %v920 = vld [vmem:[#allocation5 + $0x140] sm:$0xff]
        %v921 = vld [vmem:[#allocation5 + $0x148] sm:$0xff]
        %v922 = vld [vmem:[#allocation5 + $0x150] sm:$0xff]
        %v923 = vld [vmem:[#allocation5 + $0x158] sm:$0xff]
        %v924 = vld [vmem:[#allocation5 + $0x160] sm:$0xff]
        %v925 = vld [vmem:[#allocation5 + $0x168] sm:$0xff]
        %v926 = vld [vmem:[#allocation5 + $0x170] sm:$0xff]
        %v927 = vld [vmem:[#allocation5 + $0x178] sm:$0xff]
        %v928 = vld [vmem:[#allocation5 + $0x180] sm:$0xff]
        %v929 = vld [vmem:[#allocation5 + $0x188] sm:$0xff]
        %v930 = vld [vmem:[#allocation5 + $0x190] sm:$0xff]
        %v931 = vld [vmem:[#allocation5 + $0x198] sm:$0xff]
        %v932 = vld [vmem:[#allocation5 + $0x1a0] sm:$0xff]
        %v933 = vld [vmem:[#allocation5 + $0x1a8] sm:$0xff]
        %v934 = vld [vmem:[#allocation5 + $0x1b0] sm:$0xff]
        %v935 = vld [vmem:[#allocation5 + $0x1b8] sm:$0xff]
        %v936 = vld [vmem:[#allocation5 + $0x1c0] sm:$0xff]
        %v937 = vld [vmem:[#allocation5 + $0x1c8] sm:$0xff]
        %v938 = vld [vmem:[#allocation5 + $0x1d0] sm:$0xff]
        %v939 = vld [vmem:[#allocation5 + $0x1d8] sm:$0xff]
        %v940 = vld [vmem:[#allocation5 + $0x1e0] sm:$0xff]
        %v941 = vld [vmem:[#allocation5 + $0x1e8] sm:$0xff]
        %v942 = vld [vmem:[#allocation5 + $0x1f0] sm:$0xff]
        %v943 = vld [vmem:[#allocation5 + $0x1f8] sm:$0xff]
        %v1008 = vunpack.c.l.b16 %v880
        %v1009 = vunpack.c.h.b16 %v880
        %v1010 = vunpack.c.l.b16 %v881
        %v1011 = vunpack.c.h.b16 %v881
        %v1012 = vunpack.c.l.b16 %v882
        %v1013 = vunpack.c.h.b16 %v882
        %v1014 = vunpack.c.l.b16 %v883
        %v1015 = vunpack.c.h.b16 %v883
        %v1016 = vunpack.c.l.b16 %v884
        %v1017 = vunpack.c.h.b16 %v884
        %v1018 = vunpack.c.l.b16 %v885
        %v1019 = vunpack.c.h.b16 %v885
        %v1020 = vunpack.c.l.b16 %v886
        %v1021 = vunpack.c.h.b16 %v886
        %v1022 = vunpack.c.l.b16 %v887
        %v1023 = vunpack.c.h.b16 %v887
        %v1024 = vunpack.c.l.b16 %v888
        %v1025 = vunpack.c.h.b16 %v888
        %v1026 = vunpack.c.l.b16 %v889
        %v1027 = vunpack.c.h.b16 %v889
        %v1028 = vunpack.c.l.b16 %v890
        %v1029 = vunpack.c.h.b16 %v890
        %v1030 = vunpack.c.l.b16 %v891
        %v1031 = vunpack.c.h.b16 %v891
        %v1032 = vunpack.c.l.b16 %v892
        %v1033 = vunpack.c.h.b16 %v892
        %v1034 = vunpack.c.l.b16 %v893
        %v1035 = vunpack.c.h.b16 %v893
        %v1036 = vunpack.c.l.b16 %v894
        %v1037 = vunpack.c.h.b16 %v894
        %v1038 = vunpack.c.l.b16 %v895
        %v1039 = vunpack.c.h.b16 %v895
        %v1040 = vunpack.c.l.b16 %v896
        %v1041 = vunpack.c.h.b16 %v896
        %v1042 = vunpack.c.l.b16 %v897
        %v1043 = vunpack.c.h.b16 %v897
        %v1044 = vunpack.c.l.b16 %v898
        %v1045 = vunpack.c.h.b16 %v898
        %v1046 = vunpack.c.l.b16 %v899
        %v1047 = vunpack.c.h.b16 %v899
        %v1048 = vunpack.c.l.b16 %v900
        %v1049 = vunpack.c.h.b16 %v900
        %v1050 = vunpack.c.l.b16 %v901
        %v1051 = vunpack.c.h.b16 %v901
        %v1052 = vunpack.c.l.b16 %v902
        %v1053 = vunpack.c.h.b16 %v902
        %v1054 = vunpack.c.l.b16 %v903
        %v1055 = vunpack.c.h.b16 %v903
        %v1056 = vunpack.c.l.b16 %v904
        %v1057 = vunpack.c.h.b16 %v904
        %v1058 = vunpack.c.l.b16 %v905
        %v1059 = vunpack.c.h.b16 %v905
        %v1060 = vunpack.c.l.b16 %v906
        %v1061 = vunpack.c.h.b16 %v906
        %v1062 = vunpack.c.l.b16 %v907
        %v1063 = vunpack.c.h.b16 %v907
        %v1064 = vunpack.c.l.b16 %v908
        %v1065 = vunpack.c.h.b16 %v908
        %v1066 = vunpack.c.l.b16 %v909
        %v1067 = vunpack.c.h.b16 %v909
        %v1068 = vunpack.c.l.b16 %v910
        %v1069 = vunpack.c.h.b16 %v910
        %v1070 = vunpack.c.l.b16 %v911
        %v1071 = vunpack.c.h.b16 %v911
        %v1072 = vunpack.c.l.b16 %v912
        %v1073 = vunpack.c.h.b16 %v912
        %v1074 = vunpack.c.l.b16 %v913
        %v1075 = vunpack.c.h.b16 %v913
        %v1076 = vunpack.c.l.b16 %v914
        %v1077 = vunpack.c.h.b16 %v914
        %v1078 = vunpack.c.l.b16 %v915
        %v1079 = vunpack.c.h.b16 %v915
        %v1080 = vunpack.c.l.b16 %v916
        %v1081 = vunpack.c.h.b16 %v916
        %v1082 = vunpack.c.l.b16 %v917
        %v1083 = vunpack.c.h.b16 %v917
        %v1084 = vunpack.c.l.b16 %v918
        %v1085 = vunpack.c.h.b16 %v918
        %v1086 = vunpack.c.l.b16 %v919
        %v1087 = vunpack.c.h.b16 %v919
        %v1088 = vunpack.c.l.b16 %v920
        %v1089 = vunpack.c.h.b16 %v920
        %v1090 = vunpack.c.l.b16 %v921
        %v1091 = vunpack.c.h.b16 %v921
        %v1092 = vunpack.c.l.b16 %v922
        %v1093 = vunpack.c.h.b16 %v922
        %v1094 = vunpack.c.l.b16 %v923
        %v1095 = vunpack.c.h.b16 %v923
        %v1096 = vunpack.c.l.b16 %v924
        %v1097 = vunpack.c.h.b16 %v924
        %v1098 = vunpack.c.l.b16 %v925
        %v1099 = vunpack.c.h.b16 %v925
        %v1100 = vunpack.c.l.b16 %v926
        %v1101 = vunpack.c.h.b16 %v926
        %v1102 = vunpack.c.l.b16 %v927
        %v1103 = vunpack.c.h.b16 %v927
        %v1104 = vunpack.c.l.b16 %v928
        %v1105 = vunpack.c.h.b16 %v928
        %v1106 = vunpack.c.l.b16 %v929
        %v1107 = vunpack.c.h.b16 %v929
        %v1108 = vunpack.c.l.b16 %v930
        %v1109 = vunpack.c.h.b16 %v930
        %v1110 = vunpack.c.l.b16 %v931
        %v1111 = vunpack.c.h.b16 %v931
        %v1112 = vunpack.c.l.b16 %v932
        %v1113 = vunpack.c.h.b16 %v932
        %v1114 = vunpack.c.l.b16 %v933
        %v1115 = vunpack.c.h.b16 %v933
        %v1116 = vunpack.c.l.b16 %v934
        %v1117 = vunpack.c.h.b16 %v934
        %v1118 = vunpack.c.l.b16 %v935
        %v1119 = vunpack.c.h.b16 %v935
        %v1120 = vunpack.c.l.b16 %v936
        %v1121 = vunpack.c.h.b16 %v936
        %v1122 = vunpack.c.l.b16 %v937
        %v1123 = vunpack.c.h.b16 %v937
        %v1124 = vunpack.c.l.b16 %v938
        %v1125 = vunpack.c.h.b16 %v938
        %v1126 = vunpack.c.l.b16 %v939
        %v1127 = vunpack.c.h.b16 %v939
        %v1128 = vunpack.c.l.b16 %v940
        %v1129 = vunpack.c.h.b16 %v940
        %v1130 = vunpack.c.l.b16 %v941
        %v1131 = vunpack.c.h.b16 %v941
        %v1132 = vunpack.c.l.b16 %v942
        %v1133 = vunpack.c.h.b16 %v942
        %v1134 = vunpack.c.l.b16 %v943
        %v1135 = vunpack.c.h.b16 %v943
        %v1136 = vpack.c.b16 %v1012, %v1008
        %v1137 = vpack.c.b16 %v1013, %v1009
        %v1138 = vpack.c.b16 %v1014, %v1010
        %v1139 = vpack.c.b16 %v1015, %v1011
        %v1140 = vpack.c.b16 %v1020, %v1016
        %v1141 = vpack.c.b16 %v1021, %v1017
        %v1142 = vpack.c.b16 %v1022, %v1018
        %v1143 = vpack.c.b16 %v1023, %v1019
        %v1144 = vpack.c.b16 %v1028, %v1024
        %v1145 = vpack.c.b16 %v1029, %v1025
        %v1146 = vpack.c.b16 %v1030, %v1026
        %v1147 = vpack.c.b16 %v1031, %v1027
        %v1148 = vpack.c.b16 %v1036, %v1032
        %v1149 = vpack.c.b16 %v1037, %v1033
        %v1150 = vpack.c.b16 %v1038, %v1034
        %v1151 = vpack.c.b16 %v1039, %v1035
        %v1152 = vpack.c.b16 %v1044, %v1040
        %v1153 = vpack.c.b16 %v1045, %v1041
        %v1154 = vpack.c.b16 %v1046, %v1042
        %v1155 = vpack.c.b16 %v1047, %v1043
        %v1156 = vpack.c.b16 %v1052, %v1048
        %v1157 = vpack.c.b16 %v1053, %v1049
        %v1158 = vpack.c.b16 %v1054, %v1050
        %v1159 = vpack.c.b16 %v1055, %v1051
        %v1160 = vpack.c.b16 %v1060, %v1056
        %v1161 = vpack.c.b16 %v1061, %v1057
        %v1162 = vpack.c.b16 %v1062, %v1058
        %v1163 = vpack.c.b16 %v1063, %v1059
        %v1164 = vpack.c.b16 %v1068, %v1064
        %v1165 = vpack.c.b16 %v1069, %v1065
        %v1166 = vpack.c.b16 %v1070, %v1066
        %v1167 = vpack.c.b16 %v1071, %v1067
        %v1168 = vpack.c.b16 %v1076, %v1072
        %v1169 = vpack.c.b16 %v1077, %v1073
        %v1170 = vpack.c.b16 %v1078, %v1074
        %v1171 = vpack.c.b16 %v1079, %v1075
        %v1172 = vpack.c.b16 %v1084, %v1080
        %v1173 = vpack.c.b16 %v1085, %v1081
        %v1174 = vpack.c.b16 %v1086, %v1082
        %v1175 = vpack.c.b16 %v1087, %v1083
        %v1176 = vpack.c.b16 %v1092, %v1088
        %v1177 = vpack.c.b16 %v1093, %v1089
        %v1178 = vpack.c.b16 %v1094, %v1090
        %v1179 = vpack.c.b16 %v1095, %v1091
        %v1180 = vpack.c.b16 %v1100, %v1096
        %v1181 = vpack.c.b16 %v1101, %v1097
        %v1182 = vpack.c.b16 %v1102, %v1098
        %v1183 = vpack.c.b16 %v1103, %v1099
        %v1184 = vpack.c.b16 %v1108, %v1104
        %v1185 = vpack.c.b16 %v1109, %v1105
        %v1186 = vpack.c.b16 %v1110, %v1106
        %v1187 = vpack.c.b16 %v1111, %v1107
        %v1188 = vpack.c.b16 %v1116, %v1112
        %v1189 = vpack.c.b16 %v1117, %v1113
        %v1190 = vpack.c.b16 %v1118, %v1114
        %v1191 = vpack.c.b16 %v1119, %v1115
        %v1192 = vpack.c.b16 %v1124, %v1120
        %v1193 = vpack.c.b16 %v1125, %v1121
        %v1194 = vpack.c.b16 %v1126, %v1122
        %v1195 = vpack.c.b16 %v1127, %v1123
        %v1196 = vpack.c.b16 %v1132, %v1128
        %v1197 = vpack.c.b16 %v1133, %v1129
        %v1198 = vpack.c.b16 %v1134, %v1130
        %v1199 = vpack.c.b16 %v1135, %v1131
        %1264 = vmatprep.subr.bf16.mxu0 %v1165
        %1265 = vmatpush1.bf16.msra.mxu0 %v1164
        %1266 = vmatprep.subr.bf16.mxu0 %v1161
        %1267 = vmatpush1.bf16.msra.mxu0 %v1160
        %1268 = vmatprep.subr.bf16.mxu0 %v1157
        %1269 = vmatpush1.bf16.msra.mxu0 %v1156
        %1270 = vmatprep.subr.bf16.mxu0 %v1153
        %1271 = vmatpush1.bf16.msra.mxu0 %v1152
        %1272 = vmatprep.subr.bf16.mxu0 %v1149
        %1273 = vmatpush1.bf16.msra.mxu0 %v1148
        %1274 = vmatprep.subr.bf16.mxu0 %v1145
        %1275 = vmatpush1.bf16.msra.mxu0 %v1144
        %1276 = vmatprep.subr.bf16.mxu0 %v1141
        %1277 = vmatpush1.bf16.msra.mxu0 %v1140
        %1278 = vmatprep.subr.bf16.mxu0 %v1137
        %1279 = vmatpush1.bf16.msra.mxu0 %v1136
        %1280 = vmatprep.subr.bf16.mxu0 %v1197
        %1281 = vmatpush2.bf16.msra.mxu0 %v1196
        %1282 = vmatprep.subr.bf16.mxu0 %v1193
        %1283 = vmatpush2.bf16.msra.mxu0 %v1192
        %1284 = vmatprep.subr.bf16.mxu0 %v1189
        %1285 = vmatpush2.bf16.msra.mxu0 %v1188
        %1286 = vmatprep.subr.bf16.mxu0 %v1185
        %1287 = vmatpush2.bf16.msra.mxu0 %v1184
        %1288 = vmatprep.subr.bf16.mxu0 %v1181
        %1289 = vmatpush2.bf16.msra.mxu0 %v1180
        %1290 = vmatprep.subr.bf16.mxu0 %v1177
        %1291 = vmatpush2.bf16.msra.mxu0 %v1176
        %1292 = vmatprep.subr.bf16.mxu0 %v1173
        %1293 = vmatpush2.bf16.msra.mxu0 %v1172
        %1294 = vmatprep.subr.bf16.mxu0 %v1169
        %1295 = vmatpush2.bf16.msra.mxu0 %v1168
        %1296 = vmatprep.mubr.bf16.mxu0 %v849
        %1297 = vmatmul.mubr.bf16.gmra.mxu0 %v848
        %v1298 = vpop.f32.mrf.mxu0
        %v1299 = vadd.f32 0.0, %v1298
        %v1300 = vpop.f32.mrf.mxu0
        %v1301 = vadd.f32 0.0, %v1300
        %v1302 = vpop.f32.mrf.mxu0
        %v1303 = vadd.f32 0.0, %v1302
        %v1304 = vpop.f32.mrf.mxu0
        %v1305 = vadd.f32 0.0, %v1304
        %1306 = vmatprep.mubr.bf16.mxu0 %v851
        %1307 = vmatmul.mubr.bf16.gmra.mxu0 %v850
        %v1308 = vpop.f32.mrf.mxu0
        %v1309 = vadd.f32 0.0, %v1308
        %v1310 = vpop.f32.mrf.mxu0
        %v1311 = vadd.f32 0.0, %v1310
        %v1312 = vpop.f32.mrf.mxu0
        %v1313 = vadd.f32 0.0, %v1312
        %v1314 = vpop.f32.mrf.mxu0
        %v1315 = vadd.f32 0.0, %v1314
        %1316 = vmatprep.mubr.bf16.mxu0 %v853
        %1317 = vmatmul.mubr.bf16.gmra.mxu0 %v852
        %v1318 = vpop.f32.mrf.mxu0
        %v1319 = vadd.f32 0.0, %v1318
        %v1320 = vpop.f32.mrf.mxu0
        %v1321 = vadd.f32 0.0, %v1320
        %v1322 = vpop.f32.mrf.mxu0
        %v1323 = vadd.f32 0.0, %v1322
        %v1324 = vpop.f32.mrf.mxu0
        %v1325 = vadd.f32 0.0, %v1324
        %1326 = vmatprep.mubr.bf16.mxu0 %v855
        %1327 = vmatmul.mubr.bf16.gmra.mxu0 %v854
        %v1328 = vpop.f32.mrf.mxu0
        %v1329 = vadd.f32 0.0, %v1328
        %v1330 = vpop.f32.mrf.mxu0
        %v1331 = vadd.f32 0.0, %v1330
        %v1332 = vpop.f32.mrf.mxu0
        %v1333 = vadd.f32 0.0, %v1332
        %v1334 = vpop.f32.mrf.mxu0
        %v1335 = vadd.f32 0.0, %v1334
        %1336 = vmatprep.mubr.bf16.mxu0 %v857
        %1337 = vmatmul.mubr.bf16.gmra.mxu0 %v856
        %v1338 = vpop.f32.mrf.mxu0
        %v1339 = vadd.f32 0.0, %v1338
        %v1340 = vpop.f32.mrf.mxu0
        %v1341 = vadd.f32 0.0, %v1340
        %v1342 = vpop.f32.mrf.mxu0
        %v1343 = vadd.f32 0.0, %v1342
        %v1344 = vpop.f32.mrf.mxu0
        %v1345 = vadd.f32 0.0, %v1344
        %1346 = vmatprep.mubr.bf16.mxu0 %v859
        %1347 = vmatmul.mubr.bf16.gmra.mxu0 %v858
        %v1348 = vpop.f32.mrf.mxu0
        %v1349 = vadd.f32 0.0, %v1348
        %v1350 = vpop.f32.mrf.mxu0
        %v1351 = vadd.f32 0.0, %v1350
        %v1352 = vpop.f32.mrf.mxu0
        %v1353 = vadd.f32 0.0, %v1352
        %v1354 = vpop.f32.mrf.mxu0
        %v1355 = vadd.f32 0.0, %v1354
        %1356 = vmatprep.mubr.bf16.mxu0 %v861
        %1357 = vmatmul.mubr.bf16.gmra.mxu0 %v860
        %v1358 = vpop.f32.mrf.mxu0
        %v1359 = vadd.f32 0.0, %v1358
        %v1360 = vpop.f32.mrf.mxu0
        %v1361 = vadd.f32 0.0, %v1360
        %v1362 = vpop.f32.mrf.mxu0
        %v1363 = vadd.f32 0.0, %v1362
        %v1364 = vpop.f32.mrf.mxu0
        %v1365 = vadd.f32 0.0, %v1364
        %1366 = vmatprep.mubr.bf16.mxu0 %v863
        %1367 = vmatmul.mubr.bf16.gmra.mxu0 %v862
        %v1368 = vpop.f32.mrf.mxu0
        %v1369 = vadd.f32 0.0, %v1368
        %v1370 = vpop.f32.mrf.mxu0
        %v1371 = vadd.f32 0.0, %v1370
        %v1372 = vpop.f32.mrf.mxu0
        %v1373 = vadd.f32 0.0, %v1372
        %v1374 = vpop.f32.mrf.mxu0
        %v1375 = vadd.f32 0.0, %v1374
        %1376 = vmatprep.mubr.bf16.mxu0 %v865
        %1377 = vmatmul.mubr.bf16.gmra.mxu0 %v864
        %v1378 = vpop.f32.mrf.mxu0
        %v1379 = vadd.f32 0.0, %v1378
        %v1380 = vpop.f32.mrf.mxu0
        %v1381 = vadd.f32 0.0, %v1380
        %v1382 = vpop.f32.mrf.mxu0
        %v1383 = vadd.f32 0.0, %v1382
        %v1384 = vpop.f32.mrf.mxu0
        %v1385 = vadd.f32 0.0, %v1384
        %1386 = vmatprep.mubr.bf16.mxu0 %v867
        %1387 = vmatmul.mubr.bf16.gmra.mxu0 %v866
        %v1388 = vpop.f32.mrf.mxu0
        %v1389 = vadd.f32 0.0, %v1388
        %v1390 = vpop.f32.mrf.mxu0
        %v1391 = vadd.f32 0.0, %v1390
        %v1392 = vpop.f32.mrf.mxu0
        %v1393 = vadd.f32 0.0, %v1392
        %v1394 = vpop.f32.mrf.mxu0
        %v1395 = vadd.f32 0.0, %v1394
        %1396 = vmatprep.mubr.bf16.mxu0 %v869
        %1397 = vmatmul.mubr.bf16.gmra.mxu0 %v868
        %v1398 = vpop.f32.mrf.mxu0
        %v1399 = vadd.f32 0.0, %v1398
        %v1400 = vpop.f32.mrf.mxu0
        %v1401 = vadd.f32 0.0, %v1400
        %v1402 = vpop.f32.mrf.mxu0
        %v1403 = vadd.f32 0.0, %v1402
        %v1404 = vpop.f32.mrf.mxu0
        %v1405 = vadd.f32 0.0, %v1404
        %1406 = vmatprep.mubr.bf16.mxu0 %v871
        %1407 = vmatmul.mubr.bf16.gmra.mxu0 %v870
        %v1408 = vpop.f32.mrf.mxu0
        %v1409 = vadd.f32 0.0, %v1408
        %v1410 = vpop.f32.mrf.mxu0
        %v1411 = vadd.f32 0.0, %v1410
        %v1412 = vpop.f32.mrf.mxu0
        %v1413 = vadd.f32 0.0, %v1412
        %v1414 = vpop.f32.mrf.mxu0
        %v1415 = vadd.f32 0.0, %v1414
        %1416 = vmatprep.mubr.bf16.mxu0 %v873
        %1417 = vmatmul.mubr.bf16.gmra.mxu0 %v872
        %v1418 = vpop.f32.mrf.mxu0
        %v1419 = vadd.f32 0.0, %v1418
        %v1420 = vpop.f32.mrf.mxu0
        %v1421 = vadd.f32 0.0, %v1420
        %v1422 = vpop.f32.mrf.mxu0
        %v1423 = vadd.f32 0.0, %v1422
        %v1424 = vpop.f32.mrf.mxu0
        %v1425 = vadd.f32 0.0, %v1424
        %1426 = vmatprep.mubr.bf16.mxu0 %v875
        %1427 = vmatmul.mubr.bf16.gmra.mxu0 %v874
        %v1428 = vpop.f32.mrf.mxu0
        %v1429 = vadd.f32 0.0, %v1428
        %v1430 = vpop.f32.mrf.mxu0
        %v1431 = vadd.f32 0.0, %v1430
        %v1432 = vpop.f32.mrf.mxu0
        %v1433 = vadd.f32 0.0, %v1432
        %v1434 = vpop.f32.mrf.mxu0
        %v1435 = vadd.f32 0.0, %v1434
        %1436 = vmatprep.mubr.bf16.mxu0 %v877
        %1437 = vmatmul.mubr.bf16.gmra.mxu0 %v876
        %v1438 = vpop.f32.mrf.mxu0
        %v1439 = vadd.f32 0.0, %v1438
        %v1440 = vpop.f32.mrf.mxu0
        %v1441 = vadd.f32 0.0, %v1440
        %v1442 = vpop.f32.mrf.mxu0
        %v1443 = vadd.f32 0.0, %v1442
        %v1444 = vpop.f32.mrf.mxu0
        %v1445 = vadd.f32 0.0, %v1444
        %1446 = vmatprep.mubr.bf16.mxu0 %v879
        %1447 = vmatmul.mubr.bf16.gmra.mxu0 %v878
        %v1448 = vpop.f32.mrf.mxu0
        %v1449 = vadd.f32 0.0, %v1448
        %v1450 = vpop.f32.mrf.mxu0
        %v1451 = vadd.f32 0.0, %v1450
        %v1452 = vpop.f32.mrf.mxu0
        %v1453 = vadd.f32 0.0, %v1452
        %v1454 = vpop.f32.mrf.mxu0
        %v1455 = vadd.f32 0.0, %v1454
        %1456 = vdwg.mxu0
        %1457 = vmatprep.subr.bf16.mxu0 %v1167
        %1458 = vmatpush1.bf16.msra.mxu0 %v1166
        %1459 = vmatprep.subr.bf16.mxu0 %v1163
        %1460 = vmatpush1.bf16.msra.mxu0 %v1162
        %1461 = vmatprep.subr.bf16.mxu0 %v1159
        %1462 = vmatpush1.bf16.msra.mxu0 %v1158
        %1463 = vmatprep.subr.bf16.mxu0 %v1155
        %1464 = vmatpush1.bf16.msra.mxu0 %v1154
        %1465 = vmatprep.subr.bf16.mxu0 %v1151
        %1466 = vmatpush1.bf16.msra.mxu0 %v1150
        %1467 = vmatprep.subr.bf16.mxu0 %v1147
        %1468 = vmatpush1.bf16.msra.mxu0 %v1146
        %1469 = vmatprep.subr.bf16.mxu0 %v1143
        %1470 = vmatpush1.bf16.msra.mxu0 %v1142
        %1471 = vmatprep.subr.bf16.mxu0 %v1139
        %1472 = vmatpush1.bf16.msra.mxu0 %v1138
        %1473 = vmatprep.subr.bf16.mxu0 %v1199
        %1474 = vmatpush2.bf16.msra.mxu0 %v1198
        %1475 = vmatprep.subr.bf16.mxu0 %v1195
        %1476 = vmatpush2.bf16.msra.mxu0 %v1194
        %1477 = vmatprep.subr.bf16.mxu0 %v1191
        %1478 = vmatpush2.bf16.msra.mxu0 %v1190
        %1479 = vmatprep.subr.bf16.mxu0 %v1187
        %1480 = vmatpush2.bf16.msra.mxu0 %v1186
        %1481 = vmatprep.subr.bf16.mxu0 %v1183
        %1482 = vmatpush2.bf16.msra.mxu0 %v1182
        %1483 = vmatprep.subr.bf16.mxu0 %v1179
        %1484 = vmatpush2.bf16.msra.mxu0 %v1178
        %1485 = vmatprep.subr.bf16.mxu0 %v1175
        %1486 = vmatpush2.bf16.msra.mxu0 %v1174
        %1487 = vmatprep.subr.bf16.mxu0 %v1171
        %1488 = vmatpush2.bf16.msra.mxu0 %v1170
        %1489 = vmatprep.mubr.bf16.mxu0 %v849
        %1490 = vmatmul.mubr.bf16.gmra.mxu0 %v848
        %v1491 = vpop.f32.mrf.mxu0
        %v1492 = vadd.f32 0.0, %v1491
        %v1493 = vpop.f32.mrf.mxu0
        %v1494 = vadd.f32 0.0, %v1493
        %v1495 = vpop.f32.mrf.mxu0
        %v1496 = vadd.f32 0.0, %v1495
        %v1497 = vpop.f32.mrf.mxu0
        %v1498 = vadd.f32 0.0, %v1497
        %1499 = vmatprep.mubr.bf16.mxu0 %v851
        %1500 = vmatmul.mubr.bf16.gmra.mxu0 %v850
        %v1501 = vpop.f32.mrf.mxu0
        %v1502 = vadd.f32 0.0, %v1501
        %v1503 = vpop.f32.mrf.mxu0
        %v1504 = vadd.f32 0.0, %v1503
        %v1505 = vpop.f32.mrf.mxu0
        %v1506 = vadd.f32 0.0, %v1505
        %v1507 = vpop.f32.mrf.mxu0
        %v1508 = vadd.f32 0.0, %v1507
        %1509 = vmatprep.mubr.bf16.mxu0 %v853
        %1510 = vmatmul.mubr.bf16.gmra.mxu0 %v852
        %v1511 = vpop.f32.mrf.mxu0
        %v1512 = vadd.f32 0.0, %v1511
        %v1513 = vpop.f32.mrf.mxu0
        %v1514 = vadd.f32 0.0, %v1513
        %v1515 = vpop.f32.mrf.mxu0
        %v1516 = vadd.f32 0.0, %v1515
        %v1517 = vpop.f32.mrf.mxu0
        %v1518 = vadd.f32 0.0, %v1517
        %1519 = vmatprep.mubr.bf16.mxu0 %v855
        %1520 = vmatmul.mubr.bf16.gmra.mxu0 %v854
        %v1521 = vpop.f32.mrf.mxu0
        %v1522 = vadd.f32 0.0, %v1521
        %v1523 = vpop.f32.mrf.mxu0
        %v1524 = vadd.f32 0.0, %v1523
        %v1525 = vpop.f32.mrf.mxu0
        %v1526 = vadd.f32 0.0, %v1525
        %v1527 = vpop.f32.mrf.mxu0
        %v1528 = vadd.f32 0.0, %v1527
        %1529 = vmatprep.mubr.bf16.mxu0 %v857
        %1530 = vmatmul.mubr.bf16.gmra.mxu0 %v856
        %v1531 = vpop.f32.mrf.mxu0
        %v1532 = vadd.f32 0.0, %v1531
        %v1533 = vpop.f32.mrf.mxu0
        %v1534 = vadd.f32 0.0, %v1533
        %v1535 = vpop.f32.mrf.mxu0
        %v1536 = vadd.f32 0.0, %v1535
        %v1537 = vpop.f32.mrf.mxu0
        %v1538 = vadd.f32 0.0, %v1537
        %1539 = vmatprep.mubr.bf16.mxu0 %v859
        %1540 = vmatmul.mubr.bf16.gmra.mxu0 %v858
        %v1541 = vpop.f32.mrf.mxu0
        %v1542 = vadd.f32 0.0, %v1541
        %v1543 = vpop.f32.mrf.mxu0
        %v1544 = vadd.f32 0.0, %v1543
        %v1545 = vpop.f32.mrf.mxu0
        %v1546 = vadd.f32 0.0, %v1545
        %v1547 = vpop.f32.mrf.mxu0
        %v1548 = vadd.f32 0.0, %v1547
        %1549 = vmatprep.mubr.bf16.mxu0 %v861
        %1550 = vmatmul.mubr.bf16.gmra.mxu0 %v860
        %v1551 = vpop.f32.mrf.mxu0
        %v1552 = vadd.f32 0.0, %v1551
        %v1553 = vpop.f32.mrf.mxu0
        %v1554 = vadd.f32 0.0, %v1553
        %v1555 = vpop.f32.mrf.mxu0
        %v1556 = vadd.f32 0.0, %v1555
        %v1557 = vpop.f32.mrf.mxu0
        %v1558 = vadd.f32 0.0, %v1557
        %1559 = vmatprep.mubr.bf16.mxu0 %v863
        %1560 = vmatmul.mubr.bf16.gmra.mxu0 %v862
        %v1561 = vpop.f32.mrf.mxu0
        %v1562 = vadd.f32 0.0, %v1561
        %v1563 = vpop.f32.mrf.mxu0
        %v1564 = vadd.f32 0.0, %v1563
        %v1565 = vpop.f32.mrf.mxu0
        %v1566 = vadd.f32 0.0, %v1565
        %v1567 = vpop.f32.mrf.mxu0
        %v1568 = vadd.f32 0.0, %v1567
        %1569 = vmatprep.mubr.bf16.mxu0 %v865
        %1570 = vmatmul.mubr.bf16.gmra.mxu0 %v864
        %v1571 = vpop.f32.mrf.mxu0
        %v1572 = vadd.f32 0.0, %v1571
        %v1573 = vpop.f32.mrf.mxu0
        %v1574 = vadd.f32 0.0, %v1573
        %v1575 = vpop.f32.mrf.mxu0
        %v1576 = vadd.f32 0.0, %v1575
        %v1577 = vpop.f32.mrf.mxu0
        %v1578 = vadd.f32 0.0, %v1577
        %1579 = vmatprep.mubr.bf16.mxu0 %v867
        %1580 = vmatmul.mubr.bf16.gmra.mxu0 %v866
        %v1581 = vpop.f32.mrf.mxu0
        %v1582 = vadd.f32 0.0, %v1581
        %v1583 = vpop.f32.mrf.mxu0
        %v1584 = vadd.f32 0.0, %v1583
        %v1585 = vpop.f32.mrf.mxu0
        %v1586 = vadd.f32 0.0, %v1585
        %v1587 = vpop.f32.mrf.mxu0
        %v1588 = vadd.f32 0.0, %v1587
        %1589 = vmatprep.mubr.bf16.mxu0 %v869
        %1590 = vmatmul.mubr.bf16.gmra.mxu0 %v868
        %v1591 = vpop.f32.mrf.mxu0
        %v1592 = vadd.f32 0.0, %v1591
        %v1593 = vpop.f32.mrf.mxu0
        %v1594 = vadd.f32 0.0, %v1593
        %v1595 = vpop.f32.mrf.mxu0
        %v1596 = vadd.f32 0.0, %v1595
        %v1597 = vpop.f32.mrf.mxu0
        %v1598 = vadd.f32 0.0, %v1597
        %1599 = vmatprep.mubr.bf16.mxu0 %v871
        %1600 = vmatmul.mubr.bf16.gmra.mxu0 %v870
        %v1601 = vpop.f32.mrf.mxu0
        %v1602 = vadd.f32 0.0, %v1601
        %v1603 = vpop.f32.mrf.mxu0
        %v1604 = vadd.f32 0.0, %v1603
        %v1605 = vpop.f32.mrf.mxu0
        %v1606 = vadd.f32 0.0, %v1605
        %v1607 = vpop.f32.mrf.mxu0
        %v1608 = vadd.f32 0.0, %v1607
        %1609 = vmatprep.mubr.bf16.mxu0 %v873
        %1610 = vmatmul.mubr.bf16.gmra.mxu0 %v872
        %v1611 = vpop.f32.mrf.mxu0
        %v1612 = vadd.f32 0.0, %v1611
        %v1613 = vpop.f32.mrf.mxu0
        %v1614 = vadd.f32 0.0, %v1613
        %v1615 = vpop.f32.mrf.mxu0
        %v1616 = vadd.f32 0.0, %v1615
        %v1617 = vpop.f32.mrf.mxu0
        %v1618 = vadd.f32 0.0, %v1617
        %1619 = vmatprep.mubr.bf16.mxu0 %v875
        %1620 = vmatmul.mubr.bf16.gmra.mxu0 %v874
        %v1621 = vpop.f32.mrf.mxu0
        %v1622 = vadd.f32 0.0, %v1621
        %v1623 = vpop.f32.mrf.mxu0
        %v1624 = vadd.f32 0.0, %v1623
        %v1625 = vpop.f32.mrf.mxu0
        %v1626 = vadd.f32 0.0, %v1625
        %v1627 = vpop.f32.mrf.mxu0
        %v1628 = vadd.f32 0.0, %v1627
        %1629 = vmatprep.mubr.bf16.mxu0 %v877
        %1630 = vmatmul.mubr.bf16.gmra.mxu0 %v876
        %v1631 = vpop.f32.mrf.mxu0
        %v1632 = vadd.f32 0.0, %v1631
        %v1633 = vpop.f32.mrf.mxu0
        %v1634 = vadd.f32 0.0, %v1633
        %v1635 = vpop.f32.mrf.mxu0
        %v1636 = vadd.f32 0.0, %v1635
        %v1637 = vpop.f32.mrf.mxu0
        %v1638 = vadd.f32 0.0, %v1637
        %1639 = vmatprep.mubr.bf16.mxu0 %v879
        %1640 = vmatmul.mubr.bf16.gmra.mxu0 %v878
        %v1641 = vpop.f32.mrf.mxu0
        %v1642 = vadd.f32 0.0, %v1641
        %v1643 = vpop.f32.mrf.mxu0
        %v1644 = vadd.f32 0.0, %v1643
        %v1645 = vpop.f32.mrf.mxu0
        %v1646 = vadd.f32 0.0, %v1645
        %v1647 = vpop.f32.mrf.mxu0
        %v1648 = vadd.f32 0.0, %v1647
        %1649 = vdwg.mxu0
        %v1650 = vpack.c.bf16 %v1303, %v1299
        %v1651 = vpack.c.bf16 %v1305, %v1301
        %v1652 = vpack.c.bf16 %v1496, %v1492
        %v1653 = vpack.c.bf16 %v1498, %v1494
        %v1654 = vpack.c.bf16 %v1313, %v1309
        %v1655 = vpack.c.bf16 %v1315, %v1311
        %v1656 = vpack.c.bf16 %v1506, %v1502
        %v1657 = vpack.c.bf16 %v1508, %v1504
        %v1658 = vpack.c.bf16 %v1323, %v1319
        %v1659 = vpack.c.bf16 %v1325, %v1321
        %v1660 = vpack.c.bf16 %v1516, %v1512
        %v1661 = vpack.c.bf16 %v1518, %v1514
        %v1662 = vpack.c.bf16 %v1333, %v1329
        %v1663 = vpack.c.bf16 %v1335, %v1331
        %v1664 = vpack.c.bf16 %v1526, %v1522
        %v1665 = vpack.c.bf16 %v1528, %v1524
        %v1666 = vpack.c.bf16 %v1343, %v1339
        %v1667 = vpack.c.bf16 %v1345, %v1341
        %v1668 = vpack.c.bf16 %v1536, %v1532
        %v1669 = vpack.c.bf16 %v1538, %v1534
        %v1670 = vpack.c.bf16 %v1353, %v1349
        %v1671 = vpack.c.bf16 %v1355, %v1351
        %v1672 = vpack.c.bf16 %v1546, %v1542
        %v1673 = vpack.c.bf16 %v1548, %v1544
        %v1674 = vpack.c.bf16 %v1363, %v1359
        %v1675 = vpack.c.bf16 %v1365, %v1361
        %v1676 = vpack.c.bf16 %v1556, %v1552
        %v1677 = vpack.c.bf16 %v1558, %v1554
        %v1678 = vpack.c.bf16 %v1373, %v1369
        %v1679 = vpack.c.bf16 %v1375, %v1371
        %v1680 = vpack.c.bf16 %v1566, %v1562
        %v1681 = vpack.c.bf16 %v1568, %v1564
        %v1682 = vpack.c.bf16 %v1383, %v1379
        %v1683 = vpack.c.bf16 %v1385, %v1381
        %v1684 = vpack.c.bf16 %v1576, %v1572
        %v1685 = vpack.c.bf16 %v1578, %v1574
        %v1686 = vpack.c.bf16 %v1393, %v1389
        %v1687 = vpack.c.bf16 %v1395, %v1391
        %v1688 = vpack.c.bf16 %v1586, %v1582
        %v1689 = vpack.c.bf16 %v1588, %v1584
        %v1690 = vpack.c.bf16 %v1403, %v1399
        %v1691 = vpack.c.bf16 %v1405, %v1401
        %v1692 = vpack.c.bf16 %v1596, %v1592
        %v1693 = vpack.c.bf16 %v1598, %v1594
        %v1694 = vpack.c.bf16 %v1413, %v1409
        %v1695 = vpack.c.bf16 %v1415, %v1411
        %v1696 = vpack.c.bf16 %v1606, %v1602
        %v1697 = vpack.c.bf16 %v1608, %v1604
        %v1698 = vpack.c.bf16 %v1423, %v1419
        %v1699 = vpack.c.bf16 %v1425, %v1421
        %v1700 = vpack.c.bf16 %v1616, %v1612
        %v1701 = vpack.c.bf16 %v1618, %v1614
        %v1702 = vpack.c.bf16 %v1433, %v1429
        %v1703 = vpack.c.bf16 %v1435, %v1431
        %v1704 = vpack.c.bf16 %v1626, %v1622
        %v1705 = vpack.c.bf16 %v1628, %v1624
        %v1706 = vpack.c.bf16 %v1443, %v1439
        %v1707 = vpack.c.bf16 %v1445, %v1441
        %v1708 = vpack.c.bf16 %v1636, %v1632
        %v1709 = vpack.c.bf16 %v1638, %v1634
        %v1710 = vpack.c.bf16 %v1453, %v1449
        %v1711 = vpack.c.bf16 %v1455, %v1451
        %v1712 = vpack.c.bf16 %v1646, %v1642
        %v1713 = vpack.c.bf16 %v1648, %v1644
        %v1714 = vld [vmem:[%s5] sm:$0xf]
        %v1716 = vlaneseq
        %v1717 = vshrl.u32 %v1716, 7
        %v1718 = vsub.s32 0, %v1717
        %v1719 = vrot.slane %v1714, %v1718
        %v1720 = vlaneseq
        %v1721 = vshrl.u32 %v1720, 7
        %v1722 = vsub.s32 1, %v1721
        %v1723 = vrot.slane %v1714, %v1722
        %v1724 = vlaneseq
        %v1725 = vshrl.u32 %v1724, 7
        %v1726 = vsub.s32 2, %v1725
        %v1727 = vrot.slane %v1714, %v1726
        %v1728 = vlaneseq
        %v1729 = vshrl.u32 %v1728, 7
        %v1730 = vsub.s32 3, %v1729
        %v1731 = vrot.slane %v1714, %v1730
        %v1736 = vpack.c.bf16 %v1719, %v1719
        %v1737 = vpack.c.bf16 %v1723, %v1723
        %v1738 = vpack.c.bf16 %v1727, %v1727
        %v1739 = vpack.c.bf16 %v1731, %v1731
        %v1741 = vpack.i.b16 %v1736, %v1736
        %v1743 = vlaneseq
        %v1744 = vshrl.u32 %v1743, 7
        %v1745 = vsub.s32 0, %v1744
        %v1746 = vrot.slane %v1741, %v1745
        %v1748 = vpack.i.b16 %v1737, %v1737
        %v1750 = vlaneseq
        %v1751 = vshrl.u32 %v1750, 7
        %v1752 = vsub.s32 0, %v1751
        %v1753 = vrot.slane %v1748, %v1752
        %v1755 = vpack.i.b16 %v1738, %v1738
        %v1757 = vlaneseq
        %v1758 = vshrl.u32 %v1757, 7
        %v1759 = vsub.s32 0, %v1758
        %v1760 = vrot.slane %v1755, %v1759
        %v1762 = vpack.i.b16 %v1739, %v1739
        %v1764 = vlaneseq
        %v1765 = vshrl.u32 %v1764, 7
        %v1766 = vsub.s32 0, %v1765
        %v1767 = vrot.slane %v1762, %v1766
        %v1768 = vadd.bf16 %v1650, %v1746
        %v1769 = vadd.bf16 %v1651, %v1753
        %v1770 = vadd.bf16 %v1652, %v1760
        %v1771 = vadd.bf16 %v1653, %v1767
        %v1772 = vadd.bf16 %v1654, %v1746
        %v1773 = vadd.bf16 %v1655, %v1753
        %v1774 = vadd.bf16 %v1656, %v1760
        %v1775 = vadd.bf16 %v1657, %v1767
        %v1776 = vadd.bf16 %v1658, %v1746
        %v1777 = vadd.bf16 %v1659, %v1753
        %v1778 = vadd.bf16 %v1660, %v1760
        %v1779 = vadd.bf16 %v1661, %v1767
        %v1780 = vadd.bf16 %v1662, %v1746
        %v1781 = vadd.bf16 %v1663, %v1753
        %v1782 = vadd.bf16 %v1664, %v1760
        %v1783 = vadd.bf16 %v1665, %v1767
        %v1784 = vadd.bf16 %v1666, %v1746
        %v1785 = vadd.bf16 %v1667, %v1753
        %v1786 = vadd.bf16 %v1668, %v1760
        %v1787 = vadd.bf16 %v1669, %v1767
        %v1788 = vadd.bf16 %v1670, %v1746
        %v1789 = vadd.bf16 %v1671, %v1753
        %v1790 = vadd.bf16 %v1672, %v1760
        %v1791 = vadd.bf16 %v1673, %v1767
        %v1792 = vadd.bf16 %v1674, %v1746
        %v1793 = vadd.bf16 %v1675, %v1753
        %v1794 = vadd.bf16 %v1676, %v1760
        %v1795 = vadd.bf16 %v1677, %v1767
        %v1796 = vadd.bf16 %v1678, %v1746
        %v1797 = vadd.bf16 %v1679, %v1753
        %v1798 = vadd.bf16 %v1680, %v1760
        %v1799 = vadd.bf16 %v1681, %v1767
        %v1800 = vadd.bf16 %v1682, %v1746
        %v1801 = vadd.bf16 %v1683, %v1753
        %v1802 = vadd.bf16 %v1684, %v1760
        %v1803 = vadd.bf16 %v1685, %v1767
        %v1804 = vadd.bf16 %v1686, %v1746
        %v1805 = vadd.bf16 %v1687, %v1753
        %v1806 = vadd.bf16 %v1688, %v1760
        %v1807 = vadd.bf16 %v1689, %v1767
        %v1808 = vadd.bf16 %v1690, %v1746
        %v1809 = vadd.bf16 %v1691, %v1753
        %v1810 = vadd.bf16 %v1692, %v1760
        %v1811 = vadd.bf16 %v1693, %v1767
        %v1812 = vadd.bf16 %v1694, %v1746
        %v1813 = vadd.bf16 %v1695, %v1753
        %v1814 = vadd.bf16 %v1696, %v1760
        %v1815 = vadd.bf16 %v1697, %v1767
        %v1816 = vadd.bf16 %v1698, %v1746
        %v1817 = vadd.bf16 %v1699, %v1753
        %v1818 = vadd.bf16 %v1700, %v1760
        %v1819 = vadd.bf16 %v1701, %v1767
        %v1820 = vadd.bf16 %v1702, %v1746
        %v1821 = vadd.bf16 %v1703, %v1753
        %v1822 = vadd.bf16 %v1704, %v1760
        %v1823 = vadd.bf16 %v1705, %v1767
        %v1824 = vadd.bf16 %v1706, %v1746
        %v1825 = vadd.bf16 %v1707, %v1753
        %v1826 = vadd.bf16 %v1708, %v1760
        %v1827 = vadd.bf16 %v1709, %v1767
        %v1828 = vadd.bf16 %v1710, %v1746
        %v1829 = vadd.bf16 %v1711, %v1753
        %v1830 = vadd.bf16 %v1712, %v1760
        %v1831 = vadd.bf16 %v1713, %v1767
        %v1832 = vmul.bf16 %v1768, %v1768
        %v1833 = vmul.bf16 %v1769, %v1769
        %v1834 = vmul.bf16 %v1770, %v1770
        %v1835 = vmul.bf16 %v1771, %v1771
        %v1836 = vmul.bf16 %v1772, %v1772
        %v1837 = vmul.bf16 %v1773, %v1773
        %v1838 = vmul.bf16 %v1774, %v1774
        %v1839 = vmul.bf16 %v1775, %v1775
        %v1840 = vmul.bf16 %v1776, %v1776
        %v1841 = vmul.bf16 %v1777, %v1777
        %v1842 = vmul.bf16 %v1778, %v1778
        %v1843 = vmul.bf16 %v1779, %v1779
        %v1844 = vmul.bf16 %v1780, %v1780
        %v1845 = vmul.bf16 %v1781, %v1781
        %v1846 = vmul.bf16 %v1782, %v1782
        %v1847 = vmul.bf16 %v1783, %v1783
        %v1848 = vmul.bf16 %v1784, %v1784
        %v1849 = vmul.bf16 %v1785, %v1785
        %v1850 = vmul.bf16 %v1786, %v1786
        %v1851 = vmul.bf16 %v1787, %v1787
        %v1852 = vmul.bf16 %v1788, %v1788
        %v1853 = vmul.bf16 %v1789, %v1789
        %v1854 = vmul.bf16 %v1790, %v1790
        %v1855 = vmul.bf16 %v1791, %v1791
        %v1856 = vmul.bf16 %v1792, %v1792
        %v1857 = vmul.bf16 %v1793, %v1793
        %v1858 = vmul.bf16 %v1794, %v1794
        %v1859 = vmul.bf16 %v1795, %v1795
        %v1860 = vmul.bf16 %v1796, %v1796
        %v1861 = vmul.bf16 %v1797, %v1797
        %v1862 = vmul.bf16 %v1798, %v1798
        %v1863 = vmul.bf16 %v1799, %v1799
        %v1864 = vmul.bf16 %v1800, %v1800
        %v1865 = vmul.bf16 %v1801, %v1801
        %v1866 = vmul.bf16 %v1802, %v1802
        %v1867 = vmul.bf16 %v1803, %v1803
        %v1868 = vmul.bf16 %v1804, %v1804
        %v1869 = vmul.bf16 %v1805, %v1805
        %v1870 = vmul.bf16 %v1806, %v1806
        %v1871 = vmul.bf16 %v1807, %v1807
        %v1872 = vmul.bf16 %v1808, %v1808
        %v1873 = vmul.bf16 %v1809, %v1809
        %v1874 = vmul.bf16 %v1810, %v1810
        %v1875 = vmul.bf16 %v1811, %v1811
        %v1876 = vmul.bf16 %v1812, %v1812
        %v1877 = vmul.bf16 %v1813, %v1813
        %v1878 = vmul.bf16 %v1814, %v1814
        %v1879 = vmul.bf16 %v1815, %v1815
        %v1880 = vmul.bf16 %v1816, %v1816
        %v1881 = vmul.bf16 %v1817, %v1817
        %v1882 = vmul.bf16 %v1818, %v1818
        %v1883 = vmul.bf16 %v1819, %v1819
        %v1884 = vmul.bf16 %v1820, %v1820
        %v1885 = vmul.bf16 %v1821, %v1821
        %v1886 = vmul.bf16 %v1822, %v1822
        %v1887 = vmul.bf16 %v1823, %v1823
        %v1888 = vmul.bf16 %v1824, %v1824
        %v1889 = vmul.bf16 %v1825, %v1825
        %v1890 = vmul.bf16 %v1826, %v1826
        %v1891 = vmul.bf16 %v1827, %v1827
        %v1892 = vmul.bf16 %v1828, %v1828
        %v1893 = vmul.bf16 %v1829, %v1829
        %v1894 = vmul.bf16 %v1830, %v1830
        %v1895 = vmul.bf16 %v1831, %v1831
        %v1896 = vmul.bf16 %v1768, %v1832
        %v1897 = vmul.bf16 %v1769, %v1833
        %v1898 = vmul.bf16 %v1770, %v1834
        %v1899 = vmul.bf16 %v1771, %v1835
        %v1900 = vmul.bf16 %v1772, %v1836
        %v1901 = vmul.bf16 %v1773, %v1837
        %v1902 = vmul.bf16 %v1774, %v1838
        %v1903 = vmul.bf16 %v1775, %v1839
        %v1904 = vmul.bf16 %v1776, %v1840
        %v1905 = vmul.bf16 %v1777, %v1841
        %v1906 = vmul.bf16 %v1778, %v1842
        %v1907 = vmul.bf16 %v1779, %v1843
        %v1908 = vmul.bf16 %v1780, %v1844
        %v1909 = vmul.bf16 %v1781, %v1845
        %v1910 = vmul.bf16 %v1782, %v1846
        %v1911 = vmul.bf16 %v1783, %v1847
        %v1912 = vmul.bf16 %v1784, %v1848
        %v1913 = vmul.bf16 %v1785, %v1849
        %v1914 = vmul.bf16 %v1786, %v1850
        %v1915 = vmul.bf16 %v1787, %v1851
        %v1916 = vmul.bf16 %v1788, %v1852
        %v1917 = vmul.bf16 %v1789, %v1853
        %v1918 = vmul.bf16 %v1790, %v1854
        %v1919 = vmul.bf16 %v1791, %v1855
        %v1920 = vmul.bf16 %v1792, %v1856
        %v1921 = vmul.bf16 %v1793, %v1857
        %v1922 = vmul.bf16 %v1794, %v1858
        %v1923 = vmul.bf16 %v1795, %v1859
        %v1924 = vmul.bf16 %v1796, %v1860
        %v1925 = vmul.bf16 %v1797, %v1861
        %v1926 = vmul.bf16 %v1798, %v1862
        %v1927 = vmul.bf16 %v1799, %v1863
        %v1928 = vmul.bf16 %v1800, %v1864
        %v1929 = vmul.bf16 %v1801, %v1865
        %v1930 = vmul.bf16 %v1802, %v1866
        %v1931 = vmul.bf16 %v1803, %v1867
        %v1932 = vmul.bf16 %v1804, %v1868
        %v1933 = vmul.bf16 %v1805, %v1869
        %v1934 = vmul.bf16 %v1806, %v1870
        %v1935 = vmul.bf16 %v1807, %v1871
        %v1936 = vmul.bf16 %v1808, %v1872
        %v1937 = vmul.bf16 %v1809, %v1873
        %v1938 = vmul.bf16 %v1810, %v1874
        %v1939 = vmul.bf16 %v1811, %v1875
        %v1940 = vmul.bf16 %v1812, %v1876
        %v1941 = vmul.bf16 %v1813, %v1877
        %v1942 = vmul.bf16 %v1814, %v1878
        %v1943 = vmul.bf16 %v1815, %v1879
        %v1944 = vmul.bf16 %v1816, %v1880
        %v1945 = vmul.bf16 %v1817, %v1881
        %v1946 = vmul.bf16 %v1818, %v1882
        %v1947 = vmul.bf16 %v1819, %v1883
        %v1948 = vmul.bf16 %v1820, %v1884
        %v1949 = vmul.bf16 %v1821, %v1885
        %v1950 = vmul.bf16 %v1822, %v1886
        %v1951 = vmul.bf16 %v1823, %v1887
        %v1952 = vmul.bf16 %v1824, %v1888
        %v1953 = vmul.bf16 %v1825, %v1889
        %v1954 = vmul.bf16 %v1826, %v1890
        %v1955 = vmul.bf16 %v1827, %v1891
        %v1956 = vmul.bf16 %v1828, %v1892
        %v1957 = vmul.bf16 %v1829, %v1893
        %v1958 = vmul.bf16 %v1830, %v1894
        %v1959 = vmul.bf16 %v1831, %v1895
        %v1960 = vmul.bf16 %v1896, 1027030327
        %v1961 = vmul.bf16 %v1897, 1027030327
        %v1962 = vmul.bf16 %v1898, 1027030327
        %v1963 = vmul.bf16 %v1899, 1027030327
        %v1964 = vmul.bf16 %v1900, 1027030327
        %v1965 = vmul.bf16 %v1901, 1027030327
        %v1966 = vmul.bf16 %v1902, 1027030327
        %v1967 = vmul.bf16 %v1903, 1027030327
        %v1968 = vmul.bf16 %v1904, 1027030327
        %v1969 = vmul.bf16 %v1905, 1027030327
        %v1970 = vmul.bf16 %v1906, 1027030327
        %v1971 = vmul.bf16 %v1907, 1027030327
        %v1972 = vmul.bf16 %v1908, 1027030327
        %v1973 = vmul.bf16 %v1909, 1027030327
        %v1974 = vmul.bf16 %v1910, 1027030327
        %v1975 = vmul.bf16 %v1911, 1027030327
        %v1976 = vmul.bf16 %v1912, 1027030327
        %v1977 = vmul.bf16 %v1913, 1027030327
        %v1978 = vmul.bf16 %v1914, 1027030327
        %v1979 = vmul.bf16 %v1915, 1027030327
        %v1980 = vmul.bf16 %v1916, 1027030327
        %v1981 = vmul.bf16 %v1917, 1027030327
        %v1982 = vmul.bf16 %v1918, 1027030327
        %v1983 = vmul.bf16 %v1919, 1027030327
        %v1984 = vmul.bf16 %v1920, 1027030327
        %v1985 = vmul.bf16 %v1921, 1027030327
        %v1986 = vmul.bf16 %v1922, 1027030327
        %v1987 = vmul.bf16 %v1923, 1027030327
        %v1988 = vmul.bf16 %v1924, 1027030327
        %v1989 = vmul.bf16 %v1925, 1027030327
        %v1990 = vmul.bf16 %v1926, 1027030327
        %v1991 = vmul.bf16 %v1927, 1027030327
        %v1992 = vmul.bf16 %v1928, 1027030327
        %v1993 = vmul.bf16 %v1929, 1027030327
        %v1994 = vmul.bf16 %v1930, 1027030327
        %v1995 = vmul.bf16 %v1931, 1027030327
        %v1996 = vmul.bf16 %v1932, 1027030327
        %v1997 = vmul.bf16 %v1933, 1027030327
        %v1998 = vmul.bf16 %v1934, 1027030327
        %v1999 = vmul.bf16 %v1935, 1027030327
        %v2000 = vmul.bf16 %v1936, 1027030327
        %v2001 = vmul.bf16 %v1937, 1027030327
        %v2002 = vmul.bf16 %v1938, 1027030327
        %v2003 = vmul.bf16 %v1939, 1027030327
        %v2004 = vmul.bf16 %v1940, 1027030327
        %v2005 = vmul.bf16 %v1941, 1027030327
        %v2006 = vmul.bf16 %v1942, 1027030327
        %v2007 = vmul.bf16 %v1943, 1027030327
        %v2008 = vmul.bf16 %v1944, 1027030327
        %v2009 = vmul.bf16 %v1945, 1027030327
        %v2010 = vmul.bf16 %v1946, 1027030327
        %v2011 = vmul.bf16 %v1947, 1027030327
        %v2012 = vmul.bf16 %v1948, 1027030327
        %v2013 = vmul.bf16 %v1949, 1027030327
        %v2014 = vmul.bf16 %v1950, 1027030327
        %v2015 = vmul.bf16 %v1951, 1027030327
        %v2016 = vmul.bf16 %v1952, 1027030327
        %v2017 = vmul.bf16 %v1953, 1027030327
        %v2018 = vmul.bf16 %v1954, 1027030327
        %v2019 = vmul.bf16 %v1955, 1027030327
        %v2020 = vmul.bf16 %v1956, 1027030327
        %v2021 = vmul.bf16 %v1957, 1027030327
        %v2022 = vmul.bf16 %v1958, 1027030327
        %v2023 = vmul.bf16 %v1959, 1027030327
        %v2024 = vadd.bf16 %v1768, %v1960
        %v2025 = vadd.bf16 %v1769, %v1961
        %v2026 = vadd.bf16 %v1770, %v1962
        %v2027 = vadd.bf16 %v1771, %v1963
        %v2028 = vadd.bf16 %v1772, %v1964
        %v2029 = vadd.bf16 %v1773, %v1965
        %v2030 = vadd.bf16 %v1774, %v1966
        %v2031 = vadd.bf16 %v1775, %v1967
        %v2032 = vadd.bf16 %v1776, %v1968
        %v2033 = vadd.bf16 %v1777, %v1969
        %v2034 = vadd.bf16 %v1778, %v1970
        %v2035 = vadd.bf16 %v1779, %v1971
        %v2036 = vadd.bf16 %v1780, %v1972
        %v2037 = vadd.bf16 %v1781, %v1973
        %v2038 = vadd.bf16 %v1782, %v1974
        %v2039 = vadd.bf16 %v1783, %v1975
        %v2040 = vadd.bf16 %v1784, %v1976
        %v2041 = vadd.bf16 %v1785, %v1977
        %v2042 = vadd.bf16 %v1786, %v1978
        %v2043 = vadd.bf16 %v1787, %v1979
        %v2044 = vadd.bf16 %v1788, %v1980
        %v2045 = vadd.bf16 %v1789, %v1981
        %v2046 = vadd.bf16 %v1790, %v1982
        %v2047 = vadd.bf16 %v1791, %v1983
        %v2048 = vadd.bf16 %v1792, %v1984
        %v2049 = vadd.bf16 %v1793, %v1985
        %v2050 = vadd.bf16 %v1794, %v1986
        %v2051 = vadd.bf16 %v1795, %v1987
        %v2052 = vadd.bf16 %v1796, %v1988
        %v2053 = vadd.bf16 %v1797, %v1989
        %v2054 = vadd.bf16 %v1798, %v1990
        %v2055 = vadd.bf16 %v1799, %v1991
        %v2056 = vadd.bf16 %v1800, %v1992
        %v2057 = vadd.bf16 %v1801, %v1993
        %v2058 = vadd.bf16 %v1802, %v1994
        %v2059 = vadd.bf16 %v1803, %v1995
        %v2060 = vadd.bf16 %v1804, %v1996
        %v2061 = vadd.bf16 %v1805, %v1997
        %v2062 = vadd.bf16 %v1806, %v1998
        %v2063 = vadd.bf16 %v1807, %v1999
        %v2064 = vadd.bf16 %v1808, %v2000
        %v2065 = vadd.bf16 %v1809, %v2001
        %v2066 = vadd.bf16 %v1810, %v2002
        %v2067 = vadd.bf16 %v1811, %v2003
        %v2068 = vadd.bf16 %v1812, %v2004
        %v2069 = vadd.bf16 %v1813, %v2005
        %v2070 = vadd.bf16 %v1814, %v2006
        %v2071 = vadd.bf16 %v1815, %v2007
        %v2072 = vadd.bf16 %v1816, %v2008
        %v2073 = vadd.bf16 %v1817, %v2009
        %v2074 = vadd.bf16 %v1818, %v2010
        %v2075 = vadd.bf16 %v1819, %v2011
        %v2076 = vadd.bf16 %v1820, %v2012
        %v2077 = vadd.bf16 %v1821, %v2013
        %v2078 = vadd.bf16 %v1822, %v2014
        %v2079 = vadd.bf16 %v1823, %v2015
        %v2080 = vadd.bf16 %v1824, %v2016
        %v2081 = vadd.bf16 %v1825, %v2017
        %v2082 = vadd.bf16 %v1826, %v2018
        %v2083 = vadd.bf16 %v1827, %v2019
        %v2084 = vadd.bf16 %v1828, %v2020
        %v2085 = vadd.bf16 %v1829, %v2021
        %v2086 = vadd.bf16 %v1830, %v2022
        %v2087 = vadd.bf16 %v1831, %v2023
        %v2088 = vmul.bf16 %v2024, 1061961548
        %v2089 = vmul.bf16 %v2025, 1061961548
        %v2090 = vmul.bf16 %v2026, 1061961548
        %v2091 = vmul.bf16 %v2027, 1061961548
        %v2092 = vmul.bf16 %v2028, 1061961548
        %v2093 = vmul.bf16 %v2029, 1061961548
        %v2094 = vmul.bf16 %v2030, 1061961548
        %v2095 = vmul.bf16 %v2031, 1061961548
        %v2096 = vmul.bf16 %v2032, 1061961548
        %v2097 = vmul.bf16 %v2033, 1061961548
        %v2098 = vmul.bf16 %v2034, 1061961548
        %v2099 = vmul.bf16 %v2035, 1061961548
        %v2100 = vmul.bf16 %v2036, 1061961548
        %v2101 = vmul.bf16 %v2037, 1061961548
        %v2102 = vmul.bf16 %v2038, 1061961548
        %v2103 = vmul.bf16 %v2039, 1061961548
        %v2104 = vmul.bf16 %v2040, 1061961548
        %v2105 = vmul.bf16 %v2041, 1061961548
        %v2106 = vmul.bf16 %v2042, 1061961548
        %v2107 = vmul.bf16 %v2043, 1061961548
        %v2108 = vmul.bf16 %v2044, 1061961548
        %v2109 = vmul.bf16 %v2045, 1061961548
        %v2110 = vmul.bf16 %v2046, 1061961548
        %v2111 = vmul.bf16 %v2047, 1061961548
        %v2112 = vmul.bf16 %v2048, 1061961548
        %v2113 = vmul.bf16 %v2049, 1061961548
        %v2114 = vmul.bf16 %v2050, 1061961548
        %v2115 = vmul.bf16 %v2051, 1061961548
        %v2116 = vmul.bf16 %v2052, 1061961548
        %v2117 = vmul.bf16 %v2053, 1061961548
        %v2118 = vmul.bf16 %v2054, 1061961548
        %v2119 = vmul.bf16 %v2055, 1061961548
        %v2120 = vmul.bf16 %v2056, 1061961548
        %v2121 = vmul.bf16 %v2057, 1061961548
        %v2122 = vmul.bf16 %v2058, 1061961548
        %v2123 = vmul.bf16 %v2059, 1061961548
        %v2124 = vmul.bf16 %v2060, 1061961548
        %v2125 = vmul.bf16 %v2061, 1061961548
        %v2126 = vmul.bf16 %v2062, 1061961548
        %v2127 = vmul.bf16 %v2063, 1061961548
        %v2128 = vmul.bf16 %v2064, 1061961548
        %v2129 = vmul.bf16 %v2065, 1061961548
        %v2130 = vmul.bf16 %v2066, 1061961548
        %v2131 = vmul.bf16 %v2067, 1061961548
        %v2132 = vmul.bf16 %v2068, 1061961548
        %v2133 = vmul.bf16 %v2069, 1061961548
        %v2134 = vmul.bf16 %v2070, 1061961548
        %v2135 = vmul.bf16 %v2071, 1061961548
        %v2136 = vmul.bf16 %v2072, 1061961548
        %v2137 = vmul.bf16 %v2073, 1061961548
        %v2138 = vmul.bf16 %v2074, 1061961548
        %v2139 = vmul.bf16 %v2075, 1061961548
        %v2140 = vmul.bf16 %v2076, 1061961548
        %v2141 = vmul.bf16 %v2077, 1061961548
        %v2142 = vmul.bf16 %v2078, 1061961548
        %v2143 = vmul.bf16 %v2079, 1061961548
        %v2144 = vmul.bf16 %v2080, 1061961548
        %v2145 = vmul.bf16 %v2081, 1061961548
        %v2146 = vmul.bf16 %v2082, 1061961548
        %v2147 = vmul.bf16 %v2083, 1061961548
        %v2148 = vmul.bf16 %v2084, 1061961548
        %v2149 = vmul.bf16 %v2085, 1061961548
        %v2150 = vmul.bf16 %v2086, 1061961548
        %v2151 = vmul.bf16 %v2087, 1061961548
        %v2152 = vtanh.bf16.pop %v2088
        %v2153 = vtanh.bf16.pop %v2089
        %v2154 = vtanh.bf16.pop %v2090
        %v2155 = vtanh.bf16.pop %v2091
        %v2156 = vtanh.bf16.pop %v2092
        %v2157 = vtanh.bf16.pop %v2093
        %v2158 = vtanh.bf16.pop %v2094
        %v2159 = vtanh.bf16.pop %v2095
        %v2160 = vtanh.bf16.pop %v2096
        %v2161 = vtanh.bf16.pop %v2097
        %v2162 = vtanh.bf16.pop %v2098
        %v2163 = vtanh.bf16.pop %v2099
        %v2164 = vtanh.bf16.pop %v2100
        %v2165 = vtanh.bf16.pop %v2101
        %v2166 = vtanh.bf16.pop %v2102
        %v2167 = vtanh.bf16.pop %v2103
        %v2168 = vtanh.bf16.pop %v2104
        %v2169 = vtanh.bf16.pop %v2105
        %v2170 = vtanh.bf16.pop %v2106
        %v2171 = vtanh.bf16.pop %v2107
        %v2172 = vtanh.bf16.pop %v2108
        %v2173 = vtanh.bf16.pop %v2109
        %v2174 = vtanh.bf16.pop %v2110
        %v2175 = vtanh.bf16.pop %v2111
        %v2176 = vtanh.bf16.pop %v2112
        %v2177 = vtanh.bf16.pop %v2113
        %v2178 = vtanh.bf16.pop %v2114
        %v2179 = vtanh.bf16.pop %v2115
        %v2180 = vtanh.bf16.pop %v2116
        %v2181 = vtanh.bf16.pop %v2117
        %v2182 = vtanh.bf16.pop %v2118
        %v2183 = vtanh.bf16.pop %v2119
        %v2184 = vtanh.bf16.pop %v2120
        %v2185 = vtanh.bf16.pop %v2121
        %v2186 = vtanh.bf16.pop %v2122
        %v2187 = vtanh.bf16.pop %v2123
        %v2188 = vtanh.bf16.pop %v2124
        %v2189 = vtanh.bf16.pop %v2125
        %v2190 = vtanh.bf16.pop %v2126
        %v2191 = vtanh.bf16.pop %v2127
        %v2192 = vtanh.bf16.pop %v2128
        %v2193 = vtanh.bf16.pop %v2129
        %v2194 = vtanh.bf16.pop %v2130
        %v2195 = vtanh.bf16.pop %v2131
        %v2196 = vtanh.bf16.pop %v2132
        %v2197 = vtanh.bf16.pop %v2133
        %v2198 = vtanh.bf16.pop %v2134
        %v2199 = vtanh.bf16.pop %v2135
        %v2200 = vtanh.bf16.pop %v2136
        %v2201 = vtanh.bf16.pop %v2137
        %v2202 = vtanh.bf16.pop %v2138
        %v2203 = vtanh.bf16.pop %v2139
        %v2204 = vtanh.bf16.pop %v2140
        %v2205 = vtanh.bf16.pop %v2141
        %v2206 = vtanh.bf16.pop %v2142
        %v2207 = vtanh.bf16.pop %v2143
        %v2208 = vtanh.bf16.pop %v2144
        %v2209 = vtanh.bf16.pop %v2145
        %v2210 = vtanh.bf16.pop %v2146
        %v2211 = vtanh.bf16.pop %v2147
        %v2212 = vtanh.bf16.pop %v2148
        %v2213 = vtanh.bf16.pop %v2149
        %v2214 = vtanh.bf16.pop %v2150
        %v2215 = vtanh.bf16.pop %v2151
        %v2216 = vadd.bf16 %v2152, 1065369472
        %v2217 = vadd.bf16 %v2153, 1065369472
        %v2218 = vadd.bf16 %v2154, 1065369472
        %v2219 = vadd.bf16 %v2155, 1065369472
        %v2220 = vadd.bf16 %v2156, 1065369472
        %v2221 = vadd.bf16 %v2157, 1065369472
        %v2222 = vadd.bf16 %v2158, 1065369472
        %v2223 = vadd.bf16 %v2159, 1065369472
        %v2224 = vadd.bf16 %v2160, 1065369472
        %v2225 = vadd.bf16 %v2161, 1065369472
        %v2226 = vadd.bf16 %v2162, 1065369472
        %v2227 = vadd.bf16 %v2163, 1065369472
        %v2228 = vadd.bf16 %v2164, 1065369472
        %v2229 = vadd.bf16 %v2165, 1065369472
        %v2230 = vadd.bf16 %v2166, 1065369472
        %v2231 = vadd.bf16 %v2167, 1065369472
        %v2232 = vadd.bf16 %v2168, 1065369472
        %v2233 = vadd.bf16 %v2169, 1065369472
        %v2234 = vadd.bf16 %v2170, 1065369472
        %v2235 = vadd.bf16 %v2171, 1065369472
        %v2236 = vadd.bf16 %v2172, 1065369472
        %v2237 = vadd.bf16 %v2173, 1065369472
        %v2238 = vadd.bf16 %v2174, 1065369472
        %v2239 = vadd.bf16 %v2175, 1065369472
        %v2240 = vadd.bf16 %v2176, 1065369472
        %v2241 = vadd.bf16 %v2177, 1065369472
        %v2242 = vadd.bf16 %v2178, 1065369472
        %v2243 = vadd.bf16 %v2179, 1065369472
        %v2244 = vadd.bf16 %v2180, 1065369472
        %v2245 = vadd.bf16 %v2181, 1065369472
        %v2246 = vadd.bf16 %v2182, 1065369472
        %v2247 = vadd.bf16 %v2183, 1065369472
        %v2248 = vadd.bf16 %v2184, 1065369472
        %v2249 = vadd.bf16 %v2185, 1065369472
        %v2250 = vadd.bf16 %v2186, 1065369472
        %v2251 = vadd.bf16 %v2187, 1065369472
        %v2252 = vadd.bf16 %v2188, 1065369472
        %v2253 = vadd.bf16 %v2189, 1065369472
        %v2254 = vadd.bf16 %v2190, 1065369472
        %v2255 = vadd.bf16 %v2191, 1065369472
        %v2256 = vadd.bf16 %v2192, 1065369472
        %v2257 = vadd.bf16 %v2193, 1065369472
        %v2258 = vadd.bf16 %v2194, 1065369472
        %v2259 = vadd.bf16 %v2195, 1065369472
        %v2260 = vadd.bf16 %v2196, 1065369472
        %v2261 = vadd.bf16 %v2197, 1065369472
        %v2262 = vadd.bf16 %v2198, 1065369472
        %v2263 = vadd.bf16 %v2199, 1065369472
        %v2264 = vadd.bf16 %v2200, 1065369472
        %v2265 = vadd.bf16 %v2201, 1065369472
        %v2266 = vadd.bf16 %v2202, 1065369472
        %v2267 = vadd.bf16 %v2203, 1065369472
        %v2268 = vadd.bf16 %v2204, 1065369472
        %v2269 = vadd.bf16 %v2205, 1065369472
        %v2270 = vadd.bf16 %v2206, 1065369472
        %v2271 = vadd.bf16 %v2207, 1065369472
        %v2272 = vadd.bf16 %v2208, 1065369472
        %v2273 = vadd.bf16 %v2209, 1065369472
        %v2274 = vadd.bf16 %v2210, 1065369472
        %v2275 = vadd.bf16 %v2211, 1065369472
        %v2276 = vadd.bf16 %v2212, 1065369472
        %v2277 = vadd.bf16 %v2213, 1065369472
        %v2278 = vadd.bf16 %v2214, 1065369472
        %v2279 = vadd.bf16 %v2215, 1065369472
        %v2280 = vmul.bf16 %v2216, 1056980736
        %v2281 = vmul.bf16 %v2217, 1056980736
        %v2282 = vmul.bf16 %v2218, 1056980736
        %v2283 = vmul.bf16 %v2219, 1056980736
        %v2284 = vmul.bf16 %v2220, 1056980736
        %v2285 = vmul.bf16 %v2221, 1056980736
        %v2286 = vmul.bf16 %v2222, 1056980736
        %v2287 = vmul.bf16 %v2223, 1056980736
        %v2288 = vmul.bf16 %v2224, 1056980736
        %v2289 = vmul.bf16 %v2225, 1056980736
        %v2290 = vmul.bf16 %v2226, 1056980736
        %v2291 = vmul.bf16 %v2227, 1056980736
        %v2292 = vmul.bf16 %v2228, 1056980736
        %v2293 = vmul.bf16 %v2229, 1056980736
        %v2294 = vmul.bf16 %v2230, 1056980736
        %v2295 = vmul.bf16 %v2231, 1056980736
        %v2296 = vmul.bf16 %v2232, 1056980736
        %v2297 = vmul.bf16 %v2233, 1056980736
        %v2298 = vmul.bf16 %v2234, 1056980736
        %v2299 = vmul.bf16 %v2235, 1056980736
        %v2300 = vmul.bf16 %v2236, 1056980736
        %v2301 = vmul.bf16 %v2237, 1056980736
        %v2302 = vmul.bf16 %v2238, 1056980736
        %v2303 = vmul.bf16 %v2239, 1056980736
        %v2304 = vmul.bf16 %v2240, 1056980736
        %v2305 = vmul.bf16 %v2241, 1056980736
        %v2306 = vmul.bf16 %v2242, 1056980736
        %v2307 = vmul.bf16 %v2243, 1056980736
        %v2308 = vmul.bf16 %v2244, 1056980736
        %v2309 = vmul.bf16 %v2245, 1056980736
        %v2310 = vmul.bf16 %v2246, 1056980736
        %v2311 = vmul.bf16 %v2247, 1056980736
        %v2312 = vmul.bf16 %v2248, 1056980736
        %v2313 = vmul.bf16 %v2249, 1056980736
        %v2314 = vmul.bf16 %v2250, 1056980736
        %v2315 = vmul.bf16 %v2251, 1056980736
        %v2316 = vmul.bf16 %v2252, 1056980736
        %v2317 = vmul.bf16 %v2253, 1056980736
        %v2318 = vmul.bf16 %v2254, 1056980736
        %v2319 = vmul.bf16 %v2255, 1056980736
        %v2320 = vmul.bf16 %v2256, 1056980736
        %v2321 = vmul.bf16 %v2257, 1056980736
        %v2322 = vmul.bf16 %v2258, 1056980736
        %v2323 = vmul.bf16 %v2259, 1056980736
        %v2324 = vmul.bf16 %v2260, 1056980736
        %v2325 = vmul.bf16 %v2261, 1056980736
        %v2326 = vmul.bf16 %v2262, 1056980736
        %v2327 = vmul.bf16 %v2263, 1056980736
        %v2328 = vmul.bf16 %v2264, 1056980736
        %v2329 = vmul.bf16 %v2265, 1056980736
        %v2330 = vmul.bf16 %v2266, 1056980736
        %v2331 = vmul.bf16 %v2267, 1056980736
        %v2332 = vmul.bf16 %v2268, 1056980736
        %v2333 = vmul.bf16 %v2269, 1056980736
        %v2334 = vmul.bf16 %v2270, 1056980736
        %v2335 = vmul.bf16 %v2271, 1056980736
        %v2336 = vmul.bf16 %v2272, 1056980736
        %v2337 = vmul.bf16 %v2273, 1056980736
        %v2338 = vmul.bf16 %v2274, 1056980736
        %v2339 = vmul.bf16 %v2275, 1056980736
        %v2340 = vmul.bf16 %v2276, 1056980736
        %v2341 = vmul.bf16 %v2277, 1056980736
        %v2342 = vmul.bf16 %v2278, 1056980736
        %v2343 = vmul.bf16 %v2279, 1056980736
        %v2344 = vmul.bf16 %v1768, %v2280
        %v2345 = vmul.bf16 %v1769, %v2281
        %v2346 = vmul.bf16 %v1770, %v2282
        %v2347 = vmul.bf16 %v1771, %v2283
        %v2348 = vmul.bf16 %v1772, %v2284
        %v2349 = vmul.bf16 %v1773, %v2285
        %v2350 = vmul.bf16 %v1774, %v2286
        %v2351 = vmul.bf16 %v1775, %v2287
        %v2352 = vmul.bf16 %v1776, %v2288
        %v2353 = vmul.bf16 %v1777, %v2289
        %v2354 = vmul.bf16 %v1778, %v2290
        %v2355 = vmul.bf16 %v1779, %v2291
        %v2356 = vmul.bf16 %v1780, %v2292
        %v2357 = vmul.bf16 %v1781, %v2293
        %v2358 = vmul.bf16 %v1782, %v2294
        %v2359 = vmul.bf16 %v1783, %v2295
        %v2360 = vmul.bf16 %v1784, %v2296
        %v2361 = vmul.bf16 %v1785, %v2297
        %v2362 = vmul.bf16 %v1786, %v2298
        %v2363 = vmul.bf16 %v1787, %v2299
        %v2364 = vmul.bf16 %v1788, %v2300
        %v2365 = vmul.bf16 %v1789, %v2301
        %v2366 = vmul.bf16 %v1790, %v2302
        %v2367 = vmul.bf16 %v1791, %v2303
        %v2368 = vmul.bf16 %v1792, %v2304
        %v2369 = vmul.bf16 %v1793, %v2305
        %v2370 = vmul.bf16 %v1794, %v2306
        %v2371 = vmul.bf16 %v1795, %v2307
        %v2372 = vmul.bf16 %v1796, %v2308
        %v2373 = vmul.bf16 %v1797, %v2309
        %v2374 = vmul.bf16 %v1798, %v2310
        %v2375 = vmul.bf16 %v1799, %v2311
        %v2376 = vmul.bf16 %v1800, %v2312
        %v2377 = vmul.bf16 %v1801, %v2313
        %v2378 = vmul.bf16 %v1802, %v2314
        %v2379 = vmul.bf16 %v1803, %v2315
        %v2380 = vmul.bf16 %v1804, %v2316
        %v2381 = vmul.bf16 %v1805, %v2317
        %v2382 = vmul.bf16 %v1806, %v2318
        %v2383 = vmul.bf16 %v1807, %v2319
        %v2384 = vmul.bf16 %v1808, %v2320
        %v2385 = vmul.bf16 %v1809, %v2321
        %v2386 = vmul.bf16 %v1810, %v2322
        %v2387 = vmul.bf16 %v1811, %v2323
        %v2388 = vmul.bf16 %v1812, %v2324
        %v2389 = vmul.bf16 %v1813, %v2325
        %v2390 = vmul.bf16 %v1814, %v2326
        %v2391 = vmul.bf16 %v1815, %v2327
        %v2392 = vmul.bf16 %v1816, %v2328
        %v2393 = vmul.bf16 %v1817, %v2329
        %v2394 = vmul.bf16 %v1818, %v2330
        %v2395 = vmul.bf16 %v1819, %v2331
        %v2396 = vmul.bf16 %v1820, %v2332
        %v2397 = vmul.bf16 %v1821, %v2333
        %v2398 = vmul.bf16 %v1822, %v2334
        %v2399 = vmul.bf16 %v1823, %v2335
        %v2400 = vmul.bf16 %v1824, %v2336
        %v2401 = vmul.bf16 %v1825, %v2337
        %v2402 = vmul.bf16 %v1826, %v2338
        %v2403 = vmul.bf16 %v1827, %v2339
        %v2404 = vmul.bf16 %v1828, %v2340
        %v2405 = vmul.bf16 %v1829, %v2341
        %v2406 = vmul.bf16 %v1830, %v2342
        %v2407 = vmul.bf16 %v1831, %v2343
        %v2408 = vld [vmem:[#allocation8] sm:$0xff]
        %v2409 = vld [vmem:[#allocation8 + $0x8] sm:$0xff]
        %v2410 = vld [vmem:[#allocation8 + $0x10] sm:$0xff]
        %v2411 = vld [vmem:[#allocation8 + $0x18] sm:$0xff]
        %v2412 = vld [vmem:[#allocation8 + $0x20] sm:$0xff]
        %v2413 = vld [vmem:[#allocation8 + $0x28] sm:$0xff]
        %v2414 = vld [vmem:[#allocation8 + $0x30] sm:$0xff]
        %v2415 = vld [vmem:[#allocation8 + $0x38] sm:$0xff]
        %v2416 = vld [vmem:[#allocation8 + $0x40] sm:$0xff]
        %v2417 = vld [vmem:[#allocation8 + $0x48] sm:$0xff]
        %v2418 = vld [vmem:[#allocation8 + $0x50] sm:$0xff]
        %v2419 = vld [vmem:[#allocation8 + $0x58] sm:$0xff]
        %v2420 = vld [vmem:[#allocation8 + $0x60] sm:$0xff]
        %v2421 = vld [vmem:[#allocation8 + $0x68] sm:$0xff]
        %v2422 = vld [vmem:[#allocation8 + $0x70] sm:$0xff]
        %v2423 = vld [vmem:[#allocation8 + $0x78] sm:$0xff]
        %v2424 = vld [vmem:[#allocation8 + $0x80] sm:$0xff]
        %v2425 = vld [vmem:[#allocation8 + $0x88] sm:$0xff]
        %v2426 = vld [vmem:[#allocation8 + $0x90] sm:$0xff]
        %v2427 = vld [vmem:[#allocation8 + $0x98] sm:$0xff]
        %v2428 = vld [vmem:[#allocation8 + $0xa0] sm:$0xff]
        %v2429 = vld [vmem:[#allocation8 + $0xa8] sm:$0xff]
        %v2430 = vld [vmem:[#allocation8 + $0xb0] sm:$0xff]
        %v2431 = vld [vmem:[#allocation8 + $0xb8] sm:$0xff]
        %v2432 = vld [vmem:[#allocation8 + $0xc0] sm:$0xff]
        %v2433 = vld [vmem:[#allocation8 + $0xc8] sm:$0xff]
        %v2434 = vld [vmem:[#allocation8 + $0xd0] sm:$0xff]
        %v2435 = vld [vmem:[#allocation8 + $0xd8] sm:$0xff]
        %v2436 = vld [vmem:[#allocation8 + $0xe0] sm:$0xff]
        %v2437 = vld [vmem:[#allocation8 + $0xe8] sm:$0xff]
        %v2438 = vld [vmem:[#allocation8 + $0xf0] sm:$0xff]
        %v2439 = vld [vmem:[#allocation8 + $0xf8] sm:$0xff]
        %v2440 = vld [vmem:[#allocation8 + $0x100] sm:$0xff]
        %v2441 = vld [vmem:[#allocation8 + $0x108] sm:$0xff]
        %v2442 = vld [vmem:[#allocation8 + $0x110] sm:$0xff]
        %v2443 = vld [vmem:[#allocation8 + $0x118] sm:$0xff]
        %v2444 = vld [vmem:[#allocation8 + $0x120] sm:$0xff]
        %v2445 = vld [vmem:[#allocation8 + $0x128] sm:$0xff]
        %v2446 = vld [vmem:[#allocation8 + $0x130] sm:$0xff]
        %v2447 = vld [vmem:[#allocation8 + $0x138] sm:$0xff]
        %v2448 = vld [vmem:[#allocation8 + $0x140] sm:$0xff]
        %v2449 = vld [vmem:[#allocation8 + $0x148] sm:$0xff]
        %v2450 = vld [vmem:[#allocation8 + $0x150] sm:$0xff]
        %v2451 = vld [vmem:[#allocation8 + $0x158] sm:$0xff]
        %v2452 = vld [vmem:[#allocation8 + $0x160] sm:$0xff]
        %v2453 = vld [vmem:[#allocation8 + $0x168] sm:$0xff]
        %v2454 = vld [vmem:[#allocation8 + $0x170] sm:$0xff]
        %v2455 = vld [vmem:[#allocation8 + $0x178] sm:$0xff]
        %v2456 = vld [vmem:[#allocation8 + $0x180] sm:$0xff]
        %v2457 = vld [vmem:[#allocation8 + $0x188] sm:$0xff]
        %v2458 = vld [vmem:[#allocation8 + $0x190] sm:$0xff]
        %v2459 = vld [vmem:[#allocation8 + $0x198] sm:$0xff]
        %v2460 = vld [vmem:[#allocation8 + $0x1a0] sm:$0xff]
        %v2461 = vld [vmem:[#allocation8 + $0x1a8] sm:$0xff]
        %v2462 = vld [vmem:[#allocation8 + $0x1b0] sm:$0xff]
        %v2463 = vld [vmem:[#allocation8 + $0x1b8] sm:$0xff]
        %v2464 = vld [vmem:[#allocation8 + $0x1c0] sm:$0xff]
        %v2465 = vld [vmem:[#allocation8 + $0x1c8] sm:$0xff]
        %v2466 = vld [vmem:[#allocation8 + $0x1d0] sm:$0xff]
        %v2467 = vld [vmem:[#allocation8 + $0x1d8] sm:$0xff]
        %v2468 = vld [vmem:[#allocation8 + $0x1e0] sm:$0xff]
        %v2469 = vld [vmem:[#allocation8 + $0x1e8] sm:$0xff]
        %v2470 = vld [vmem:[#allocation8 + $0x1f0] sm:$0xff]
        %v2471 = vld [vmem:[#allocation8 + $0x1f8] sm:$0xff]
        %v2472 = vld [vmem:[%s7] sm:$0x3]
        %v2474 = vlaneseq
        %v2475 = vshrl.u32 %v2474, 7
        %v2476 = vsub.s32 0, %v2475
        %v2477 = vrot.slane %v2472, %v2476
        %v2478 = vlaneseq
        %v2479 = vshrl.u32 %v2478, 7
        %v2480 = vsub.s32 1, %v2479
        %v2481 = vrot.slane %v2472, %v2480
        %v2548 = vunpack.c.l.b16 %v2408
        %v2549 = vunpack.c.h.b16 %v2408
        %v2550 = vunpack.c.l.b16 %v2409
        %v2551 = vunpack.c.h.b16 %v2409
        %v2552 = vunpack.c.l.b16 %v2410
        %v2553 = vunpack.c.h.b16 %v2410
        %v2554 = vunpack.c.l.b16 %v2411
        %v2555 = vunpack.c.h.b16 %v2411
        %v2556 = vunpack.c.l.b16 %v2412
        %v2557 = vunpack.c.h.b16 %v2412
        %v2558 = vunpack.c.l.b16 %v2413
        %v2559 = vunpack.c.h.b16 %v2413
        %v2560 = vunpack.c.l.b16 %v2414
        %v2561 = vunpack.c.h.b16 %v2414
        %v2562 = vunpack.c.l.b16 %v2415
        %v2563 = vunpack.c.h.b16 %v2415
        %v2564 = vunpack.c.l.b16 %v2416
        %v2565 = vunpack.c.h.b16 %v2416
        %v2566 = vunpack.c.l.b16 %v2417
        %v2567 = vunpack.c.h.b16 %v2417
        %v2568 = vunpack.c.l.b16 %v2418
        %v2569 = vunpack.c.h.b16 %v2418
        %v2570 = vunpack.c.l.b16 %v2419
        %v2571 = vunpack.c.h.b16 %v2419
        %v2572 = vunpack.c.l.b16 %v2420
        %v2573 = vunpack.c.h.b16 %v2420
        %v2574 = vunpack.c.l.b16 %v2421
        %v2575 = vunpack.c.h.b16 %v2421
        %v2576 = vunpack.c.l.b16 %v2422
        %v2577 = vunpack.c.h.b16 %v2422
        %v2578 = vunpack.c.l.b16 %v2423
        %v2579 = vunpack.c.h.b16 %v2423
        %v2580 = vunpack.c.l.b16 %v2424
        %v2581 = vunpack.c.h.b16 %v2424
        %v2582 = vunpack.c.l.b16 %v2425
        %v2583 = vunpack.c.h.b16 %v2425
        %v2584 = vunpack.c.l.b16 %v2426
        %v2585 = vunpack.c.h.b16 %v2426
        %v2586 = vunpack.c.l.b16 %v2427
        %v2587 = vunpack.c.h.b16 %v2427
        %v2588 = vunpack.c.l.b16 %v2428
        %v2589 = vunpack.c.h.b16 %v2428
        %v2590 = vunpack.c.l.b16 %v2429
        %v2591 = vunpack.c.h.b16 %v2429
        %v2592 = vunpack.c.l.b16 %v2430
        %v2593 = vunpack.c.h.b16 %v2430
        %v2594 = vunpack.c.l.b16 %v2431
        %v2595 = vunpack.c.h.b16 %v2431
        %v2596 = vunpack.c.l.b16 %v2432
        %v2597 = vunpack.c.h.b16 %v2432
        %v2598 = vunpack.c.l.b16 %v2433
        %v2599 = vunpack.c.h.b16 %v2433
        %v2600 = vunpack.c.l.b16 %v2434
        %v2601 = vunpack.c.h.b16 %v2434
        %v2602 = vunpack.c.l.b16 %v2435
        %v2603 = vunpack.c.h.b16 %v2435
        %v2604 = vunpack.c.l.b16 %v2436
        %v2605 = vunpack.c.h.b16 %v2436
        %v2606 = vunpack.c.l.b16 %v2437
        %v2607 = vunpack.c.h.b16 %v2437
        %v2608 = vunpack.c.l.b16 %v2438
        %v2609 = vunpack.c.h.b16 %v2438
        %v2610 = vunpack.c.l.b16 %v2439
        %v2611 = vunpack.c.h.b16 %v2439
        %v2612 = vunpack.c.l.b16 %v2440
        %v2613 = vunpack.c.h.b16 %v2440
        %v2614 = vunpack.c.l.b16 %v2441
        %v2615 = vunpack.c.h.b16 %v2441
        %v2616 = vunpack.c.l.b16 %v2442
        %v2617 = vunpack.c.h.b16 %v2442
        %v2618 = vunpack.c.l.b16 %v2443
        %v2619 = vunpack.c.h.b16 %v2443
        %v2620 = vunpack.c.l.b16 %v2444
        %v2621 = vunpack.c.h.b16 %v2444
        %v2622 = vunpack.c.l.b16 %v2445
        %v2623 = vunpack.c.h.b16 %v2445
        %v2624 = vunpack.c.l.b16 %v2446
        %v2625 = vunpack.c.h.b16 %v2446
        %v2626 = vunpack.c.l.b16 %v2447
        %v2627 = vunpack.c.h.b16 %v2447
        %v2628 = vunpack.c.l.b16 %v2448
        %v2629 = vunpack.c.h.b16 %v2448
        %v2630 = vunpack.c.l.b16 %v2449
        %v2631 = vunpack.c.h.b16 %v2449
        %v2632 = vunpack.c.l.b16 %v2450
        %v2633 = vunpack.c.h.b16 %v2450
        %v2634 = vunpack.c.l.b16 %v2451
        %v2635 = vunpack.c.h.b16 %v2451
        %v2636 = vunpack.c.l.b16 %v2452
        %v2637 = vunpack.c.h.b16 %v2452
        %v2638 = vunpack.c.l.b16 %v2453
        %v2639 = vunpack.c.h.b16 %v2453
        %v2640 = vunpack.c.l.b16 %v2454
        %v2641 = vunpack.c.h.b16 %v2454
        %v2642 = vunpack.c.l.b16 %v2455
        %v2643 = vunpack.c.h.b16 %v2455
        %v2644 = vunpack.c.l.b16 %v2456
        %v2645 = vunpack.c.h.b16 %v2456
        %v2646 = vunpack.c.l.b16 %v2457
        %v2647 = vunpack.c.h.b16 %v2457
        %v2648 = vunpack.c.l.b16 %v2458
        %v2649 = vunpack.c.h.b16 %v2458
        %v2650 = vunpack.c.l.b16 %v2459
        %v2651 = vunpack.c.h.b16 %v2459
        %v2652 = vunpack.c.l.b16 %v2460
        %v2653 = vunpack.c.h.b16 %v2460
        %v2654 = vunpack.c.l.b16 %v2461
        %v2655 = vunpack.c.h.b16 %v2461
        %v2656 = vunpack.c.l.b16 %v2462
        %v2657 = vunpack.c.h.b16 %v2462
        %v2658 = vunpack.c.l.b16 %v2463
        %v2659 = vunpack.c.h.b16 %v2463
        %v2660 = vunpack.c.l.b16 %v2464
        %v2661 = vunpack.c.h.b16 %v2464
        %v2662 = vunpack.c.l.b16 %v2465
        %v2663 = vunpack.c.h.b16 %v2465
        %v2664 = vunpack.c.l.b16 %v2466
        %v2665 = vunpack.c.h.b16 %v2466
        %v2666 = vunpack.c.l.b16 %v2467
        %v2667 = vunpack.c.h.b16 %v2467
        %v2668 = vunpack.c.l.b16 %v2468
        %v2669 = vunpack.c.h.b16 %v2468
        %v2670 = vunpack.c.l.b16 %v2469
        %v2671 = vunpack.c.h.b16 %v2469
        %v2672 = vunpack.c.l.b16 %v2470
        %v2673 = vunpack.c.h.b16 %v2470
        %v2674 = vunpack.c.l.b16 %v2471
        %v2675 = vunpack.c.h.b16 %v2471
        %v2676 = vpack.c.b16 %v2550, %v2548
        %v2677 = vpack.c.b16 %v2551, %v2549
        %v2678 = vpack.c.b16 %v2554, %v2552
        %v2679 = vpack.c.b16 %v2555, %v2553
        %v2680 = vpack.c.b16 %v2558, %v2556
        %v2681 = vpack.c.b16 %v2559, %v2557
        %v2682 = vpack.c.b16 %v2562, %v2560
        %v2683 = vpack.c.b16 %v2563, %v2561
        %v2684 = vpack.c.b16 %v2566, %v2564
        %v2685 = vpack.c.b16 %v2567, %v2565
        %v2686 = vpack.c.b16 %v2570, %v2568
        %v2687 = vpack.c.b16 %v2571, %v2569
        %v2688 = vpack.c.b16 %v2574, %v2572
        %v2689 = vpack.c.b16 %v2575, %v2573
        %v2690 = vpack.c.b16 %v2578, %v2576
        %v2691 = vpack.c.b16 %v2579, %v2577
        %v2692 = vpack.c.b16 %v2582, %v2580
        %v2693 = vpack.c.b16 %v2583, %v2581
        %v2694 = vpack.c.b16 %v2586, %v2584
        %v2695 = vpack.c.b16 %v2587, %v2585
        %v2696 = vpack.c.b16 %v2590, %v2588
        %v2697 = vpack.c.b16 %v2591, %v2589
        %v2698 = vpack.c.b16 %v2594, %v2592
        %v2699 = vpack.c.b16 %v2595, %v2593
        %v2700 = vpack.c.b16 %v2598, %v2596
        %v2701 = vpack.c.b16 %v2599, %v2597
        %v2702 = vpack.c.b16 %v2602, %v2600
        %v2703 = vpack.c.b16 %v2603, %v2601
        %v2704 = vpack.c.b16 %v2606, %v2604
        %v2705 = vpack.c.b16 %v2607, %v2605
        %v2706 = vpack.c.b16 %v2610, %v2608
        %v2707 = vpack.c.b16 %v2611, %v2609
        %v2708 = vpack.c.b16 %v2614, %v2612
        %v2709 = vpack.c.b16 %v2615, %v2613
        %v2710 = vpack.c.b16 %v2618, %v2616
        %v2711 = vpack.c.b16 %v2619, %v2617
        %v2712 = vpack.c.b16 %v2622, %v2620
        %v2713 = vpack.c.b16 %v2623, %v2621
        %v2714 = vpack.c.b16 %v2626, %v2624
        %v2715 = vpack.c.b16 %v2627, %v2625
        %v2716 = vpack.c.b16 %v2630, %v2628
        %v2717 = vpack.c.b16 %v2631, %v2629
        %v2718 = vpack.c.b16 %v2634, %v2632
        %v2719 = vpack.c.b16 %v2635, %v2633
        %v2720 = vpack.c.b16 %v2638, %v2636
        %v2721 = vpack.c.b16 %v2639, %v2637
        %v2722 = vpack.c.b16 %v2642, %v2640
        %v2723 = vpack.c.b16 %v2643, %v2641
        %v2724 = vpack.c.b16 %v2646, %v2644
        %v2725 = vpack.c.b16 %v2647, %v2645
        %v2726 = vpack.c.b16 %v2650, %v2648
        %v2727 = vpack.c.b16 %v2651, %v2649
        %v2728 = vpack.c.b16 %v2654, %v2652
        %v2729 = vpack.c.b16 %v2655, %v2653
        %v2730 = vpack.c.b16 %v2658, %v2656
        %v2731 = vpack.c.b16 %v2659, %v2657
        %v2732 = vpack.c.b16 %v2662, %v2660
        %v2733 = vpack.c.b16 %v2663, %v2661
        %v2734 = vpack.c.b16 %v2666, %v2664
        %v2735 = vpack.c.b16 %v2667, %v2665
        %v2736 = vpack.c.b16 %v2670, %v2668
        %v2737 = vpack.c.b16 %v2671, %v2669
        %v2738 = vpack.c.b16 %v2674, %v2672
        %v2739 = vpack.c.b16 %v2675, %v2673
        %2804 = vmatprep.subr.bf16.mxu0 %v2691
        %2805 = vmatpush1.bf16.msra.mxu0 %v2690
        %2806 = vmatprep.subr.bf16.mxu0 %v2689
        %2807 = vmatpush1.bf16.msra.mxu0 %v2688
        %2808 = vmatprep.subr.bf16.mxu0 %v2687
        %2809 = vmatpush1.bf16.msra.mxu0 %v2686
        %2810 = vmatprep.subr.bf16.mxu0 %v2685
        %2811 = vmatpush1.bf16.msra.mxu0 %v2684
        %2812 = vmatprep.subr.bf16.mxu0 %v2683
        %2813 = vmatpush1.bf16.msra.mxu0 %v2682
        %2814 = vmatprep.subr.bf16.mxu0 %v2681
        %2815 = vmatpush1.bf16.msra.mxu0 %v2680
        %2816 = vmatprep.subr.bf16.mxu0 %v2679
        %2817 = vmatpush1.bf16.msra.mxu0 %v2678
        %2818 = vmatprep.subr.bf16.mxu0 %v2677
        %2819 = vmatpush1.bf16.msra.mxu0 %v2676
        %2820 = vmatprep.subr.bf16.mxu0 %v2707
        %2821 = vmatpush2.bf16.msra.mxu0 %v2706
        %2822 = vmatprep.subr.bf16.mxu0 %v2705
        %2823 = vmatpush2.bf16.msra.mxu0 %v2704
        %2824 = vmatprep.subr.bf16.mxu0 %v2703
        %2825 = vmatpush2.bf16.msra.mxu0 %v2702
        %2826 = vmatprep.subr.bf16.mxu0 %v2701
        %2827 = vmatpush2.bf16.msra.mxu0 %v2700
        %2828 = vmatprep.subr.bf16.mxu0 %v2699
        %2829 = vmatpush2.bf16.msra.mxu0 %v2698
        %2830 = vmatprep.subr.bf16.mxu0 %v2697
        %2831 = vmatpush2.bf16.msra.mxu0 %v2696
        %2832 = vmatprep.subr.bf16.mxu0 %v2695
        %2833 = vmatpush2.bf16.msra.mxu0 %v2694
        %2834 = vmatprep.subr.bf16.mxu0 %v2693
        %2835 = vmatpush2.bf16.msra.mxu0 %v2692
        %2836 = vmatprep.mubr.bf16.mxu0 %v2345
        %2837 = vmatmul.mubr.bf16.gmra.mxu0 %v2344
        %v2838 = vpop.f32.mrf.mxu0
        %v2839 = vadd.f32 %v2477, %v2838
        %v2840 = vpop.f32.mrf.mxu0
        %v2841 = vadd.f32 %v2481, %v2840
        %v2842 = vpop.f32.mrf.mxu0
        %v2843 = vadd.f32 %v2477, %v2842
        %v2844 = vpop.f32.mrf.mxu0
        %v2845 = vadd.f32 %v2481, %v2844
        %2846 = vmatprep.mubr.bf16.mxu0 %v2349
        %2847 = vmatmul.mubr.bf16.gmra.mxu0 %v2348
        %v2848 = vpop.f32.mrf.mxu0
        %v2849 = vadd.f32 %v2477, %v2848
        %v2850 = vpop.f32.mrf.mxu0
        %v2851 = vadd.f32 %v2481, %v2850
        %v2852 = vpop.f32.mrf.mxu0
        %v2853 = vadd.f32 %v2477, %v2852
        %v2854 = vpop.f32.mrf.mxu0
        %v2855 = vadd.f32 %v2481, %v2854
        %2856 = vmatprep.mubr.bf16.mxu0 %v2353
        %2857 = vmatmul.mubr.bf16.gmra.mxu0 %v2352
        %v2858 = vpop.f32.mrf.mxu0
        %v2859 = vadd.f32 %v2477, %v2858
        %v2860 = vpop.f32.mrf.mxu0
        %v2861 = vadd.f32 %v2481, %v2860
        %v2862 = vpop.f32.mrf.mxu0
        %v2863 = vadd.f32 %v2477, %v2862
        %v2864 = vpop.f32.mrf.mxu0
        %v2865 = vadd.f32 %v2481, %v2864
        %2866 = vmatprep.mubr.bf16.mxu0 %v2357
        %2867 = vmatmul.mubr.bf16.gmra.mxu0 %v2356
        %v2868 = vpop.f32.mrf.mxu0
        %v2869 = vadd.f32 %v2477, %v2868
        %v2870 = vpop.f32.mrf.mxu0
        %v2871 = vadd.f32 %v2481, %v2870
        %v2872 = vpop.f32.mrf.mxu0
        %v2873 = vadd.f32 %v2477, %v2872
        %v2874 = vpop.f32.mrf.mxu0
        %v2875 = vadd.f32 %v2481, %v2874
        %2876 = vmatprep.mubr.bf16.mxu0 %v2361
        %2877 = vmatmul.mubr.bf16.gmra.mxu0 %v2360
        %v2878 = vpop.f32.mrf.mxu0
        %v2879 = vadd.f32 %v2477, %v2878
        %v2880 = vpop.f32.mrf.mxu0
        %v2881 = vadd.f32 %v2481, %v2880
        %v2882 = vpop.f32.mrf.mxu0
        %v2883 = vadd.f32 %v2477, %v2882
        %v2884 = vpop.f32.mrf.mxu0
        %v2885 = vadd.f32 %v2481, %v2884
        %2886 = vmatprep.mubr.bf16.mxu0 %v2365
        %2887 = vmatmul.mubr.bf16.gmra.mxu0 %v2364
        %v2888 = vpop.f32.mrf.mxu0
        %v2889 = vadd.f32 %v2477, %v2888
        %v2890 = vpop.f32.mrf.mxu0
        %v2891 = vadd.f32 %v2481, %v2890
        %v2892 = vpop.f32.mrf.mxu0
        %v2893 = vadd.f32 %v2477, %v2892
        %v2894 = vpop.f32.mrf.mxu0
        %v2895 = vadd.f32 %v2481, %v2894
        %2896 = vmatprep.mubr.bf16.mxu0 %v2369
        %2897 = vmatmul.mubr.bf16.gmra.mxu0 %v2368
        %v2898 = vpop.f32.mrf.mxu0
        %v2899 = vadd.f32 %v2477, %v2898
        %v2900 = vpop.f32.mrf.mxu0
        %v2901 = vadd.f32 %v2481, %v2900
        %v2902 = vpop.f32.mrf.mxu0
        %v2903 = vadd.f32 %v2477, %v2902
        %v2904 = vpop.f32.mrf.mxu0
        %v2905 = vadd.f32 %v2481, %v2904
        %2906 = vmatprep.mubr.bf16.mxu0 %v2373
        %2907 = vmatmul.mubr.bf16.gmra.mxu0 %v2372
        %v2908 = vpop.f32.mrf.mxu0
        %v2909 = vadd.f32 %v2477, %v2908
        %v2910 = vpop.f32.mrf.mxu0
        %v2911 = vadd.f32 %v2481, %v2910
        %v2912 = vpop.f32.mrf.mxu0
        %v2913 = vadd.f32 %v2477, %v2912
        %v2914 = vpop.f32.mrf.mxu0
        %v2915 = vadd.f32 %v2481, %v2914
        %2916 = vmatprep.mubr.bf16.mxu0 %v2377
        %2917 = vmatmul.mubr.bf16.gmra.mxu0 %v2376
        %v2918 = vpop.f32.mrf.mxu0
        %v2919 = vadd.f32 %v2477, %v2918
        %v2920 = vpop.f32.mrf.mxu0
        %v2921 = vadd.f32 %v2481, %v2920
        %v2922 = vpop.f32.mrf.mxu0
        %v2923 = vadd.f32 %v2477, %v2922
        %v2924 = vpop.f32.mrf.mxu0
        %v2925 = vadd.f32 %v2481, %v2924
        %2926 = vmatprep.mubr.bf16.mxu0 %v2381
        %2927 = vmatmul.mubr.bf16.gmra.mxu0 %v2380
        %v2928 = vpop.f32.mrf.mxu0
        %v2929 = vadd.f32 %v2477, %v2928
        %v2930 = vpop.f32.mrf.mxu0
        %v2931 = vadd.f32 %v2481, %v2930
        %v2932 = vpop.f32.mrf.mxu0
        %v2933 = vadd.f32 %v2477, %v2932
        %v2934 = vpop.f32.mrf.mxu0
        %v2935 = vadd.f32 %v2481, %v2934
        %2936 = vmatprep.mubr.bf16.mxu0 %v2385
        %2937 = vmatmul.mubr.bf16.gmra.mxu0 %v2384
        %v2938 = vpop.f32.mrf.mxu0
        %v2939 = vadd.f32 %v2477, %v2938
        %v2940 = vpop.f32.mrf.mxu0
        %v2941 = vadd.f32 %v2481, %v2940
        %v2942 = vpop.f32.mrf.mxu0
        %v2943 = vadd.f32 %v2477, %v2942
        %v2944 = vpop.f32.mrf.mxu0
        %v2945 = vadd.f32 %v2481, %v2944
        %2946 = vmatprep.mubr.bf16.mxu0 %v2389
        %2947 = vmatmul.mubr.bf16.gmra.mxu0 %v2388
        %v2948 = vpop.f32.mrf.mxu0
        %v2949 = vadd.f32 %v2477, %v2948
        %v2950 = vpop.f32.mrf.mxu0
        %v2951 = vadd.f32 %v2481, %v2950
        %v2952 = vpop.f32.mrf.mxu0
        %v2953 = vadd.f32 %v2477, %v2952
        %v2954 = vpop.f32.mrf.mxu0
        %v2955 = vadd.f32 %v2481, %v2954
        %2956 = vmatprep.mubr.bf16.mxu0 %v2393
        %2957 = vmatmul.mubr.bf16.gmra.mxu0 %v2392
        %v2958 = vpop.f32.mrf.mxu0
        %v2959 = vadd.f32 %v2477, %v2958
        %v2960 = vpop.f32.mrf.mxu0
        %v2961 = vadd.f32 %v2481, %v2960
        %v2962 = vpop.f32.mrf.mxu0
        %v2963 = vadd.f32 %v2477, %v2962
        %v2964 = vpop.f32.mrf.mxu0
        %v2965 = vadd.f32 %v2481, %v2964
        %2966 = vmatprep.mubr.bf16.mxu0 %v2397
        %2967 = vmatmul.mubr.bf16.gmra.mxu0 %v2396
        %v2968 = vpop.f32.mrf.mxu0
        %v2969 = vadd.f32 %v2477, %v2968
        %v2970 = vpop.f32.mrf.mxu0
        %v2971 = vadd.f32 %v2481, %v2970
        %v2972 = vpop.f32.mrf.mxu0
        %v2973 = vadd.f32 %v2477, %v2972
        %v2974 = vpop.f32.mrf.mxu0
        %v2975 = vadd.f32 %v2481, %v2974
        %2976 = vmatprep.mubr.bf16.mxu0 %v2401
        %2977 = vmatmul.mubr.bf16.gmra.mxu0 %v2400
        %v2978 = vpop.f32.mrf.mxu0
        %v2979 = vadd.f32 %v2477, %v2978
        %v2980 = vpop.f32.mrf.mxu0
        %v2981 = vadd.f32 %v2481, %v2980
        %v2982 = vpop.f32.mrf.mxu0
        %v2983 = vadd.f32 %v2477, %v2982
        %v2984 = vpop.f32.mrf.mxu0
        %v2985 = vadd.f32 %v2481, %v2984
        %2986 = vmatprep.mubr.bf16.mxu0 %v2405
        %2987 = vmatmul.mubr.bf16.gmra.mxu0 %v2404
        %v2988 = vpop.f32.mrf.mxu0
        %v2989 = vadd.f32 %v2477, %v2988
        %v2990 = vpop.f32.mrf.mxu0
        %v2991 = vadd.f32 %v2481, %v2990
        %v2992 = vpop.f32.mrf.mxu0
        %v2993 = vadd.f32 %v2477, %v2992
        %v2994 = vpop.f32.mrf.mxu0
        %v2995 = vadd.f32 %v2481, %v2994
        %2996 = vdwg.mxu0
        %2997 = vmatprep.subr.bf16.mxu0 %v2723
        %2998 = vmatpush1.bf16.msra.mxu0 %v2722
        %2999 = vmatprep.subr.bf16.mxu0 %v2721
        %3000 = vmatpush1.bf16.msra.mxu0 %v2720
        %3001 = vmatprep.subr.bf16.mxu0 %v2719
        %3002 = vmatpush1.bf16.msra.mxu0 %v2718
        %3003 = vmatprep.subr.bf16.mxu0 %v2717
        %3004 = vmatpush1.bf16.msra.mxu0 %v2716
        %3005 = vmatprep.subr.bf16.mxu0 %v2715
        %3006 = vmatpush1.bf16.msra.mxu0 %v2714
        %3007 = vmatprep.subr.bf16.mxu0 %v2713
        %3008 = vmatpush1.bf16.msra.mxu0 %v2712
        %3009 = vmatprep.subr.bf16.mxu0 %v2711
        %3010 = vmatpush1.bf16.msra.mxu0 %v2710
        %3011 = vmatprep.subr.bf16.mxu0 %v2709
        %3012 = vmatpush1.bf16.msra.mxu0 %v2708
        %3013 = vmatprep.subr.bf16.mxu0 %v2739
        %3014 = vmatpush2.bf16.msra.mxu0 %v2738
        %3015 = vmatprep.subr.bf16.mxu0 %v2737
        %3016 = vmatpush2.bf16.msra.mxu0 %v2736
        %3017 = vmatprep.subr.bf16.mxu0 %v2735
        %3018 = vmatpush2.bf16.msra.mxu0 %v2734
        %3019 = vmatprep.subr.bf16.mxu0 %v2733
        %3020 = vmatpush2.bf16.msra.mxu0 %v2732
        %3021 = vmatprep.subr.bf16.mxu0 %v2731
        %3022 = vmatpush2.bf16.msra.mxu0 %v2730
        %3023 = vmatprep.subr.bf16.mxu0 %v2729
        %3024 = vmatpush2.bf16.msra.mxu0 %v2728
        %3025 = vmatprep.subr.bf16.mxu0 %v2727
        %3026 = vmatpush2.bf16.msra.mxu0 %v2726
        %3027 = vmatprep.subr.bf16.mxu0 %v2725
        %3028 = vmatpush2.bf16.msra.mxu0 %v2724
        %3029 = vmatprep.mubr.bf16.mxu0 %v2347
        %3030 = vmatmul.mubr.bf16.gmra.mxu0 %v2346
        %v3031 = vpop.f32.mrf.mxu0
        %v3032 = vadd.f32 %v2839, %v3031
        %v3033 = vpop.f32.mrf.mxu0
        %v3034 = vadd.f32 %v2841, %v3033
        %v3035 = vpop.f32.mrf.mxu0
        %v3036 = vadd.f32 %v2843, %v3035
        %v3037 = vpop.f32.mrf.mxu0
        %v3038 = vadd.f32 %v2845, %v3037
        %3039 = vmatprep.mubr.bf16.mxu0 %v2351
        %3040 = vmatmul.mubr.bf16.gmra.mxu0 %v2350
        %v3041 = vpop.f32.mrf.mxu0
        %v3042 = vadd.f32 %v2849, %v3041
        %v3043 = vpop.f32.mrf.mxu0
        %v3044 = vadd.f32 %v2851, %v3043
        %v3045 = vpop.f32.mrf.mxu0
        %v3046 = vadd.f32 %v2853, %v3045
        %v3047 = vpop.f32.mrf.mxu0
        %v3048 = vadd.f32 %v2855, %v3047
        %3049 = vmatprep.mubr.bf16.mxu0 %v2355
        %3050 = vmatmul.mubr.bf16.gmra.mxu0 %v2354
        %v3051 = vpop.f32.mrf.mxu0
        %v3052 = vadd.f32 %v2859, %v3051
        %v3053 = vpop.f32.mrf.mxu0
        %v3054 = vadd.f32 %v2861, %v3053
        %v3055 = vpop.f32.mrf.mxu0
        %v3056 = vadd.f32 %v2863, %v3055
        %v3057 = vpop.f32.mrf.mxu0
        %v3058 = vadd.f32 %v2865, %v3057
        %3059 = vmatprep.mubr.bf16.mxu0 %v2359
        %3060 = vmatmul.mubr.bf16.gmra.mxu0 %v2358
        %v3061 = vpop.f32.mrf.mxu0
        %v3062 = vadd.f32 %v2869, %v3061
        %v3063 = vpop.f32.mrf.mxu0
        %v3064 = vadd.f32 %v2871, %v3063
        %v3065 = vpop.f32.mrf.mxu0
        %v3066 = vadd.f32 %v2873, %v3065
        %v3067 = vpop.f32.mrf.mxu0
        %v3068 = vadd.f32 %v2875, %v3067
        %3069 = vmatprep.mubr.bf16.mxu0 %v2363
        %3070 = vmatmul.mubr.bf16.gmra.mxu0 %v2362
        %v3071 = vpop.f32.mrf.mxu0
        %v3072 = vadd.f32 %v2879, %v3071
        %v3073 = vpop.f32.mrf.mxu0
        %v3074 = vadd.f32 %v2881, %v3073
        %v3075 = vpop.f32.mrf.mxu0
        %v3076 = vadd.f32 %v2883, %v3075
        %v3077 = vpop.f32.mrf.mxu0
        %v3078 = vadd.f32 %v2885, %v3077
        %3079 = vmatprep.mubr.bf16.mxu0 %v2367
        %3080 = vmatmul.mubr.bf16.gmra.mxu0 %v2366
        %v3081 = vpop.f32.mrf.mxu0
        %v3082 = vadd.f32 %v2889, %v3081
        %v3083 = vpop.f32.mrf.mxu0
        %v3084 = vadd.f32 %v2891, %v3083
        %v3085 = vpop.f32.mrf.mxu0
        %v3086 = vadd.f32 %v2893, %v3085
        %v3087 = vpop.f32.mrf.mxu0
        %v3088 = vadd.f32 %v2895, %v3087
        %3089 = vmatprep.mubr.bf16.mxu0 %v2371
        %3090 = vmatmul.mubr.bf16.gmra.mxu0 %v2370
        %v3091 = vpop.f32.mrf.mxu0
        %v3092 = vadd.f32 %v2899, %v3091
        %v3093 = vpop.f32.mrf.mxu0
        %v3094 = vadd.f32 %v2901, %v3093
        %v3095 = vpop.f32.mrf.mxu0
        %v3096 = vadd.f32 %v2903, %v3095
        %v3097 = vpop.f32.mrf.mxu0
        %v3098 = vadd.f32 %v2905, %v3097
        %3099 = vmatprep.mubr.bf16.mxu0 %v2375
        %3100 = vmatmul.mubr.bf16.gmra.mxu0 %v2374
        %v3101 = vpop.f32.mrf.mxu0
        %v3102 = vadd.f32 %v2909, %v3101
        %v3103 = vpop.f32.mrf.mxu0
        %v3104 = vadd.f32 %v2911, %v3103
        %v3105 = vpop.f32.mrf.mxu0
        %v3106 = vadd.f32 %v2913, %v3105
        %v3107 = vpop.f32.mrf.mxu0
        %v3108 = vadd.f32 %v2915, %v3107
        %3109 = vmatprep.mubr.bf16.mxu0 %v2379
        %3110 = vmatmul.mubr.bf16.gmra.mxu0 %v2378
        %v3111 = vpop.f32.mrf.mxu0
        %v3112 = vadd.f32 %v2919, %v3111
        %v3113 = vpop.f32.mrf.mxu0
        %v3114 = vadd.f32 %v2921, %v3113
        %v3115 = vpop.f32.mrf.mxu0
        %v3116 = vadd.f32 %v2923, %v3115
        %v3117 = vpop.f32.mrf.mxu0
        %v3118 = vadd.f32 %v2925, %v3117
        %3119 = vmatprep.mubr.bf16.mxu0 %v2383
        %3120 = vmatmul.mubr.bf16.gmra.mxu0 %v2382
        %v3121 = vpop.f32.mrf.mxu0
        %v3122 = vadd.f32 %v2929, %v3121
        %v3123 = vpop.f32.mrf.mxu0
        %v3124 = vadd.f32 %v2931, %v3123
        %v3125 = vpop.f32.mrf.mxu0
        %v3126 = vadd.f32 %v2933, %v3125
        %v3127 = vpop.f32.mrf.mxu0
        %v3128 = vadd.f32 %v2935, %v3127
        %3129 = vmatprep.mubr.bf16.mxu0 %v2387
        %3130 = vmatmul.mubr.bf16.gmra.mxu0 %v2386
        %v3131 = vpop.f32.mrf.mxu0
        %v3132 = vadd.f32 %v2939, %v3131
        %v3133 = vpop.f32.mrf.mxu0
        %v3134 = vadd.f32 %v2941, %v3133
        %v3135 = vpop.f32.mrf.mxu0
        %v3136 = vadd.f32 %v2943, %v3135
        %v3137 = vpop.f32.mrf.mxu0
        %v3138 = vadd.f32 %v2945, %v3137
        %3139 = vmatprep.mubr.bf16.mxu0 %v2391
        %3140 = vmatmul.mubr.bf16.gmra.mxu0 %v2390
        %v3141 = vpop.f32.mrf.mxu0
        %v3142 = vadd.f32 %v2949, %v3141
        %v3143 = vpop.f32.mrf.mxu0
        %v3144 = vadd.f32 %v2951, %v3143
        %v3145 = vpop.f32.mrf.mxu0
        %v3146 = vadd.f32 %v2953, %v3145
        %v3147 = vpop.f32.mrf.mxu0
        %v3148 = vadd.f32 %v2955, %v3147
        %3149 = vmatprep.mubr.bf16.mxu0 %v2395
        %3150 = vmatmul.mubr.bf16.gmra.mxu0 %v2394
        %v3151 = vpop.f32.mrf.mxu0
        %v3152 = vadd.f32 %v2959, %v3151
        %v3153 = vpop.f32.mrf.mxu0
        %v3154 = vadd.f32 %v2961, %v3153
        %v3155 = vpop.f32.mrf.mxu0
        %v3156 = vadd.f32 %v2963, %v3155
        %v3157 = vpop.f32.mrf.mxu0
        %v3158 = vadd.f32 %v2965, %v3157
        %3159 = vmatprep.mubr.bf16.mxu0 %v2399
        %3160 = vmatmul.mubr.bf16.gmra.mxu0 %v2398
        %v3161 = vpop.f32.mrf.mxu0
        %v3162 = vadd.f32 %v2969, %v3161
        %v3163 = vpop.f32.mrf.mxu0
        %v3164 = vadd.f32 %v2971, %v3163
        %v3165 = vpop.f32.mrf.mxu0
        %v3166 = vadd.f32 %v2973, %v3165
        %v3167 = vpop.f32.mrf.mxu0
        %v3168 = vadd.f32 %v2975, %v3167
        %3169 = vmatprep.mubr.bf16.mxu0 %v2403
        %3170 = vmatmul.mubr.bf16.gmra.mxu0 %v2402
        %v3171 = vpop.f32.mrf.mxu0
        %v3172 = vadd.f32 %v2979, %v3171
        %v3173 = vpop.f32.mrf.mxu0
        %v3174 = vadd.f32 %v2981, %v3173
        %v3175 = vpop.f32.mrf.mxu0
        %v3176 = vadd.f32 %v2983, %v3175
        %v3177 = vpop.f32.mrf.mxu0
        %v3178 = vadd.f32 %v2985, %v3177
        %3179 = vmatprep.mubr.bf16.mxu0 %v2407
        %3180 = vmatmul.mubr.bf16.gmra.mxu0 %v2406
        %v3181 = vpop.f32.mrf.mxu0
        %v3182 = vadd.f32 %v2989, %v3181
        %v3183 = vpop.f32.mrf.mxu0
        %v3184 = vadd.f32 %v2991, %v3183
        %v3185 = vpop.f32.mrf.mxu0
        %v3186 = vadd.f32 %v2993, %v3185
        %v3187 = vpop.f32.mrf.mxu0
        %v3188 = vadd.f32 %v2995, %v3187
        %3189 = vdwg.mxu0
        %v3190 = vld [vmem:[%s403] sm:$0xff]
        %v3191 = vld [vmem:[%s403 + $0x8] sm:$0xff]
        %v3192 = vld [vmem:[%s403 + $0x10] sm:$0xff]
        %v3193 = vld [vmem:[%s403 + $0x18] sm:$0xff]
        %v3194 = vld [vmem:[%s403 + $0x20] sm:$0xff]
        %v3195 = vld [vmem:[%s403 + $0x28] sm:$0xff]
        %v3196 = vld [vmem:[%s403 + $0x30] sm:$0xff]
        %v3197 = vld [vmem:[%s403 + $0x38] sm:$0xff]
        %v3198 = vld [vmem:[%s403 + $0x40] sm:$0xff]
        %v3199 = vld [vmem:[%s403 + $0x48] sm:$0xff]
        %v3200 = vld [vmem:[%s403 + $0x50] sm:$0xff]
        %v3201 = vld [vmem:[%s403 + $0x58] sm:$0xff]
        %v3202 = vld [vmem:[%s403 + $0x60] sm:$0xff]
        %v3203 = vld [vmem:[%s403 + $0x68] sm:$0xff]
        %v3204 = vld [vmem:[%s403 + $0x70] sm:$0xff]
        %v3205 = vld [vmem:[%s403 + $0x78] sm:$0xff]
        %v3206 = vld [vmem:[%s403 + $0x80] sm:$0xff]
        %v3207 = vld [vmem:[%s403 + $0x88] sm:$0xff]
        %v3208 = vld [vmem:[%s403 + $0x90] sm:$0xff]
        %v3209 = vld [vmem:[%s403 + $0x98] sm:$0xff]
        %v3210 = vld [vmem:[%s403 + $0xa0] sm:$0xff]
        %v3211 = vld [vmem:[%s403 + $0xa8] sm:$0xff]
        %v3212 = vld [vmem:[%s403 + $0xb0] sm:$0xff]
        %v3213 = vld [vmem:[%s403 + $0xb8] sm:$0xff]
        %v3214 = vld [vmem:[%s403 + $0xc0] sm:$0xff]
        %v3215 = vld [vmem:[%s403 + $0xc8] sm:$0xff]
        %v3216 = vld [vmem:[%s403 + $0xd0] sm:$0xff]
        %v3217 = vld [vmem:[%s403 + $0xd8] sm:$0xff]
        %v3218 = vld [vmem:[%s403 + $0xe0] sm:$0xff]
        %v3219 = vld [vmem:[%s403 + $0xe8] sm:$0xff]
        %v3220 = vld [vmem:[%s403 + $0xf0] sm:$0xff]
        %v3221 = vld [vmem:[%s403 + $0xf8] sm:$0xff]
        %v3222 = vld [vmem:[%s403 + $0x100] sm:$0xff]
        %v3223 = vld [vmem:[%s403 + $0x108] sm:$0xff]
        %v3224 = vld [vmem:[%s403 + $0x110] sm:$0xff]
        %v3225 = vld [vmem:[%s403 + $0x118] sm:$0xff]
        %v3226 = vld [vmem:[%s403 + $0x120] sm:$0xff]
        %v3227 = vld [vmem:[%s403 + $0x128] sm:$0xff]
        %v3228 = vld [vmem:[%s403 + $0x130] sm:$0xff]
        %v3229 = vld [vmem:[%s403 + $0x138] sm:$0xff]
        %v3230 = vld [vmem:[%s403 + $0x140] sm:$0xff]
        %v3231 = vld [vmem:[%s403 + $0x148] sm:$0xff]
        %v3232 = vld [vmem:[%s403 + $0x150] sm:$0xff]
        %v3233 = vld [vmem:[%s403 + $0x158] sm:$0xff]
        %v3234 = vld [vmem:[%s403 + $0x160] sm:$0xff]
        %v3235 = vld [vmem:[%s403 + $0x168] sm:$0xff]
        %v3236 = vld [vmem:[%s403 + $0x170] sm:$0xff]
        %v3237 = vld [vmem:[%s403 + $0x178] sm:$0xff]
        %v3238 = vld [vmem:[%s403 + $0x180] sm:$0xff]
        %v3239 = vld [vmem:[%s403 + $0x188] sm:$0xff]
        %v3240 = vld [vmem:[%s403 + $0x190] sm:$0xff]
        %v3241 = vld [vmem:[%s403 + $0x198] sm:$0xff]
        %v3242 = vld [vmem:[%s403 + $0x1a0] sm:$0xff]
        %v3243 = vld [vmem:[%s403 + $0x1a8] sm:$0xff]
        %v3244 = vld [vmem:[%s403 + $0x1b0] sm:$0xff]
        %v3245 = vld [vmem:[%s403 + $0x1b8] sm:$0xff]
        %v3246 = vld [vmem:[%s403 + $0x1c0] sm:$0xff]
        %v3247 = vld [vmem:[%s403 + $0x1c8] sm:$0xff]
        %v3248 = vld [vmem:[%s403 + $0x1d0] sm:$0xff]
        %v3249 = vld [vmem:[%s403 + $0x1d8] sm:$0xff]
        %v3250 = vld [vmem:[%s403 + $0x1e0] sm:$0xff]
        %v3251 = vld [vmem:[%s403 + $0x1e8] sm:$0xff]
        %v3252 = vld [vmem:[%s403 + $0x1f0] sm:$0xff]
        %v3253 = vld [vmem:[%s403 + $0x1f8] sm:$0xff]
        %v3254 = vadd.f32 %v3032, %v3190
        %v3255 = vadd.f32 %v3034, %v3191
        %v3256 = vadd.f32 %v3036, %v3192
        %v3257 = vadd.f32 %v3038, %v3193
        %v3258 = vadd.f32 %v3042, %v3194
        %v3259 = vadd.f32 %v3044, %v3195
        %v3260 = vadd.f32 %v3046, %v3196
        %v3261 = vadd.f32 %v3048, %v3197
        %v3262 = vadd.f32 %v3052, %v3198
        %v3263 = vadd.f32 %v3054, %v3199
        %v3264 = vadd.f32 %v3056, %v3200
        %v3265 = vadd.f32 %v3058, %v3201
        %v3266 = vadd.f32 %v3062, %v3202
        %v3267 = vadd.f32 %v3064, %v3203
        %v3268 = vadd.f32 %v3066, %v3204
        %v3269 = vadd.f32 %v3068, %v3205
        %v3270 = vadd.f32 %v3072, %v3206
        %v3271 = vadd.f32 %v3074, %v3207
        %v3272 = vadd.f32 %v3076, %v3208
        %v3273 = vadd.f32 %v3078, %v3209
        %v3274 = vadd.f32 %v3082, %v3210
        %v3275 = vadd.f32 %v3084, %v3211
        %v3276 = vadd.f32 %v3086, %v3212
        %v3277 = vadd.f32 %v3088, %v3213
        %v3278 = vadd.f32 %v3092, %v3214
        %v3279 = vadd.f32 %v3094, %v3215
        %v3280 = vadd.f32 %v3096, %v3216
        %v3281 = vadd.f32 %v3098, %v3217
        %v3282 = vadd.f32 %v3102, %v3218
        %v3283 = vadd.f32 %v3104, %v3219
        %v3284 = vadd.f32 %v3106, %v3220
        %v3285 = vadd.f32 %v3108, %v3221
        %v3286 = vadd.f32 %v3112, %v3222
        %v3287 = vadd.f32 %v3114, %v3223
        %v3288 = vadd.f32 %v3116, %v3224
        %v3289 = vadd.f32 %v3118, %v3225
        %v3290 = vadd.f32 %v3122, %v3226
        %v3291 = vadd.f32 %v3124, %v3227
        %v3292 = vadd.f32 %v3126, %v3228
        %v3293 = vadd.f32 %v3128, %v3229
        %v3294 = vadd.f32 %v3132, %v3230
        %v3295 = vadd.f32 %v3134, %v3231
        %v3296 = vadd.f32 %v3136, %v3232
        %v3297 = vadd.f32 %v3138, %v3233
        %v3298 = vadd.f32 %v3142, %v3234
        %v3299 = vadd.f32 %v3144, %v3235
        %v3300 = vadd.f32 %v3146, %v3236
        %v3301 = vadd.f32 %v3148, %v3237
        %v3302 = vadd.f32 %v3152, %v3238
        %v3303 = vadd.f32 %v3154, %v3239
        %v3304 = vadd.f32 %v3156, %v3240
        %v3305 = vadd.f32 %v3158, %v3241
        %v3306 = vadd.f32 %v3162, %v3242
        %v3307 = vadd.f32 %v3164, %v3243
        %v3308 = vadd.f32 %v3166, %v3244
        %v3309 = vadd.f32 %v3168, %v3245
        %v3310 = vadd.f32 %v3172, %v3246
        %v3311 = vadd.f32 %v3174, %v3247
        %v3312 = vadd.f32 %v3176, %v3248
        %v3313 = vadd.f32 %v3178, %v3249
        %v3314 = vadd.f32 %v3182, %v3250
        %v3315 = vadd.f32 %v3184, %v3251
        %v3316 = vadd.f32 %v3186, %v3252
        %v3317 = vadd.f32 %v3188, %v3253
        %3318 = vst [vmem:[%s410] sm:$0xff] %v3254
        %3319 = vst [vmem:[%s410 + $0x8] sm:$0xff] %v3255
        %3320 = vst [vmem:[%s410 + $0x10] sm:$0xff] %v3256
        %3321 = vst [vmem:[%s410 + $0x18] sm:$0xff] %v3257
        %3322 = vst [vmem:[%s410 + $0x20] sm:$0xff] %v3258
        %3323 = vst [vmem:[%s410 + $0x28] sm:$0xff] %v3259
        %3324 = vst [vmem:[%s410 + $0x30] sm:$0xff] %v3260
        %3325 = vst [vmem:[%s410 + $0x38] sm:$0xff] %v3261
        %3326 = vst [vmem:[%s410 + $0x40] sm:$0xff] %v3262
        %3327 = vst [vmem:[%s410 + $0x48] sm:$0xff] %v3263
        %3328 = vst [vmem:[%s410 + $0x50] sm:$0xff] %v3264
        %3329 = vst [vmem:[%s410 + $0x58] sm:$0xff] %v3265
        %3330 = vst [vmem:[%s410 + $0x60] sm:$0xff] %v3266
        %3331 = vst [vmem:[%s410 + $0x68] sm:$0xff] %v3267
        %3332 = vst [vmem:[%s410 + $0x70] sm:$0xff] %v3268
        %3333 = vst [vmem:[%s410 + $0x78] sm:$0xff] %v3269
        %3334 = vst [vmem:[%s410 + $0x80] sm:$0xff] %v3270
        %3335 = vst [vmem:[%s410 + $0x88] sm:$0xff] %v3271
        %3336 = vst [vmem:[%s410 + $0x90] sm:$0xff] %v3272
        %3337 = vst [vmem:[%s410 + $0x98] sm:$0xff] %v3273
        %3338 = vst [vmem:[%s410 + $0xa0] sm:$0xff] %v3274
        %3339 = vst [vmem:[%s410 + $0xa8] sm:$0xff] %v3275
        %3340 = vst [vmem:[%s410 + $0xb0] sm:$0xff] %v3276
        %3341 = vst [vmem:[%s410 + $0xb8] sm:$0xff] %v3277
        %3342 = vst [vmem:[%s410 + $0xc0] sm:$0xff] %v3278
        %3343 = vst [vmem:[%s410 + $0xc8] sm:$0xff] %v3279
        %3344 = vst [vmem:[%s410 + $0xd0] sm:$0xff] %v3280
        %3345 = vst [vmem:[%s410 + $0xd8] sm:$0xff] %v3281
        %3346 = vst [vmem:[%s410 + $0xe0] sm:$0xff] %v3282
        %3347 = vst [vmem:[%s410 + $0xe8] sm:$0xff] %v3283
        %3348 = vst [vmem:[%s410 + $0xf0] sm:$0xff] %v3284
        %3349 = vst [vmem:[%s410 + $0xf8] sm:$0xff] %v3285
        %3350 = vst [vmem:[%s410 + $0x100] sm:$0xff] %v3286
        %3351 = vst [vmem:[%s410 + $0x108] sm:$0xff] %v3287
        %3352 = vst [vmem:[%s410 + $0x110] sm:$0xff] %v3288
        %3353 = vst [vmem:[%s410 + $0x118] sm:$0xff] %v3289
        %3354 = vst [vmem:[%s410 + $0x120] sm:$0xff] %v3290
        %3355 = vst [vmem:[%s410 + $0x128] sm:$0xff] %v3291
        %3356 = vst [vmem:[%s410 + $0x130] sm:$0xff] %v3292
        %3357 = vst [vmem:[%s410 + $0x138] sm:$0xff] %v3293
        %3358 = vst [vmem:[%s410 + $0x140] sm:$0xff] %v3294
        %3359 = vst [vmem:[%s410 + $0x148] sm:$0xff] %v3295
        %3360 = vst [vmem:[%s410 + $0x150] sm:$0xff] %v3296
        %3361 = vst [vmem:[%s410 + $0x158] sm:$0xff] %v3297
        %3362 = vst [vmem:[%s410 + $0x160] sm:$0xff] %v3298
        %3363 = vst [vmem:[%s410 + $0x168] sm:$0xff] %v3299
        %3364 = vst [vmem:[%s410 + $0x170] sm:$0xff] %v3300
        %3365 = vst [vmem:[%s410 + $0x178] sm:$0xff] %v3301
        %3366 = vst [vmem:[%s410 + $0x180] sm:$0xff] %v3302
        %3367 = vst [vmem:[%s410 + $0x188] sm:$0xff] %v3303
        %3368 = vst [vmem:[%s410 + $0x190] sm:$0xff] %v3304
        %3369 = vst [vmem:[%s410 + $0x198] sm:$0xff] %v3305
        %3370 = vst [vmem:[%s410 + $0x1a0] sm:$0xff] %v3306
        %3371 = vst [vmem:[%s410 + $0x1a8] sm:$0xff] %v3307
        %3372 = vst [vmem:[%s410 + $0x1b0] sm:$0xff] %v3308
        %3373 = vst [vmem:[%s410 + $0x1b8] sm:$0xff] %v3309
        %3374 = vst [vmem:[%s410 + $0x1c0] sm:$0xff] %v3310
        %3375 = vst [vmem:[%s410 + $0x1c8] sm:$0xff] %v3311
        %3376 = vst [vmem:[%s410 + $0x1d0] sm:$0xff] %v3312
        %3377 = vst [vmem:[%s410 + $0x1d8] sm:$0xff] %v3313
        %3378 = vst [vmem:[%s410 + $0x1e0] sm:$0xff] %v3314
        %3379 = vst [vmem:[%s410 + $0x1e8] sm:$0xff] %v3315
        %3380 = vst [vmem:[%s410 + $0x1f0] sm:$0xff] %v3316
        %3381 = vst [vmem:[%s410 + $0x1f8] sm:$0xff] %v3317
        %v3382 = vld [vmem:[%s442] sm:$0xff]
        %v3383 = vld [vmem:[%s442 + $0x8] sm:$0xff]
        %v3384 = vld [vmem:[%s442 + $0x10] sm:$0xff]
        %v3385 = vld [vmem:[%s442 + $0x18] sm:$0xff]
        %v3386 = vld [vmem:[%s442 + $0x20] sm:$0xff]
        %v3387 = vld [vmem:[%s442 + $0x28] sm:$0xff]
        %v3388 = vld [vmem:[%s442 + $0x30] sm:$0xff]
        %v3389 = vld [vmem:[%s442 + $0x38] sm:$0xff]
        %v3390 = vld [vmem:[%s442 + $0x40] sm:$0xff]
        %v3391 = vld [vmem:[%s442 + $0x48] sm:$0xff]
        %v3392 = vld [vmem:[%s442 + $0x50] sm:$0xff]
        %v3393 = vld [vmem:[%s442 + $0x58] sm:$0xff]
        %v3394 = vld [vmem:[%s442 + $0x60] sm:$0xff]
        %v3395 = vld [vmem:[%s442 + $0x68] sm:$0xff]
        %v3396 = vld [vmem:[%s442 + $0x70] sm:$0xff]
        %v3397 = vld [vmem:[%s442 + $0x78] sm:$0xff]
        %v3398 = vld [vmem:[%s442 + $0x80] sm:$0xff]
        %v3399 = vld [vmem:[%s442 + $0x88] sm:$0xff]
        %v3400 = vld [vmem:[%s442 + $0x90] sm:$0xff]
        %v3401 = vld [vmem:[%s442 + $0x98] sm:$0xff]
        %v3402 = vld [vmem:[%s442 + $0xa0] sm:$0xff]
        %v3403 = vld [vmem:[%s442 + $0xa8] sm:$0xff]
        %v3404 = vld [vmem:[%s442 + $0xb0] sm:$0xff]
        %v3405 = vld [vmem:[%s442 + $0xb8] sm:$0xff]
        %v3406 = vld [vmem:[%s442 + $0xc0] sm:$0xff]
        %v3407 = vld [vmem:[%s442 + $0xc8] sm:$0xff]
        %v3408 = vld [vmem:[%s442 + $0xd0] sm:$0xff]
        %v3409 = vld [vmem:[%s442 + $0xd8] sm:$0xff]
        %v3410 = vld [vmem:[%s442 + $0xe0] sm:$0xff]
        %v3411 = vld [vmem:[%s442 + $0xe8] sm:$0xff]
        %v3412 = vld [vmem:[%s442 + $0xf0] sm:$0xff]
        %v3413 = vld [vmem:[%s442 + $0xf8] sm:$0xff]
        %v3414 = vld [vmem:[%s442 + $0x100] sm:$0xff]
        %v3415 = vld [vmem:[%s442 + $0x108] sm:$0xff]
        %v3416 = vld [vmem:[%s442 + $0x110] sm:$0xff]
        %v3417 = vld [vmem:[%s442 + $0x118] sm:$0xff]
        %v3418 = vld [vmem:[%s442 + $0x120] sm:$0xff]
        %v3419 = vld [vmem:[%s442 + $0x128] sm:$0xff]
        %v3420 = vld [vmem:[%s442 + $0x130] sm:$0xff]
        %v3421 = vld [vmem:[%s442 + $0x138] sm:$0xff]
        %v3422 = vld [vmem:[%s442 + $0x140] sm:$0xff]
        %v3423 = vld [vmem:[%s442 + $0x148] sm:$0xff]
        %v3424 = vld [vmem:[%s442 + $0x150] sm:$0xff]
        %v3425 = vld [vmem:[%s442 + $0x158] sm:$0xff]
        %v3426 = vld [vmem:[%s442 + $0x160] sm:$0xff]
        %v3427 = vld [vmem:[%s442 + $0x168] sm:$0xff]
        %v3428 = vld [vmem:[%s442 + $0x170] sm:$0xff]
        %v3429 = vld [vmem:[%s442 + $0x178] sm:$0xff]
        %v3430 = vld [vmem:[%s442 + $0x180] sm:$0xff]
        %v3431 = vld [vmem:[%s442 + $0x188] sm:$0xff]
        %v3432 = vld [vmem:[%s442 + $0x190] sm:$0xff]
        %v3433 = vld [vmem:[%s442 + $0x198] sm:$0xff]
        %v3434 = vld [vmem:[%s442 + $0x1a0] sm:$0xff]
        %v3435 = vld [vmem:[%s442 + $0x1a8] sm:$0xff]
        %v3436 = vld [vmem:[%s442 + $0x1b0] sm:$0xff]
        %v3437 = vld [vmem:[%s442 + $0x1b8] sm:$0xff]
        %v3438 = vld [vmem:[%s442 + $0x1c0] sm:$0xff]
        %v3439 = vld [vmem:[%s442 + $0x1c8] sm:$0xff]
        %v3440 = vld [vmem:[%s442 + $0x1d0] sm:$0xff]
        %v3441 = vld [vmem:[%s442 + $0x1d8] sm:$0xff]
        %v3442 = vld [vmem:[%s442 + $0x1e0] sm:$0xff]
        %v3443 = vld [vmem:[%s442 + $0x1e8] sm:$0xff]
        %v3444 = vld [vmem:[%s442 + $0x1f0] sm:$0xff]
        %v3445 = vld [vmem:[%s442 + $0x1f8] sm:$0xff]
        %v3446 = vsub.f32 %v3382, %v3254
        %v3447 = vsub.f32 %v3383, %v3255
        %v3448 = vsub.f32 %v3384, %v3256
        %v3449 = vsub.f32 %v3385, %v3257
        %v3450 = vsub.f32 %v3386, %v3258
        %v3451 = vsub.f32 %v3387, %v3259
        %v3452 = vsub.f32 %v3388, %v3260
        %v3453 = vsub.f32 %v3389, %v3261
        %v3454 = vsub.f32 %v3390, %v3262
        %v3455 = vsub.f32 %v3391, %v3263
        %v3456 = vsub.f32 %v3392, %v3264
        %v3457 = vsub.f32 %v3393, %v3265
        %v3458 = vsub.f32 %v3394, %v3266
        %v3459 = vsub.f32 %v3395, %v3267
        %v3460 = vsub.f32 %v3396, %v3268
        %v3461 = vsub.f32 %v3397, %v3269
        %v3462 = vsub.f32 %v3398, %v3270
        %v3463 = vsub.f32 %v3399, %v3271
        %v3464 = vsub.f32 %v3400, %v3272
        %v3465 = vsub.f32 %v3401, %v3273
        %v3466 = vsub.f32 %v3402, %v3274
        %v3467 = vsub.f32 %v3403, %v3275
        %v3468 = vsub.f32 %v3404, %v3276
        %v3469 = vsub.f32 %v3405, %v3277
        %v3470 = vsub.f32 %v3406, %v3278
        %v3471 = vsub.f32 %v3407, %v3279
        %v3472 = vsub.f32 %v3408, %v3280
        %v3473 = vsub.f32 %v3409, %v3281
        %v3474 = vsub.f32 %v3410, %v3282
        %v3475 = vsub.f32 %v3411, %v3283
        %v3476 = vsub.f32 %v3412, %v3284
        %v3477 = vsub.f32 %v3413, %v3285
        %v3478 = vsub.f32 %v3414, %v3286
        %v3479 = vsub.f32 %v3415, %v3287
        %v3480 = vsub.f32 %v3416, %v3288
        %v3481 = vsub.f32 %v3417, %v3289
        %v3482 = vsub.f32 %v3418, %v3290
        %v3483 = vsub.f32 %v3419, %v3291
        %v3484 = vsub.f32 %v3420, %v3292
        %v3485 = vsub.f32 %v3421, %v3293
        %v3486 = vsub.f32 %v3422, %v3294
        %v3487 = vsub.f32 %v3423, %v3295
        %v3488 = vsub.f32 %v3424, %v3296
        %v3489 = vsub.f32 %v3425, %v3297
        %v3490 = vsub.f32 %v3426, %v3298
        %v3491 = vsub.f32 %v3427, %v3299
        %v3492 = vsub.f32 %v3428, %v3300
        %v3493 = vsub.f32 %v3429, %v3301
        %v3494 = vsub.f32 %v3430, %v3302
        %v3495 = vsub.f32 %v3431, %v3303
        %v3496 = vsub.f32 %v3432, %v3304
        %v3497 = vsub.f32 %v3433, %v3305
        %v3498 = vsub.f32 %v3434, %v3306
        %v3499 = vsub.f32 %v3435, %v3307
        %v3500 = vsub.f32 %v3436, %v3308
        %v3501 = vsub.f32 %v3437, %v3309
        %v3502 = vsub.f32 %v3438, %v3310
        %v3503 = vsub.f32 %v3439, %v3311
        %v3504 = vsub.f32 %v3440, %v3312
        %v3505 = vsub.f32 %v3441, %v3313
        %v3506 = vsub.f32 %v3442, %v3314
        %v3507 = vsub.f32 %v3443, %v3315
        %v3508 = vsub.f32 %v3444, %v3316
        %v3509 = vsub.f32 %v3445, %v3317
        %v3510 = vmul.f32 %v3446, %v3446
        %v3511 = vmul.f32 %v3447, %v3447
        %v3512 = vmul.f32 %v3448, %v3448
        %v3513 = vmul.f32 %v3449, %v3449
        %v3514 = vmul.f32 %v3450, %v3450
        %v3515 = vmul.f32 %v3451, %v3451
        %v3516 = vmul.f32 %v3452, %v3452
        %v3517 = vmul.f32 %v3453, %v3453
        %v3518 = vmul.f32 %v3454, %v3454
        %v3519 = vmul.f32 %v3455, %v3455
        %v3520 = vmul.f32 %v3456, %v3456
        %v3521 = vmul.f32 %v3457, %v3457
        %v3522 = vmul.f32 %v3458, %v3458
        %v3523 = vmul.f32 %v3459, %v3459
        %v3524 = vmul.f32 %v3460, %v3460
        %v3525 = vmul.f32 %v3461, %v3461
        %v3526 = vmul.f32 %v3462, %v3462
        %v3527 = vmul.f32 %v3463, %v3463
        %v3528 = vmul.f32 %v3464, %v3464
        %v3529 = vmul.f32 %v3465, %v3465
        %v3530 = vmul.f32 %v3466, %v3466
        %v3531 = vmul.f32 %v3467, %v3467
        %v3532 = vmul.f32 %v3468, %v3468
        %v3533 = vmul.f32 %v3469, %v3469
        %v3534 = vmul.f32 %v3470, %v3470
        %v3535 = vmul.f32 %v3471, %v3471
        %v3536 = vmul.f32 %v3472, %v3472
        %v3537 = vmul.f32 %v3473, %v3473
        %v3538 = vmul.f32 %v3474, %v3474
        %v3539 = vmul.f32 %v3475, %v3475
        %v3540 = vmul.f32 %v3476, %v3476
        %v3541 = vmul.f32 %v3477, %v3477
        %v3542 = vmul.f32 %v3478, %v3478
        %v3543 = vmul.f32 %v3479, %v3479
        %v3544 = vmul.f32 %v3480, %v3480
        %v3545 = vmul.f32 %v3481, %v3481
        %v3546 = vmul.f32 %v3482, %v3482
        %v3547 = vmul.f32 %v3483, %v3483
        %v3548 = vmul.f32 %v3484, %v3484
        %v3549 = vmul.f32 %v3485, %v3485
        %v3550 = vmul.f32 %v3486, %v3486
        %v3551 = vmul.f32 %v3487, %v3487
        %v3552 = vmul.f32 %v3488, %v3488
        %v3553 = vmul.f32 %v3489, %v3489
        %v3554 = vmul.f32 %v3490, %v3490
        %v3555 = vmul.f32 %v3491, %v3491
        %v3556 = vmul.f32 %v3492, %v3492
        %v3557 = vmul.f32 %v3493, %v3493
        %v3558 = vmul.f32 %v3494, %v3494
        %v3559 = vmul.f32 %v3495, %v3495
        %v3560 = vmul.f32 %v3496, %v3496
        %v3561 = vmul.f32 %v3497, %v3497
        %v3562 = vmul.f32 %v3498, %v3498
        %v3563 = vmul.f32 %v3499, %v3499
        %v3564 = vmul.f32 %v3500, %v3500
        %v3565 = vmul.f32 %v3501, %v3501
        %v3566 = vmul.f32 %v3502, %v3502
        %v3567 = vmul.f32 %v3503, %v3503
        %v3568 = vmul.f32 %v3504, %v3504
        %v3569 = vmul.f32 %v3505, %v3505
        %v3570 = vmul.f32 %v3506, %v3506
        %v3571 = vmul.f32 %v3507, %v3507
        %v3572 = vmul.f32 %v3508, %v3508
        %v3573 = vmul.f32 %v3509, %v3509
        %v3574 = vadd.f32 %v3510, %v3511
        %3575 = vadd.xlane.f32.xlu0 %v3574
        %v3576 = vpop.xlane.xlu0 %3575
        %v3577 = vadd.f32 %v3512, %v3513
        %3578 = vadd.xlane.f32.xlu0 %v3577
        %v3579 = vpop.xlane.xlu0 %3578
        %v3580 = vadd.f32 %v3514, %v3515
        %3581 = vadd.xlane.f32.xlu0 %v3580
        %v3582 = vpop.xlane.xlu0 %3581
        %v3583 = vadd.f32 %v3516, %v3517
        %3584 = vadd.xlane.f32.xlu0 %v3583
        %v3585 = vpop.xlane.xlu0 %3584
        %v3586 = vadd.f32 %v3518, %v3519
        %3587 = vadd.xlane.f32.xlu0 %v3586
        %v3588 = vpop.xlane.xlu0 %3587
        %v3589 = vadd.f32 %v3520, %v3521
        %3590 = vadd.xlane.f32.xlu0 %v3589
        %v3591 = vpop.xlane.xlu0 %3590
        %v3592 = vadd.f32 %v3522, %v3523
        %3593 = vadd.xlane.f32.xlu0 %v3592
        %v3594 = vpop.xlane.xlu0 %3593
        %v3595 = vadd.f32 %v3524, %v3525
        %3596 = vadd.xlane.f32.xlu0 %v3595
        %v3597 = vpop.xlane.xlu0 %3596
        %v3598 = vadd.f32 %v3526, %v3527
        %3599 = vadd.xlane.f32.xlu0 %v3598
        %v3600 = vpop.xlane.xlu0 %3599
        %v3601 = vadd.f32 %v3528, %v3529
        %3602 = vadd.xlane.f32.xlu0 %v3601
        %v3603 = vpop.xlane.xlu0 %3602
        %v3604 = vadd.f32 %v3530, %v3531
        %3605 = vadd.xlane.f32.xlu0 %v3604
        %v3606 = vpop.xlane.xlu0 %3605
        %v3607 = vadd.f32 %v3532, %v3533
        %3608 = vadd.xlane.f32.xlu0 %v3607
        %v3609 = vpop.xlane.xlu0 %3608
        %v3610 = vadd.f32 %v3534, %v3535
        %3611 = vadd.xlane.f32.xlu0 %v3610
        %v3612 = vpop.xlane.xlu0 %3611
        %v3613 = vadd.f32 %v3536, %v3537
        %3614 = vadd.xlane.f32.xlu0 %v3613
        %v3615 = vpop.xlane.xlu0 %3614
        %v3616 = vadd.f32 %v3538, %v3539
        %3617 = vadd.xlane.f32.xlu0 %v3616
        %v3618 = vpop.xlane.xlu0 %3617
        %v3619 = vadd.f32 %v3540, %v3541
        %3620 = vadd.xlane.f32.xlu0 %v3619
        %v3621 = vpop.xlane.xlu0 %3620
        %v3622 = vadd.f32 %v3542, %v3543
        %3623 = vadd.xlane.f32.xlu0 %v3622
        %v3624 = vpop.xlane.xlu0 %3623
        %v3625 = vadd.f32 %v3544, %v3545
        %3626 = vadd.xlane.f32.xlu0 %v3625
        %v3627 = vpop.xlane.xlu0 %3626
        %v3628 = vadd.f32 %v3546, %v3547
        %3629 = vadd.xlane.f32.xlu0 %v3628
        %v3630 = vpop.xlane.xlu0 %3629
        %v3631 = vadd.f32 %v3548, %v3549
        %3632 = vadd.xlane.f32.xlu0 %v3631
        %v3633 = vpop.xlane.xlu0 %3632
        %v3634 = vadd.f32 %v3550, %v3551
        %3635 = vadd.xlane.f32.xlu0 %v3634
        %v3636 = vpop.xlane.xlu0 %3635
        %v3637 = vadd.f32 %v3552, %v3553
        %3638 = vadd.xlane.f32.xlu0 %v3637
        %v3639 = vpop.xlane.xlu0 %3638
        %v3640 = vadd.f32 %v3554, %v3555
        %3641 = vadd.xlane.f32.xlu0 %v3640
        %v3642 = vpop.xlane.xlu0 %3641
        %v3643 = vadd.f32 %v3556, %v3557
        %3644 = vadd.xlane.f32.xlu0 %v3643
        %v3645 = vpop.xlane.xlu0 %3644
        %v3646 = vadd.f32 %v3558, %v3559
        %3647 = vadd.xlane.f32.xlu0 %v3646
        %v3648 = vpop.xlane.xlu0 %3647
        %v3649 = vadd.f32 %v3560, %v3561
        %3650 = vadd.xlane.f32.xlu0 %v3649
        %v3651 = vpop.xlane.xlu0 %3650
        %v3652 = vadd.f32 %v3562, %v3563
        %3653 = vadd.xlane.f32.xlu0 %v3652
        %v3654 = vpop.xlane.xlu0 %3653
        %v3655 = vadd.f32 %v3564, %v3565
        %3656 = vadd.xlane.f32.xlu0 %v3655
        %v3657 = vpop.xlane.xlu0 %3656
        %v3658 = vadd.f32 %v3566, %v3567
        %3659 = vadd.xlane.f32.xlu0 %v3658
        %v3660 = vpop.xlane.xlu0 %3659
        %v3661 = vadd.f32 %v3568, %v3569
        %3662 = vadd.xlane.f32.xlu0 %v3661
        %v3663 = vpop.xlane.xlu0 %3662
        %v3664 = vadd.f32 %v3570, %v3571
        %3665 = vadd.xlane.f32.xlu0 %v3664
        %v3666 = vpop.xlane.xlu0 %3665
        %v3667 = vadd.f32 %v3572, %v3573
        %3668 = vadd.xlane.f32.xlu0 %v3667
        %v3669 = vpop.xlane.xlu0 %3668
        %vm3670 = vcmask 7168
        %3671 = vst.msk [vmem:[%s454] sm:$0xff] %vm3670, %v3576
        %3672 = vst.msk [vmem:[%s454 + $0x8] sm:$0xff] %vm3670, %v3579
        %3673 = vst.msk [vmem:[%s454 + $0x10] sm:$0xff] %vm3670, %v3582
        %3674 = vst.msk [vmem:[%s454 + $0x18] sm:$0xff] %vm3670, %v3585
        %3675 = vst.msk [vmem:[%s454 + $0x20] sm:$0xff] %vm3670, %v3588
        %3676 = vst.msk [vmem:[%s454 + $0x28] sm:$0xff] %vm3670, %v3591
        %3677 = vst.msk [vmem:[%s454 + $0x30] sm:$0xff] %vm3670, %v3594
        %3678 = vst.msk [vmem:[%s454 + $0x38] sm:$0xff] %vm3670, %v3597
        %3679 = vst.msk [vmem:[%s454 + $0x40] sm:$0xff] %vm3670, %v3600
        %3680 = vst.msk [vmem:[%s454 + $0x48] sm:$0xff] %vm3670, %v3603
        %3681 = vst.msk [vmem:[%s454 + $0x50] sm:$0xff] %vm3670, %v3606
        %3682 = vst.msk [vmem:[%s454 + $0x58] sm:$0xff] %vm3670, %v3609
        %3683 = vst.msk [vmem:[%s454 + $0x60] sm:$0xff] %vm3670, %v3612
        %3684 = vst.msk [vmem:[%s454 + $0x68] sm:$0xff] %vm3670, %v3615
        %3685 = vst.msk [vmem:[%s454 + $0x70] sm:$0xff] %vm3670, %v3618
        %3686 = vst.msk [vmem:[%s454 + $0x78] sm:$0xff] %vm3670, %v3621
        %3687 = vst.msk [vmem:[%s454 + $0x80] sm:$0xff] %vm3670, %v3624
        %3688 = vst.msk [vmem:[%s454 + $0x88] sm:$0xff] %vm3670, %v3627
        %3689 = vst.msk [vmem:[%s454 + $0x90] sm:$0xff] %vm3670, %v3630
        %3690 = vst.msk [vmem:[%s454 + $0x98] sm:$0xff] %vm3670, %v3633
        %3691 = vst.msk [vmem:[%s454 + $0xa0] sm:$0xff] %vm3670, %v3636
        %3692 = vst.msk [vmem:[%s454 + $0xa8] sm:$0xff] %vm3670, %v3639
        %3693 = vst.msk [vmem:[%s454 + $0xb0] sm:$0xff] %vm3670, %v3642
        %3694 = vst.msk [vmem:[%s454 + $0xb8] sm:$0xff] %vm3670, %v3645
        %3695 = vst.msk [vmem:[%s454 + $0xc0] sm:$0xff] %vm3670, %v3648
        %3696 = vst.msk [vmem:[%s454 + $0xc8] sm:$0xff] %vm3670, %v3651
        %3697 = vst.msk [vmem:[%s454 + $0xd0] sm:$0xff] %vm3670, %v3654
        %3698 = vst.msk [vmem:[%s454 + $0xd8] sm:$0xff] %vm3670, %v3657
        %3699 = vst.msk [vmem:[%s454 + $0xe0] sm:$0xff] %vm3670, %v3660
        %3700 = vst.msk [vmem:[%s454 + $0xe8] sm:$0xff] %vm3670, %v3663
        %3701 = vst.msk [vmem:[%s454 + $0xf0] sm:$0xff] %vm3670, %v3666
        %3702 = vst.msk [vmem:[%s454 + $0xf8] sm:$0xff] %vm3670, %v3669
        %s3703 = sand.u32 %s202, 1
        %s3704 = scalar_lea.sflag [#allocation7], %s3703
        %s3705 = sand.u32 %s202, 1
        %s3706 = smul.addr %s3705, 512
        %s3707 = scalar_lea.vmem [#allocation10], %s3706
        %s3708 = sand.u32 %s230, 1
        %s3709 = scalar_lea.sflag [#allocation12], %s3708
        %s3710 = sand.u32 %s230, 1
        %s3711 = smul.addr %s3710, 512
        %s3712 = scalar_lea.vmem [#allocation11], %s3711
        %s3713 = smul.u32 32, %s45
        %p3714 = scmp.lt.s32.totalorder %s44, 1
        %s3715 = scalar_select %p3714, %s44, 1
        %p3716 = scmp.lt.s32.totalorder %s3713, 31
        %s3717 = scalar_select %p3716, %s3713, 31
        %s3718 = smul.addr %s3715, 32
        %s3719 = sadd.s32 %s3717, %s3718
        %s3720 = smul.addr %s3719, 8
        %s3721 = scalar_lea.vmem %s10, %s3720
        // Predicated region
        $region53: #{ddpm_forward.1} parent=43 // pred_check
          %p3722 = pneg %p212
        $region54: #{ddpm_forward.1} parent=43 // pred_check_branch
          %3724 = sbr.rel (%p3722) target = $region56
        $region55: #{ddpm_forward.1} parent=43 // pred_region
          %s3725 = smul.u32 32, %s45
          %s3727 = ssub.s32 8192, 8192
          %3728 = vsyncadd %s3704, %s3727
          %s3729 = smul.addr %s3725, 2
          %s3730 = smul.addr %s44, 64
          %s3731 = sadd.s32 %s3729, %s3730
          %s3732 = smul.addr %s3731, 128
          %s3733 = scalar_lea.hbm %s8, %s3732
          %s3734 = sshll.u32 %s3707, 4
          %s3735 = int_to_ptr.vmem [resolvable:$true] %s3734
          %3740 = dma.vmem_to_hbm [thread:$0]  %s3735, 8192, %s3733, %s3704, 256, 256, 16
        $region56: #{ddpm_forward.1} parent=43 // pred_fallthru
          _
        // Predicated region
        $region57: #{ddpm_forward.1} parent=43 // pred_check
          %p3741 = pneg %p240
        $region58: #{ddpm_forward.1} parent=43 // pred_check_branch
          %3743 = sbr.rel (%p3741) target = $region60
        $region59: #{ddpm_forward.1} parent=43 // pred_region
          %s3744 = smul.u32 32, %s45
          %s3746 = ssub.s32 8192, 8192
          %3747 = vsyncadd %s3709, %s3746
          %s3748 = smul.addr %s3744, 2
          %s3749 = smul.addr %s44, 64
          %s3750 = sadd.s32 %s3748, %s3749
          %s3751 = smul.addr %s3750, 128
          %s3752 = scalar_lea.hbm %s9, %s3751
          %s3753 = sshll.u32 %s3712, 4
          %s3754 = int_to_ptr.vmem [resolvable:$true] %s3753
          %3759 = dma.vmem_to_hbm [thread:$0]  %s3754, 8192, %s3752, %s3709, 256, 256, 16
        $region60: #{ddpm_forward.1} parent=43 // pred_fallthru
          _
        // Predicated region
        $region61: #{ddpm_forward.1} parent=43 // pred_check
          %p3760 = pneg %p268
        $region62: #{ddpm_forward.1} parent=43 // pred_check_branch
          %3762 = sbr.rel (%p3760) target = $region64
        $region63: #{ddpm_forward.1} parent=43 // pred_region
          %s3763 = smul.u32 32, %s45
        $region64: #{ddpm_forward.1} parent=43 // pred_fallthru
          _
      $region44: #{ddpm_forward.1} parent=5 // pred_fallthru
        _
      %p3764 = scmp.le.s32.totalorder 2, %s35
      // Predicated region
      $region65: #{ddpm_forward.1} parent=5 // pred_check
        %p3765 = pneg %p3764
      $region66: #{ddpm_forward.1} parent=5 // pred_check_branch
        %3767 = sbr.rel (%p3765) target = $region68
      $region67: #{ddpm_forward.1} parent=5 // pred_region
        %s3768 = ssub.s32 %s35, 2
        // Predicated region
        $region69: #{ddpm_forward.1} parent=67 // pred_check
          %p3769 = pneg %p218
        $region70: #{ddpm_forward.1} parent=67 // pred_check_branch
          %3771 = sbr.rel (%p3769) target = $region72
        $region71: #{ddpm_forward.1} parent=67 // pred_region
          %s3772 = sand.u32 %s203, 1
          %s3773 = scalar_lea.sflag [#allocation7], %s3772
          %s3774 = sand.u32 %s203, 1
          %s3775 = smul.addr %s3774, 512
          %s3776 = scalar_lea.vmem [#allocation10], %s3775
          %3777 = dma.done %s3773, 8192
        $region72: #{ddpm_forward.1} parent=67 // pred_fallthru
          _
        // Predicated region
        $region73: #{ddpm_forward.1} parent=67 // pred_check
          %p3778 = pneg %p246
        $region74: #{ddpm_forward.1} parent=67 // pred_check_branch
          %3780 = sbr.rel (%p3778) target = $region76
        $region75: #{ddpm_forward.1} parent=67 // pred_region
          %s3781 = sand.u32 %s231, 1
          %s3782 = scalar_lea.sflag [#allocation12], %s3781
          %s3783 = sand.u32 %s231, 1
          %s3784 = smul.addr %s3783, 512
          %s3785 = scalar_lea.vmem [#allocation11], %s3784
          %3786 = dma.done %s3782, 8192
        $region76: #{ddpm_forward.1} parent=67 // pred_fallthru
          _
        // Predicated region
        $region77: #{ddpm_forward.1} parent=67 // pred_check
          %p3787 = pneg %p274
        $region78: #{ddpm_forward.1} parent=67 // pred_check_branch
          %3789 = sbr.rel (%p3787) target = $region80
        $region79: #{ddpm_forward.1} parent=67 // pred_region
          %s3790 = smul.u32 32, %s47
          %p3791 = scmp.lt.s32.totalorder %s46, 1
          %s3792 = scalar_select %p3791, %s46, 1
          %p3793 = scmp.lt.s32.totalorder %s3790, 31
          %s3794 = scalar_select %p3793, %s3790, 31
          %s3795 = smul.addr %s3792, 32
          %s3796 = sadd.s32 %s3794, %s3795
          %s3797 = smul.addr %s3796, 8
          %s3798 = scalar_lea.vmem %s10, %s3797
        $region80: #{ddpm_forward.1} parent=67 // pred_fallthru
          _
      $region68: #{ddpm_forward.1} parent=5 // pred_fallthru
        _
    $region6: #{ddpm_forward.1} parent=1 // loop_footer
      %s39 = sadd.s32 1, %s35
    $region7: #{ddpm_forward.1} parent=1 // loop_footer_branch
      %34 = sbr.rel target = $region3
    $region8: #{ddpm_forward.1} parent=1 // loop_exit
      _
    %3799 = vsyncpa [#allocation6], 1
    %s3800 = scalar_lea.sflag [#allocation6], 1
    %3801 = vsyncpa %s3800, 1
    %3802 = vsyncpa [#allocation9], 1
    %3803 = vsyncpa [#allocation7], 1
    %s3804 = scalar_lea.sflag [#allocation7], 1
    %3805 = vsyncpa %s3804, 1
    %3806 = vsyncpa [#allocation12], 1
    %s3807 = scalar_lea.sflag [#allocation12], 1
    %3808 = vsyncpa %s3807, 1

</llo_original>
